<compile_context>
chip_gen: v6e
topology: v6e:2x2x1
jax: 0.10.0
libtpu: 0.0.40
codegen_flags: <defaults>
</compile_context>

<pallas_src>
import functools

import jax
import jax.numpy as jnp
from jax.experimental import pallas as pl
from jax.experimental.pallas import tpu as pltpu


def _round_up(x, m):
    return ((x + m - 1) // m) * m


def _default_vmem_limit():
    # ~3/4 of physical VMEM: ~96 MiB on v5e/v6e (128 MiB), ~48 MiB on v7x (64 MiB).
    try:
        info = pltpu.get_tpu_info()
        cap = getattr(info, "vmem_capacity_bytes", None)
        if cap:
            return min(int(cap) * 3 // 4, 96 * 1024 * 1024)
    except Exception:
        pass
    return 32 * 1024 * 1024


_VMEM_LIMIT_BYTES = _default_vmem_limit()
_ROW_TILE_CAP = 512          # mem-bound elementwise / stats kernels
_MM_TM_CAP, _MM_TN_CAP, _MM_TK_CAP = 256, 256, 1024


def _cparams(dims):
    return pltpu.CompilerParams(
        dimension_semantics=dims, vmem_limit_bytes=_VMEM_LIMIT_BYTES
    )


def _pick_tile(dim, cap, mult):
    """Largest tile (multiple of `mult`, <= cap) minimizing padding of `dim`."""
    dm = _round_up(dim, mult)
    if dm <= cap:
        return dm
    best_t = cap
    best_pad = _round_up(dim, cap) - dim
    t = cap - mult
    while t >= mult and best_pad > 0:
        pad = _round_up(dim, t) - dim
        if pad < best_pad:
            best_t, best_pad = t, pad
        t -= mult
    return best_t


# ----------------------------------------------------------------------------
# Tiled matmul with optional fused BN-apply prologue and fused BN-stats epilogue
# ----------------------------------------------------------------------------
def _matmul_kernel(*refs, fuse_in, relu_in, emit_stats, m_true, tm):
    it = iter(refs)
    a_ref = next(it)
    if fuse_in:
        sc_ref = next(it)
        sh_ref = next(it)
    b_ref = next(it)
    o_ref = next(it)
    if emit_stats:
        sum_ref = next(it)
        sq_ref = next(it)
    acc_ref = next(it)

    @pl.when(pl.program_id(2) == 0)
    def _init():
        acc_ref[...] = jnp.zeros_like(acc_ref)

    a = a_ref[...]
    if fuse_in:
        af = a.astype(jnp.float32) * sc_ref[...] + sh_ref[...]
        if relu_in:
            af = jnp.maximum(af, 0.0)
        a = af.astype(jnp.bfloat16)
    elif a.dtype != jnp.bfloat16:
        a = a.astype(jnp.bfloat16)

    acc_ref[...] += jnp.dot(a, b_ref[...], preferred_element_type=jnp.float32)

    @pl.when(pl.program_id(2) == pl.num_programs(2) - 1)
    def _finalize():
        acc = acc_ref[...]
        o_ref[...] = acc.astype(o_ref.dtype)
        if emit_stats:
            if m_true is not None:
                # Mask padded rows (nonzero only when a BN prologue is fused).
                rows = pl.program_id(0) * tm + jax.lax.broadcasted_iota(
                    jnp.int32, acc.shape, 0
                )
                acc = jnp.where(rows < m_true, acc, 0.0)
            sum_ref[...] = jnp.sum(acc, axis=0, keepdims=True)
            sq_ref[...] = jnp.sum(acc * acc, axis=0, keepdims=True)


def pallas_matmul(
    a,
    b,
    *,
    out_dtype=jnp.bfloat16,
    in_scale=None,
    in_shift=None,
    relu_in=False,
    emit_stats=False,
):
    """C = [relu](A*scale+shift) @ B with f32 VMEM accumulation.

    Optionally emits per-column sum / sum-of-squares of C (for the next
    BatchNorm) as tiny extra outputs, reduced over row tiles in plain JAX.
    Returns C (bf16 by default), or (C, col_sum, col_sq) if emit_stats.
    """
    M, K = a.shape
    K2, N = b.shape
    assert K == K2
    fuse_in = in_scale is not None

    tm = _pick_tile(M, _MM_TM_CAP, 16)
    tn = _pick_tile(N, _MM_TN_CAP, 128)
    tk = _pick_tile(K, _MM_TK_CAP, 128)
    Mp, Np, Kp = _round_up(M, tm), _round_up(N, tn), _round_up(K, tk)

    if b.dtype != jnp.bfloat16:
        b = b.astype(jnp.bfloat16)
    if (Mp, Kp) != (M, K):
        a = jnp.pad(a, ((0, Mp - M), (0, Kp - K)))
    if (Kp, Np) != (K, N):
        b = jnp.pad(b, ((0, Kp - K), (0, Np - N)))

    inputs = [a]
    in_specs = [pl.BlockSpec((tm, tk), lambda i, j, k: (i, k))]
    if fuse_in:
        sc = in_scale.reshape(1, K).astype(jnp.float32)
        sh = in_shift.reshape(1, K).astype(jnp.float32)
        if Kp != K:
            sc = jnp.pad(sc, ((0, 0), (0, Kp - K)))
            sh = jnp.pad(sh, ((0, 0), (0, Kp - K)))
        inputs += [sc, sh]
        in_specs += [
            pl.BlockSpec((1, tk), lambda i, j, k: (0, k)),
            pl.BlockSpec((1, tk), lambda i, j, k: (0, k)),
        ]
    inputs.append(b)
    in_specs.append(pl.BlockSpec((tk, tn), lambda i, j, k: (k, j)))

    out_spec = pl.BlockSpec((tm, tn), lambda i, j, k: (i, j))
    if emit_stats:
        n_row_tiles = Mp // tm
        stat_spec = pl.BlockSpec((1, tn), lambda i, j, k: (i, j))
        out_specs = (out_spec, stat_spec, stat_spec)
        out_shape = (
            jax.ShapeDtypeStruct((Mp, Np), out_dtype),
            jax.ShapeDtypeStruct((n_row_tiles, Np), jnp.float32),
            jax.ShapeDtypeStruct((n_row_tiles, Np), jnp.float32),
        )
    else:
        out_specs = out_spec
        out_shape = jax.ShapeDtypeStruct((Mp, Np), out_dtype)

    kern = functools.partial(
        _matmul_kernel,
        fuse_in=fuse_in,
        relu_in=relu_in,
        emit_stats=emit_stats,
        m_true=(M if (emit_stats and Mp != M) else None),
        tm=tm,
    )
    results = pl.pallas_call(
        kern,
        grid=(Mp // tm, Np // tn, Kp // tk),
        in_specs=in_specs,
        out_specs=out_specs,
        out_shape=out_shape,
        scratch_shapes=[pltpu.VMEM((tm, tn), jnp.float32)],
        compiler_params=_cparams(("parallel", "parallel", "arbitrary")),
    )(*inputs)

    if emit_stats:
        out, psum, psq = results
    else:
        out = results
    if (Mp, Np) != (M, N):
        out = out[:M, :N]
    if emit_stats:
        return out, jnp.sum(psum, axis=0)[:N], jnp.sum(psq, axis=0)[:N]
    return out


# ----------------------------------------------------------------------------
# BatchNorm helpers (training-mode batch statistics)
# ----------------------------------------------------------------------------
def _bn_scale_shift(col_sum, col_sq, gamma, beta, m_rows, eps=1e-5):
    mean = col_sum / m_rows
    var = jnp.maximum(col_sq / m_rows - mean * mean, 0.0)
    inv = jax.lax.rsqrt(var + eps)
    scale = gamma * inv
    shift = beta - mean * scale
    return scale, shift


def _bn_stats_partial_kernel(x_ref, sum_ref, sq_ref):
    x = x_ref[...].astype(jnp.float32)
    sum_ref[...] = jnp.sum(x, axis=0, keepdims=True)
    sq_ref[...] = jnp.sum(x * x, axis=0, keepdims=True)


def pallas_bn_stats(x2d):
    """Per-channel sum / sum-of-squares, per-tile partials on a parallel grid
    (both TCs busy on v7x), reduced in plain JAX."""
    M, C = x2d.shape
    tm = _pick_tile(M, _ROW_TILE_CAP, 16)
    Mp = _round_up(M, tm)
    xp = jnp.pad(x2d, ((0, Mp - M), (0, 0))) if Mp != M else x2d
    nt = Mp // tm
    psum, psq = pl.pallas_call(
        _bn_stats_partial_kernel,
        grid=(nt,),
        in_specs=[pl.BlockSpec((tm, C), lambda m: (m, 0))],
        out_specs=(
            pl.BlockSpec((1, C), lambda m: (m, 0)),
            pl.BlockSpec((1, C), lambda m: (m, 0)),
        ),
        out_shape=(
            jax.ShapeDtypeStruct((nt, C), jnp.float32),
            jax.ShapeDtypeStruct((nt, C), jnp.float32),
        ),
        compiler_params=_cparams(("parallel",)),
    )(xp)
    return jnp.sum(psum, axis=0), jnp.sum(psq, axis=0)


def _bn_residual_kernel(*refs, res_bn):
    if res_bn:
        x_ref, sc_ref, sh_ref, r_ref, rsc_ref, rsh_ref, o_ref = refs
    else:
        x_ref, sc_ref, sh_ref, r_ref, o_ref = refs
    y = x_ref[...].astype(jnp.float32) * sc_ref[...] + sh_ref[...]
    r = r_ref[...].astype(jnp.float32)
    if res_bn:
        r = jnp.maximum(r * rsc_ref[...] + rsh_ref[...], 0.0)  # shortcut BN+ReLU
    o_ref[...] = jnp.maximum(y + r, 0.0).astype(o_ref.dtype)


def pallas_bn_residual(
    x2d, scale, shift, res2d, res_scale=None, res_shift=None, out_dtype=jnp.bfloat16
):
    """Fused bn3 + (shortcut BN+ReLU or identity) + residual add + final ReLU."""
    M, C = x2d.shape
    tm = _pick_tile(M, _ROW_TILE_CAP, 16)
    Mp = _round_up(M, tm)
    pad = Mp != M
    xp = jnp.pad(x2d, ((0, Mp - M), (0, 0))) if pad else x2d
    rp = jnp.pad(res2d, ((0, Mp - M), (0, 0))) if pad else res2d

    res_bn = res_scale is not None
    row_spec = pl.BlockSpec((tm, C), lambda m: (m, 0))
    ch_spec = pl.BlockSpec((1, C), lambda m: (0, 0))
    inputs = [xp, scale.reshape(1, C).astype(jnp.float32),
              shift.reshape(1, C).astype(jnp.float32), rp]
    in_specs = [row_spec, ch_spec, ch_spec, row_spec]
    if res_bn:
        inputs += [res_scale.reshape(1, C).astype(jnp.float32),
                   res_shift.reshape(1, C).astype(jnp.float32)]
        in_specs += [ch_spec, ch_spec]

    out = pl.pallas_call(
        functools.partial(_bn_residual_kernel, res_bn=res_bn),
        grid=(Mp // tm,),
        in_specs=in_specs,
        out_specs=row_spec,
        out_shape=jax.ShapeDtypeStruct((Mp, C), out_dtype),
        compiler_params=_cparams(("parallel",)),
    )(*inputs)
    return out[:M] if pad else out


# ----------------------------------------------------------------------------
# Attention (heads batched per grid step, query-tiled, full keys resident)
# ----------------------------------------------------------------------------
def _attention_kernel(q_ref, k_ref, v_ref, bias_ref, o_ref):
    q = q_ref[...]  # (hb, tq, D) bf16, scale already folded into w_qkv
    k = k_ref[...]  # (hb, S,  D) bf16
    v = v_ref[...]  # (hb, S,  D) bf16
    logits = jnp.einsum("hqd,hkd->hqk", q, k, preferred_element_type=jnp.float32)
    logits = logits + bias_ref[...].astype(jnp.float32)
    m = jnp.max(logits, axis=-1, keepdims=True)
    p = jnp.exp(logits - m)
    l = jnp.sum(p, axis=-1, keepdims=True)
    probs = p * pl.reciprocal(l, approx=True)  # EUP reciprocal, no VPU divide
    o_ref[...] = jnp.einsum(
        "hqk,hkd->hqd", probs.astype(v.dtype), v, preferred_element_type=jnp.float32
    ).astype(o_ref.dtype)


def _pick_seq_tile(S, cap=256):
    for t in (cap, cap // 2, 64, 32, 16, 8):
        if t <= S and S % t == 0:
            return t
    return S


def _pick_head_block(BH, S, tq, D):
    budget = 16 * 1024 * 1024
    for hb in (8, 4, 2, 1):
        if BH % hb:
            continue
        kv = 2 * hb * S * D * 2 * 2       # k+v bf16, double-buffered
        bias = hb * tq * S * 2 * 2        # bf16 bias, double-buffered
        logits = hb * tq * S * 4 * 2      # f32 logits working set (generous)
        if kv + bias + logits <= budget:
            return hb
    return 1


def pallas_attention(q, k, v, bias):
    """q, k, v: (BH, S, D) bf16 (q pre-scaled); bias: (BH, S, S) bf16 rel-pos logits."""
    BH, S, D = q.shape
    tq = _pick_seq_tile(S)
    hb = _pick_head_block(BH, S, tq, D)
    q_spec = pl.BlockSpec((hb, tq, D), lambda i, j: (i, j, 0))
    kv_spec = pl.BlockSpec((hb, S, D), lambda i, j: (i, 0, 0))
    b_spec = pl.BlockSpec((hb, tq, S), lambda i, j: (i, j, 0))
    return pl.pallas_call(
        _attention_kernel,
        grid=(BH // hb, S // tq),
        in_specs=[q_spec, kv_spec, kv_spec, b_spec],
        out_specs=pl.BlockSpec((hb, tq, D), lambda i, j: (i, j, 0)),
        out_shape=jax.ShapeDtypeStruct((BH, S, D), jnp.bfloat16),
        compiler_params=_cparams(("parallel", "parallel")),
    )(q, k, v, bias)


# ----------------------------------------------------------------------------
# Plain-JAX glue
# ----------------------------------------------------------------------------
def im2col_3x3_s2(x):
    """x: (N, H, W, C) -> (N*Ho*Wo, 9*C) patches for a 3x3/stride-2/pad-1 conv."""
    # TODO(synk): fold the 9 taps into the tiled matmul's K loop instead of
    # materializing the 9x im2col slab in HBM.
    N, H, W, C = x.shape
    Ho, Wo = H // 2, W // 2
    xp = jnp.pad(x, ((0, 0), (1, 1), (1, 1), (0, 0)))
    patches = []
    for kh in range(3):
        for kw in range(3):
            patches.append(xp[:, kh : kh + 2 * Ho : 2, kw : kw + 2 * Wo : 2, :])
    cols = jnp.stack(patches, axis=3)  # (N, Ho, Wo, 9, C)
    return cols.reshape(N * Ho * Wo, 9 * C)


def rel_pos_bias(q, rel_height, rel_width, H, W):
    """Relative-position logits matching RelPosEmb / relative_logits_1d / rel_to_abs.

    q is the (already dh^-0.5-scaled) query and the rel tables were pre-scaled
    by sqrt(dh) at init, so the product equals the reference unscaled-q logits.
    q: (N, heads, S, D) bf16.  Returns (N, heads, S, S) f32.
    """
    # TODO(synk): generate the bias inside the attention kernel from the small
    # (2W-1, D)/(2H-1, D) tables so the S^2 slab never hits HBM.
    S = H * W
    lw = jnp.einsum("bhsd,rd->bhsr", q, rel_width,
                    preferred_element_type=jnp.float32)   # (N, heads, S, 2W-1)
    lh = jnp.einsum("bhsd,rd->bhsr", q, rel_height,
                    preferred_element_type=jnp.float32)   # (N, heads, S, 2H-1)
    rows = jnp.repeat(jnp.arange(H), W)
    cols = jnp.tile(jnp.arange(W), H)
    idx_w = cols[None, :] - cols[:, None] + (W - 1)  # (S, S)
    idx_h = rows[None, :] - rows[:, None] + (H - 1)
    idx_w = jnp.broadcast_to(idx_w[None, None], lw.shape[:3] + (S,))
    idx_h = jnp.broadcast_to(idx_h[None, None], lh.shape[:3] + (S,))
    return jnp.take_along_axis(lw, idx_w, axis=3) + jnp.take_along_axis(
        lh, idx_h, axis=3
    )


# ----------------------------------------------------------------------------
# Model pieces
# ----------------------------------------------------------------------------
def mhsa_forward(h_raw2d, bn1_scale, bn1_shift, mp, N, H, W, heads, dh):
    """MultiHeadSelfAttention with RelPosEmb; BN1+ReLU fused into the qkv matmul.

    Returns the (N*S, heads*dh) attention slab (out-projection done by caller
    so it can fuse the next BN's statistics)."""
    S = H * W
    qkv = pallas_matmul(
        h_raw2d, mp["w_qkv"], in_scale=bn1_scale, in_shift=bn1_shift, relu_in=True
    )  # (N*S, 3*heads*dh) bf16
    qkv = qkv.reshape(N, S, 3, heads, dh)
    q = jnp.transpose(qkv[:, :, 0], (0, 2, 1, 3))  # (N, heads, S, dh)
    k = jnp.transpose(qkv[:, :, 1], (0, 2, 1, 3))
    v = jnp.transpose(qkv[:, :, 2], (0, 2, 1, 3))

    bias = rel_pos_bias(q, mp["rel_height"], mp["rel_width"], H, W)
    bias = bias.reshape(N * heads, S, S).astype(jnp.bfloat16)

    attn = pallas_attention(
        q.reshape(N * heads, S, dh),
        k.reshape(N * heads, S, dh),
        v.reshape(N * heads, S, dh),
        bias,
    )  # (N*heads, S, dh) bf16
    return (
        attn.reshape(N, heads, S, dh)
        .transpose(0, 2, 1, 3)
        .reshape(N * S, heads * dh)
    )


def bottle_block(x, p, cfg, heads, dh):
    N, H, W, C = x.shape
    downsample = cfg["downsample"]
    Ho, Wo = (H // 2, W // 2) if downsample else (H, W)
    M_in = N * H * W
    x2d = x.reshape(M_in, C)

    # ---- shortcut branch: conv (+ fused BN stats); BN+ReLU applied in the
    #      final fused residual kernel ----
    if p["shortcut"] is None:
        short_raw, short_scale, short_shift = x2d, None, None
    else:
        sp = p["shortcut"]
        a_sc = im2col_3x3_s2(x) if downsample else x2d
        short_raw, ssum, ssq = pallas_matmul(a_sc, sp["w"], emit_stats=True)
        short_scale, short_shift = _bn_scale_shift(
            ssum, ssq, sp["gamma"], sp["beta"], short_raw.shape[0]
        )

    # ---- main branch ----
    # 1x1 conv dim->dim, BN1 statistics emitted by the matmul itself.
    h1_raw, s1, q1 = pallas_matmul(x2d, p["w1"], emit_stats=True)
    scale1, shift1 = _bn_scale_shift(s1, q1, p["bn1_g"], p["bn1_b"], M_in)

    # MHSA (BN1+ReLU fused into its qkv projection).
    attn2d = mhsa_forward(h1_raw, scale1, shift1, p["mhsa"], N, H, W, heads, dh)

    if downsample:
        # out-projection, then 2x2 avg pool (reference order: MHSA->AvgPool->BN2),
        # then BN2 stats on the pooled slab.
        h = pallas_matmul(attn2d, p["mhsa"]["w_out"])  # (N*S, C) bf16
        # TODO(synk): keep the 2x2 average pool as plain-JAX reshape+mean glue.
        h2_raw = h.reshape(N, Ho, 2, Wo, 2, C).mean(axis=(2, 4)).reshape(
            N * Ho * Wo, C
        ).astype(jnp.bfloat16)
        s2, q2 = pallas_bn_stats(h2_raw)
    else:
        h2_raw, s2, q2 = pallas_matmul(attn2d, p["mhsa"]["w_out"], emit_stats=True)
    M_out = N * Ho * Wo
    scale2, shift2 = _bn_scale_shift(s2, q2, p["bn2_g"], p["bn2_b"], M_out)

    # 1x1 conv dim->dim_out with BN2+ReLU fused into the A-load and BN3
    # statistics fused into the epilogue.
    h3_raw, s3, q3 = pallas_matmul(
        h2_raw, p["w2"], in_scale=scale2, in_shift=shift2, relu_in=True,
        emit_stats=True,
    )
    scale3, shift3 = _bn_scale_shift(s3, q3, p["bn3_g"], p["bn3_b"], M_out)

    # BN3 + (shortcut BN+ReLU or identity residual) + final ReLU, fused.
    out2d = pallas_bn_residual(
        h3_raw, scale3, shift3, short_raw, short_scale, short_shift
    )
    dim_out = h3_raw.shape[-1]
    return out2d.reshape(N, Ho, Wo, dim_out)


def bottle_stack_forward(x_nchw, params, *, configs, heads, dh):
    x = jnp.transpose(x_nchw, (0, 2, 3, 1)).astype(jnp.bfloat16)  # NCHW -> NHWC bf16
    for p, cfg in zip(params, configs):
        x = bottle_block(x, p, cfg, heads, dh)
    # back to NCHW like the reference; f32 for the external interface.
    return jnp.transpose(x, (0, 3, 1, 2)).astype(jnp.float32)


# ----------------------------------------------------------------------------
# Deterministic parameter init (shapes follow the PyTorch __init__)
# ----------------------------------------------------------------------------
def _rand(key, shape, scale):
    return jax.random.normal(key, shape, jnp.float32) * scale


def init_block_params(key, dim, dim_out, fmap, heads, dh, downsample):
    H, W = fmap
    ks = jax.random.split(key, 6)
    p = {}
    if dim != dim_out or downsample:
        if downsample:
            w_sc = _rand(ks[0], (3, 3, dim, dim_out), (9 * dim) ** -0.5)
            w_sc = w_sc.reshape(9 * dim, dim_out)  # matches (kh, kw, c) im2col order
        else:
            w_sc = _rand(ks[0], (dim, dim_out), dim ** -0.5)
        p["shortcut"] = dict(
            w=w_sc.astype(jnp.bfloat16),
            gamma=jnp.ones((dim_out,), jnp.float32),
            beta=jnp.zeros((dim_out,), jnp.float32),
        )
    else:
        p["shortcut"] = None

    p["w1"] = _rand(ks[1], (dim, dim), dim ** -0.5).astype(jnp.bfloat16)
    p["bn1_g"] = jnp.ones((dim,), jnp.float32)
    p["bn1_b"] = jnp.zeros((dim,), jnp.float32)

    # Fold the 1/sqrt(dh) attention scale into the q slice of w_qkv and
    # compensate the rel-pos tables by sqrt(dh): mathematically identical to
    # the reference (the scale applies only to QK^T), but removes the per-tile
    # q*scale work inside the attention kernel.
    attn_scale = dh ** -0.5
    w_qkv = _rand(ks[2], (dim, 3 * heads * dh), dim ** -0.5)
    w_qkv = w_qkv.at[:, : heads * dh].multiply(attn_scale)
    p["mhsa"] = dict(
        w_qkv=w_qkv.astype(jnp.bfloat16),
        w_out=_rand(ks[3], (heads * dh, dim), (heads * dh) ** -0.5).astype(
            jnp.bfloat16
        ),
        rel_height=_rand(ks[4], (2 * H - 1, dh), dh ** -0.5) / attn_scale,
        rel_width=_rand(ks[5], (2 * W - 1, dh), dh ** -0.5) / attn_scale,
    )
    p["bn2_g"] = jnp.ones((dim,), jnp.float32)
    p["bn2_b"] = jnp.zeros((dim,), jnp.float32)
    # Matches the reference nn.init.zeros_(self.net[-1].weight).
    p["w2"] = jnp.zeros((dim, dim_out), jnp.bfloat16)
    p["bn3_g"] = jnp.ones((dim_out,), jnp.float32)
    p["bn3_b"] = jnp.zeros((dim_out,), jnp.float32)
    return p


def init_bottle_stack(key, *, dim, fmap_size, dim_out, num_layers, heads, dh, downsample):
    fmap = (fmap_size, fmap_size)
    params, configs = [], []
    for i in range(num_layers):
        is_first = i == 0
        layer_dim = dim if is_first else dim_out
        layer_down = is_first and downsample
        div = 2 if (downsample and not is_first) else 1
        layer_fmap = (fmap[0] // div, fmap[1] // div)
        key, sub = jax.random.split(key)
        params.append(
            init_block_params(sub, layer_dim, dim_out, layer_fmap, heads, dh, layer_down)
        )
        configs.append(
            dict(dim=layer_dim, dim_out=dim_out, downsample=layer_down, fmap=layer_fmap)
        )
    return params, configs


# ----------------------------------------------------------------------------
if __name__ == "__main__":
    N, DIM, FMAP = 2, 4, 8
    DIM_OUT, NUM_LAYERS, HEADS, DIM_HEAD = 16, 2, 2, 8

    key = jax.random.PRNGKey(0)
    kx, kp = jax.random.split(key)
    x = jax.random.normal(kx, (N, DIM, FMAP, FMAP), jnp.float32)  # NCHW like torch

    params, configs = init_bottle_stack(
        kp,
        dim=DIM,
        fmap_size=FMAP,
        dim_out=DIM_OUT,
        num_layers=NUM_LAYERS,
        heads=HEADS,
        dh=DIM_HEAD,
        downsample=True,
    )

    fwd = jax.jit(
        functools.partial(
            bottle_stack_forward, configs=configs, heads=HEADS, dh=DIM_HEAD
        )
    )
    out = fwd(x, params)
    jax.block_until_ready(out)

    assert out.shape == (N, DIM_OUT, FMAP // 2, FMAP // 2), out.shape
    assert jnp.all(jnp.isfinite(out))
    print("KERNEL_OK")
</pallas_src>

<mosaic_0001>
module attributes {stable_mosaic.version = 11 : i64} {
  func.func @_matmul_kernel(%arg0: i32, %arg1: i32, %arg2: i32, %arg3: memref<128x128xbf16, #tpu.memory_space<vmem>>, %arg4: memref<128x128xbf16, #tpu.memory_space<vmem>>, %arg5: memref<128x128xbf16, #tpu.memory_space<vmem>>, %arg6: memref<1x128xf32, #tpu.memory_space<vmem>>, %arg7: memref<1x128xf32, #tpu.memory_space<vmem>>, %arg8: memref<128x128xf32, #tpu.memory_space<vmem>>) attributes {dimension_semantics = [#tpu.dimension_semantics<parallel>, #tpu.dimension_semantics<parallel>, #tpu.dimension_semantics<arbitrary>], iteration_bounds = array<i64: 1, 1, 1>, scalar_prefetch = 0 : i64, scratch_operands = 1 : i64, tpu.core_type = #tpu.core_type<tc>, window_params = [{transform_indices = @transform_0, window_bounds = array<i64: 128, 128>}, {transform_indices = @transform_1, window_bounds = array<i64: 128, 128>}, {transform_indices = @transform_2, window_bounds = array<i64: 128, 128>}, {transform_indices = @transform_3, window_bounds = array<i64: 1, 128>}, {transform_indices = @transform_4, window_bounds = array<i64: 1, 128>}]} {
    %c0_i32 = arith.constant 0 : i32
    %0 = arith.cmpi eq, %arg2, %c0_i32 : i32
    %1 = arith.extui %0 : i1 to i32
    %c0_i32_0 = arith.constant 0 : i32
    %2 = arith.cmpi ne, %1, %c0_i32_0 : i32
    scf.if %2 {
      %cst_10 = arith.constant 0.000000e+00 : f32
      %12 = vector.broadcast %cst_10 : f32 to vector<128x128xf32>
      %c0_11 = arith.constant 0 : index
      %c0_12 = arith.constant 0 : index
      %13 = vector.load %arg8[%c0_11, %c0_12] : memref<128x128xf32, #tpu.memory_space<vmem>>, vector<128x128xf32>
      tpu.vector_store %arg8[%c0_11, %c0_12], %12 {strides = array<i32>} : memref<128x128xf32, #tpu.memory_space<vmem>>, vector<128x128xf32>,
    } else {
    }
    %c0 = arith.constant 0 : index
    %c0_1 = arith.constant 0 : index
    %3 = vector.load %arg3[%c0, %c0_1] : memref<128x128xbf16, #tpu.memory_space<vmem>>, vector<128x128xbf16>
    %c0_2 = arith.constant 0 : index
    %c0_3 = arith.constant 0 : index
    %4 = vector.load %arg8[%c0_2, %c0_3] : memref<128x128xf32, #tpu.memory_space<vmem>>, vector<128x128xf32>
    %c0_4 = arith.constant 0 : index
    %c0_5 = arith.constant 0 : index
    %5 = vector.load %arg4[%c0_4, %c0_5] : memref<128x128xbf16, #tpu.memory_space<vmem>>, vector<128x128xbf16>
    %cst = arith.constant dense<0.000000e+00> : vector<128x128xf32>
    %6 = tpu.matmul %3, %5, %cst {dimension_numbers = #tpu.dot_dimension_numbers<[1], [0], [0], [1], [0, 0, 1, 1], [], []>} : vector<128x128xbf16>, vector<128x128xbf16>, vector<128x128xf32> -> vector<128x128xf32>
    %7 = arith.addf %4, %6 : vector<128x128xf32>
    %c0_6 = arith.constant 0 : index
    %c0_7 = arith.constant 0 : index
    %8 = vector.load %arg8[%c0_6, %c0_7] : memref<128x128xf32, #tpu.memory_space<vmem>>, vector<128x128xf32>
    tpu.vector_store %arg8[%c0_6, %c0_7], %7 {strides = array<i32>} : memref<128x128xf32, #tpu.memory_space<vmem>>, vector<128x128xf32>,
    %c0_i32_8 = arith.constant 0 : i32
    %9 = arith.cmpi eq, %arg2, %c0_i32_8 : i32
    %10 = arith.extui %9 : i1 to i32
    %c0_i32_9 = arith.constant 0 : i32
    %11 = arith.cmpi ne, %10, %c0_i32_9 : i32
    scf.if %11 {
      %c0_10 = arith.constant 0 : index
      %c0_11 = arith.constant 0 : index
      %12 = vector.load %arg8[%c0_10, %c0_11] : memref<128x128xf32, #tpu.memory_space<vmem>>, vector<128x128xf32>
      %13 = arith.truncf %12 : vector<128x128xf32> to vector<128x128xbf16>
      %c0_12 = arith.constant 0 : index
      %c0_13 = arith.constant 0 : index
      %14 = vector.load %arg5[%c0_12, %c0_13] : memref<128x128xbf16, #tpu.memory_space<vmem>>, vector<128x128xbf16>
      tpu.vector_store %arg5[%c0_12, %c0_13], %13 {strides = array<i32>} : memref<128x128xbf16, #tpu.memory_space<vmem>>, vector<128x128xbf16>,
      %cst_14 = arith.constant dense<0.000000e+00> : vector<128xf32>
      %15 = vector.multi_reduction <add>, %12, %cst_14 [0] : vector<128x128xf32> to vector<128xf32>
      %16 = vector.shape_cast %15 : vector<128xf32> to vector<1x128xf32>
      %c0_15 = arith.constant 0 : index
      %c0_16 = arith.constant 0 : index
      %17 = vector.load %arg6[%c0_15, %c0_16] : memref<1x128xf32, #tpu.memory_space<vmem>>, vector<1x128xf32>
      tpu.vector_store %arg6[%c0_15, %c0_16], %16 {strides = array<i32>} : memref<1x128xf32, #tpu.memory_space<vmem>>, vector<1x128xf32>,
      %18 = arith.mulf %12, %12 : vector<128x128xf32>
      %cst_17 = arith.constant dense<0.000000e+00> : vector<128xf32>
      %19 = vector.multi_reduction <add>, %18, %cst_17 [0] : vector<128x128xf32> to vector<128xf32>
      %20 = vector.shape_cast %19 : vector<128xf32> to vector<1x128xf32>
      %c0_18 = arith.constant 0 : index
      %c0_19 = arith.constant 0 : index
      %21 = vector.load %arg7[%c0_18, %c0_19] : memref<1x128xf32, #tpu.memory_space<vmem>>, vector<1x128xf32>
      tpu.vector_store %arg7[%c0_18, %c0_19], %20 {strides = array<i32>} : memref<1x128xf32, #tpu.memory_space<vmem>>, vector<1x128xf32>,
    } else {
    }
    return
  }
  func.func @transform_0(%arg0: i32, %arg1: i32, %arg2: i32) -> (i32, i32) {
    %c0_i32 = arith.constant 0 : i32
    return %arg0, %arg2 : i32, i32
  }
  func.func @transform_1(%arg0: i32, %arg1: i32, %arg2: i32) -> (i32, i32) {
    %c0_i32 = arith.constant 0 : i32
    return %arg2, %arg1 : i32, i32
  }
  func.func @transform_2(%arg0: i32, %arg1: i32, %arg2: i32) -> (i32, i32) {
    %c0_i32 = arith.constant 0 : i32
    return %arg0, %arg1 : i32, i32
  }
  func.func @transform_3(%arg0: i32, %arg1: i32, %arg2: i32) -> (i32, i32) {
    %c0_i32 = arith.constant 0 : i32
    return %arg0, %arg1 : i32, i32
  }
  func.func @transform_4(%arg0: i32, %arg1: i32, %arg2: i32) -> (i32, i32) {
    %c0_i32 = arith.constant 0 : i32
    return %arg0, %arg1 : i32, i32
  }
}

module attributes {stable_mosaic.version = 11 : i64} {
  func.func @_matmul_kernel(%arg0: i32, %arg1: i32, %arg2: i32, %arg3: memref<128x128xbf16, #tpu.memory_space<vmem>>, %arg4: memref<1x128xf32, #tpu.memory_space<vmem>>, %arg5: memref<1x128xf32, #tpu.memory_space<vmem>>, %arg6: memref<128x128xbf16, #tpu.memory_space<vmem>>, %arg7: memref<128x128xbf16, #tpu.memory_space<vmem>>, %arg8: memref<128x128xf32, #tpu.memory_space<vmem>>) attributes {dimension_semantics = [#tpu.dimension_semantics<parallel>, #tpu.dimension_semantics<parallel>, #tpu.dimension_semantics<arbitrary>], iteration_bounds = array<i64: 1, 1, 1>, scalar_prefetch = 0 : i64, scratch_operands = 1 : i64, tpu.core_type = #tpu.core_type<tc>, window_params = [{transform_indices = @transform_0, window_bounds = array<i64: 128, 128>}, {transform_indices = @transform_1, window_bounds = array<i64: 1, 128>}, {transform_indices = @transform_2, window_bounds = array<i64: 1, 128>}, {transform_indices = @transform_3, window_bounds = array<i64: 128, 128>}, {transform_indices = @transform_4, window_bounds = array<i64: 128, 128>}]} {
    %c0_i32 = arith.constant 0 : i32
    %0 = arith.cmpi eq, %arg2, %c0_i32 : i32
    %1 = arith.extui %0 : i1 to i32
    %c0_i32_0 = arith.constant 0 : i32
    %2 = arith.cmpi ne, %1, %c0_i32_0 : i32
    scf.if %2 {
      %cst_15 = arith.constant 0.000000e+00 : f32
      %22 = vector.broadcast %cst_15 : f32 to vector<128x128xf32>
      %c0_16 = arith.constant 0 : index
      %c0_17 = arith.constant 0 : index
      %23 = vector.load %arg8[%c0_16, %c0_17] : memref<128x128xf32, #tpu.memory_space<vmem>>, vector<128x128xf32>
      tpu.vector_store %arg8[%c0_16, %c0_17], %22 {strides = array<i32>} : memref<128x128xf32, #tpu.memory_space<vmem>>, vector<128x128xf32>,
    } else {
    }
    %c0 = arith.constant 0 : index
    %c0_1 = arith.constant 0 : index
    %3 = vector.load %arg3[%c0, %c0_1] : memref<128x128xbf16, #tpu.memory_space<vmem>>, vector<128x128xbf16>
    %4 = arith.extf %3 : vector<128x128xbf16> to vector<128x128xf32>
    %c0_2 = arith.constant 0 : index
    %c0_3 = arith.constant 0 : index
    %5 = vector.load %arg4[%c0_2, %c0_3] : memref<1x128xf32, #tpu.memory_space<vmem>>, vector<1x128xf32>
    %6 = vector.broadcast %5 : vector<1x128xf32> to vector<128x128xf32>
    %7 = arith.mulf %4, %6 : vector<128x128xf32>
    %c0_4 = arith.constant 0 : index
    %c0_5 = arith.constant 0 : index
    %8 = vector.load %arg5[%c0_4, %c0_5] : memref<1x128xf32, #tpu.memory_space<vmem>>, vector<1x128xf32>
    %9 = vector.broadcast %8 : vector<1x128xf32> to vector<128x128xf32>
    %10 = arith.addf %7, %9 : vector<128x128xf32>
    %cst = arith.constant 0.000000e+00 : f32
    %11 = vector.broadcast %cst : f32 to vector<128x128xf32>
    %12 = arith.maximumf %10, %11 : vector<128x128xf32>
    %13 = arith.truncf %12 : vector<128x128xf32> to vector<128x128xbf16>
    %c0_6 = arith.constant 0 : index
    %c0_7 = arith.constant 0 : index
    %14 = vector.load %arg8[%c0_6, %c0_7] : memref<128x128xf32, #tpu.memory_space<vmem>>, vector<128x128xf32>
    %c0_8 = arith.constant 0 : index
    %c0_9 = arith.constant 0 : index
    %15 = vector.load %arg6[%c0_8, %c0_9] : memref<128x128xbf16, #tpu.memory_space<vmem>>, vector<128x128xbf16>
    %cst_10 = arith.constant dense<0.000000e+00> : vector<128x128xf32>
    %16 = tpu.matmul %13, %15, %cst_10 {dimension_numbers = #tpu.dot_dimension_numbers<[1], [0], [0], [1], [0, 0, 1, 1], [], []>} : vector<128x128xbf16>, vector<128x128xbf16>, vector<128x128xf32> -> vector<128x128xf32>
    %17 = arith.addf %14, %16 : vector<128x128xf32>
    %c0_11 = arith.constant 0 : index
    %c0_12 = arith.constant 0 : index
    %18 = vector.load %arg8[%c0_11, %c0_12] : memref<128x128xf32, #tpu.memory_space<vmem>>, vector<128x128xf32>
    tpu.vector_store %arg8[%c0_11, %c0_12], %17 {strides = array<i32>} : memref<128x128xf32, #tpu.memory_space<vmem>>, vector<128x128xf32>,
    %c0_i32_13 = arith.constant 0 : i32
    %19 = arith.cmpi eq, %arg2, %c0_i32_13 : i32
    %20 = arith.extui %19 : i1 to i32
    %c0_i32_14 = arith.constant 0 : i32
    %21 = arith.cmpi ne, %20, %c0_i32_14 : i32
    scf.if %21 {
      %c0_15 = arith.constant 0 : index
      %c0_16 = arith.constant 0 : index
      %22 = vector.load %arg8[%c0_15, %c0_16] : memref<128x128xf32, #tpu.memory_space<vmem>>, vector<128x128xf32>
      %23 = arith.truncf %22 : vector<128x128xf32> to vector<128x128xbf16>
      %c0_17 = arith.constant 0 : index
      %c0_18 = arith.constant 0 : index
      %24 = vector.load %arg7[%c0_17, %c0_18] : memref<128x128xbf16, #tpu.memory_space<vmem>>, vector<128x128xbf16>
      tpu.vector_store %arg7[%c0_17, %c0_18], %23 {strides = array<i32>} : memref<128x128xbf16, #tpu.memory_space<vmem>>, vector<128x128xbf16>,
    } else {
    }
    return
  }
  func.func @transform_0(%arg0: i32, %arg1: i32, %arg2: i32) -> (i32, i32) {
    %c0_i32 = arith.constant 0 : i32
    return %arg0, %arg2 : i32, i32
  }
  func.func @transform_1(%arg0: i32, %arg1: i32, %arg2: i32) -> (i32, i32) {
    %c0_i32 = arith.constant 0 : i32
    %c0_i32_0 = arith.constant 0 : i32
    return %c0_i32, %arg2 : i32, i32
  }
  func.func @transform_2(%arg0: i32, %arg1: i32, %arg2: i32) -> (i32, i32) {
    %c0_i32 = arith.constant 0 : i32
    %c0_i32_0 = arith.constant 0 : i32
    return %c0_i32, %arg2 : i32, i32
  }
  func.func @transform_3(%arg0: i32, %arg1: i32, %arg2: i32) -> (i32, i32) {
    %c0_i32 = arith.constant 0 : i32
    return %arg2, %arg1 : i32, i32
  }
  func.func @transform_4(%arg0: i32, %arg1: i32, %arg2: i32) -> (i32, i32) {
    %c0_i32 = arith.constant 0 : i32
    return %arg0, %arg1 : i32, i32
  }
}

module attributes {stable_mosaic.version = 11 : i64} {
  func.func @_attention_kernel(%arg0: i32, %arg1: i32, %arg2: memref<4x64x8xbf16, #tpu.memory_space<vmem>>, %arg3: memref<4x64x8xbf16, #tpu.memory_space<vmem>>, %arg4: memref<4x64x8xbf16, #tpu.memory_space<vmem>>, %arg5: memref<4x64x64xbf16, #tpu.memory_space<vmem>>, %arg6: memref<4x64x8xbf16, #tpu.memory_space<vmem>>) attributes {dimension_semantics = [#tpu.dimension_semantics<parallel>, #tpu.dimension_semantics<parallel>], iteration_bounds = array<i64: 1, 1>, scalar_prefetch = 0 : i64, scratch_operands = 0 : i64, tpu.core_type = #tpu.core_type<tc>, window_params = [{transform_indices = @transform_0, window_bounds = array<i64: 4, 64, 8>}, {transform_indices = @transform_1, window_bounds = array<i64: 4, 64, 8>}, {transform_indices = @transform_2, window_bounds = array<i64: 4, 64, 8>}, {transform_indices = @transform_3, window_bounds = array<i64: 4, 64, 64>}, {transform_indices = @transform_4, window_bounds = array<i64: 4, 64, 8>}]} {
    %c0 = arith.constant 0 : index
    %c0_0 = arith.constant 0 : index
    %c0_1 = arith.constant 0 : index
    %0 = vector.load %arg2[%c0, %c0_0, %c0_1] : memref<4x64x8xbf16, #tpu.memory_space<vmem>>, vector<4x64x8xbf16>
    %c0_2 = arith.constant 0 : index
    %c0_3 = arith.constant 0 : index
    %c0_4 = arith.constant 0 : index
    %1 = vector.load %arg3[%c0_2, %c0_3, %c0_4] : memref<4x64x8xbf16, #tpu.memory_space<vmem>>, vector<4x64x8xbf16>
    %c0_5 = arith.constant 0 : index
    %c0_6 = arith.constant 0 : index
    %c0_7 = arith.constant 0 : index
    %2 = vector.load %arg4[%c0_5, %c0_6, %c0_7] : memref<4x64x8xbf16, #tpu.memory_space<vmem>>, vector<4x64x8xbf16>
    "tpu.trace_start"() <{level = 10 : i32, message = "hqd,hkd->hqk"}> : () -> ()
    %cst = arith.constant dense<0.000000e+00> : vector<4x64x64xf32>
    %3 = tpu.matmul %0, %1, %cst {dimension_numbers = #tpu.dot_dimension_numbers<[2], [2], [1], [1], [0, 0, 0, 1, 1, 1], [0], [0]>} : vector<4x64x8xbf16>, vector<4x64x8xbf16>, vector<4x64x64xf32> -> vector<4x64x64xf32>
    "tpu.trace_stop"() : () -> ()
    %c0_8 = arith.constant 0 : index
    %c0_9 = arith.constant 0 : index
    %c0_10 = arith.constant 0 : index
    %4 = vector.load %arg5[%c0_8, %c0_9, %c0_10] : memref<4x64x64xbf16, #tpu.memory_space<vmem>>, vector<4x64x64xbf16>
    %5 = arith.extf %4 : vector<4x64x64xbf16> to vector<4x64x64xf32>
    %6 = arith.addf %3, %5 : vector<4x64x64xf32>
    %cst_11 = arith.constant dense<0xFF800000> : vector<4x64xf32>
    %7 = vector.multi_reduction <maximumf>, %6, %cst_11 [2] : vector<4x64x64xf32> to vector<4x64xf32>
    %8 = vector.shape_cast %7 : vector<4x64xf32> to vector<4x64x1xf32>
    %9 = vector.broadcast %8 : vector<4x64x1xf32> to vector<4x64x64xf32>
    %10 = arith.subf %6, %9 : vector<4x64x64xf32>
    %11 = math.exp %10 : vector<4x64x64xf32>
    %cst_12 = arith.constant dense<0.000000e+00> : vector<4x64xf32>
    %12 = vector.multi_reduction <add>, %11, %cst_12 [2] : vector<4x64x64xf32> to vector<4x64xf32>
    %13 = vector.shape_cast %12 : vector<4x64xf32> to vector<4x64x1xf32>
    %14 = tpu.reciprocal %13 {approx = true} : vector<4x64x1xf32> -> vector<4x64x1xf32>
    %15 = vector.broadcast %14 : vector<4x64x1xf32> to vector<4x64x64xf32>
    %16 = arith.mulf %11, %15 : vector<4x64x64xf32>
    %17 = arith.truncf %16 : vector<4x64x64xf32> to vector<4x64x64xbf16>
    "tpu.trace_start"() <{level = 10 : i32, message = "hqk,hkd->hqd"}> : () -> ()
    %cst_13 = arith.constant dense<0.000000e+00> : vector<4x64x8xf32>
    %18 = tpu.matmul %17, %2, %cst_13 {dimension_numbers = #tpu.dot_dimension_numbers<[2], [1], [1], [2], [0, 0, 0, 1, 1, 2], [0], [0]>} : vector<4x64x64xbf16>, vector<4x64x8xbf16>, vector<4x64x8xf32> -> vector<4x64x8xf32>
    "tpu.trace_stop"() : () -> ()
    %19 = arith.truncf %18 : vector<4x64x8xf32> to vector<4x64x8xbf16>
    %c0_14 = arith.constant 0 : index
    %c0_15 = arith.constant 0 : index
    %c0_16 = arith.constant 0 : index
    %20 = vector.load %arg6[%c0_14, %c0_15, %c0_16] : memref<4x64x8xbf16, #tpu.memory_space<vmem>>, vector<4x64x8xbf16>
    tpu.vector_store %arg6[%c0_14, %c0_15, %c0_16], %19 {strides = array<i32>} : memref<4x64x8xbf16, #tpu.memory_space<vmem>>, vector<4x64x8xbf16>,
    return
  }
  func.func @transform_0(%arg0: i32, %arg1: i32) -> (i32, i32, i32) {
    %c0_i32 = arith.constant 0 : i32
    %c0_i32_0 = arith.constant 0 : i32
    return %arg0, %arg1, %c0_i32 : i32, i32, i32
  }
  func.func @transform_1(%arg0: i32, %arg1: i32) -> (i32, i32, i32) {
    %c0_i32 = arith.constant 0 : i32
    %c0_i32_0 = arith.constant 0 : i32
    %c0_i32_1 = arith.constant 0 : i32
    return %arg0, %c0_i32, %c0_i32_0 : i32, i32, i32
  }
  func.func @transform_2(%arg0: i32, %arg1: i32) -> (i32, i32, i32) {
    %c0_i32 = arith.constant 0 : i32
    %c0_i32_0 = arith.constant 0 : i32
    %c0_i32_1 = arith.constant 0 : i32
    return %arg0, %c0_i32, %c0_i32_0 : i32, i32, i32
  }
  func.func @transform_3(%arg0: i32, %arg1: i32) -> (i32, i32, i32) {
    %c0_i32 = arith.constant 0 : i32
    %c0_i32_0 = arith.constant 0 : i32
    return %arg0, %arg1, %c0_i32 : i32, i32, i32
  }
  func.func @transform_4(%arg0: i32, %arg1: i32) -> (i32, i32, i32) {
    %c0_i32 = arith.constant 0 : i32
    %c0_i32_0 = arith.constant 0 : i32
    return %arg0, %arg1, %c0_i32 : i32, i32, i32
  }
}

module attributes {stable_mosaic.version = 11 : i64} {
  func.func @_matmul_kernel(%arg0: i32, %arg1: i32, %arg2: i32, %arg3: memref<128x128xbf16, #tpu.memory_space<vmem>>, %arg4: memref<128x128xbf16, #tpu.memory_space<vmem>>, %arg5: memref<128x128xbf16, #tpu.memory_space<vmem>>, %arg6: memref<128x128xf32, #tpu.memory_space<vmem>>) attributes {dimension_semantics = [#tpu.dimension_semantics<parallel>, #tpu.dimension_semantics<parallel>, #tpu.dimension_semantics<arbitrary>], iteration_bounds = array<i64: 1, 1, 1>, scalar_prefetch = 0 : i64, scratch_operands = 1 : i64, tpu.core_type = #tpu.core_type<tc>, window_params = [{transform_indices = @transform_0, window_bounds = array<i64: 128, 128>}, {transform_indices = @transform_1, window_bounds = array<i64: 128, 128>}, {transform_indices = @transform_2, window_bounds = array<i64: 128, 128>}]} {
    %c0_i32 = arith.constant 0 : i32
    %0 = arith.cmpi eq, %arg2, %c0_i32 : i32
    %1 = arith.extui %0 : i1 to i32
    %c0_i32_0 = arith.constant 0 : i32
    %2 = arith.cmpi ne, %1, %c0_i32_0 : i32
    scf.if %2 {
      %cst_10 = arith.constant 0.000000e+00 : f32
      %12 = vector.broadcast %cst_10 : f32 to vector<128x128xf32>
      %c0_11 = arith.constant 0 : index
      %c0_12 = arith.constant 0 : index
      %13 = vector.load %arg6[%c0_11, %c0_12] : memref<128x128xf32, #tpu.memory_space<vmem>>, vector<128x128xf32>
      tpu.vector_store %arg6[%c0_11, %c0_12], %12 {strides = array<i32>} : memref<128x128xf32, #tpu.memory_space<vmem>>, vector<128x128xf32>,
    } else {
    }
    %c0 = arith.constant 0 : index
    %c0_1 = arith.constant 0 : index
    %3 = vector.load %arg3[%c0, %c0_1] : memref<128x128xbf16, #tpu.memory_space<vmem>>, vector<128x128xbf16>
    %c0_2 = arith.constant 0 : index
    %c0_3 = arith.constant 0 : index
    %4 = vector.load %arg6[%c0_2, %c0_3] : memref<128x128xf32, #tpu.memory_space<vmem>>, vector<128x128xf32>
    %c0_4 = arith.constant 0 : index
    %c0_5 = arith.constant 0 : index
    %5 = vector.load %arg4[%c0_4, %c0_5] : memref<128x128xbf16, #tpu.memory_space<vmem>>, vector<128x128xbf16>
    %cst = arith.constant dense<0.000000e+00> : vector<128x128xf32>
    %6 = tpu.matmul %3, %5, %cst {dimension_numbers = #tpu.dot_dimension_numbers<[1], [0], [0], [1], [0, 0, 1, 1], [], []>} : vector<128x128xbf16>, vector<128x128xbf16>, vector<128x128xf32> -> vector<128x128xf32>
    %7 = arith.addf %4, %6 : vector<128x128xf32>
    %c0_6 = arith.constant 0 : index
    %c0_7 = arith.constant 0 : index
    %8 = vector.load %arg6[%c0_6, %c0_7] : memref<128x128xf32, #tpu.memory_space<vmem>>, vector<128x128xf32>
    tpu.vector_store %arg6[%c0_6, %c0_7], %7 {strides = array<i32>} : memref<128x128xf32, #tpu.memory_space<vmem>>, vector<128x128xf32>,
    %c0_i32_8 = arith.constant 0 : i32
    %9 = arith.cmpi eq, %arg2, %c0_i32_8 : i32
    %10 = arith.extui %9 : i1 to i32
    %c0_i32_9 = arith.constant 0 : i32
    %11 = arith.cmpi ne, %10, %c0_i32_9 : i32
    scf.if %11 {
      %c0_10 = arith.constant 0 : index
      %c0_11 = arith.constant 0 : index
      %12 = vector.load %arg6[%c0_10, %c0_11] : memref<128x128xf32, #tpu.memory_space<vmem>>, vector<128x128xf32>
      %13 = arith.truncf %12 : vector<128x128xf32> to vector<128x128xbf16>
      %c0_12 = arith.constant 0 : index
      %c0_13 = arith.constant 0 : index
      %14 = vector.load %arg5[%c0_12, %c0_13] : memref<128x128xbf16, #tpu.memory_space<vmem>>, vector<128x128xbf16>
      tpu.vector_store %arg5[%c0_12, %c0_13], %13 {strides = array<i32>} : memref<128x128xbf16, #tpu.memory_space<vmem>>, vector<128x128xbf16>,
    } else {
    }
    return
  }
  func.func @transform_0(%arg0: i32, %arg1: i32, %arg2: i32) -> (i32, i32) {
    %c0_i32 = arith.constant 0 : i32
    return %arg0, %arg2 : i32, i32
  }
  func.func @transform_1(%arg0: i32, %arg1: i32, %arg2: i32) -> (i32, i32) {
    %c0_i32 = arith.constant 0 : i32
    return %arg2, %arg1 : i32, i32
  }
  func.func @transform_2(%arg0: i32, %arg1: i32, %arg2: i32) -> (i32, i32) {
    %c0_i32 = arith.constant 0 : i32
    return %arg0, %arg1 : i32, i32
  }
}

module attributes {stable_mosaic.version = 11 : i64} {
  func.func @_bn_stats_partial_kernel(%arg0: i32, %arg1: memref<32x4xbf16, #tpu.memory_space<vmem>>, %arg2: memref<1x4xf32, #tpu.memory_space<vmem>>, %arg3: memref<1x4xf32, #tpu.memory_space<vmem>>) attributes {dimension_semantics = [#tpu.dimension_semantics<parallel>], iteration_bounds = array<i64: 1>, scalar_prefetch = 0 : i64, scratch_operands = 0 : i64, tpu.core_type = #tpu.core_type<tc>, window_params = [{transform_indices = @transform_0, window_bounds = array<i64: 32, 4>}, {transform_indices = @transform_1, window_bounds = array<i64: 1, 4>}, {transform_indices = @transform_2, window_bounds = array<i64: 1, 4>}]} {
    %c0 = arith.constant 0 : index
    %c0_0 = arith.constant 0 : index
    %0 = vector.load %arg1[%c0, %c0_0] : memref<32x4xbf16, #tpu.memory_space<vmem>>, vector<32x4xbf16>
    %1 = arith.extf %0 : vector<32x4xbf16> to vector<32x4xf32>
    %cst = arith.constant dense<0.000000e+00> : vector<4xf32>
    %2 = vector.multi_reduction <add>, %1, %cst [0] : vector<32x4xf32> to vector<4xf32>
    %3 = vector.shape_cast %2 : vector<4xf32> to vector<1x4xf32>
    %c0_1 = arith.constant 0 : index
    %c0_2 = arith.constant 0 : index
    %4 = vector.load %arg2[%c0_1, %c0_2] : memref<1x4xf32, #tpu.memory_space<vmem>>, vector<1x4xf32>
    tpu.vector_store %arg2[%c0_1, %c0_2], %3 {strides = array<i32>} : memref<1x4xf32, #tpu.memory_space<vmem>>, vector<1x4xf32>,
    %5 = arith.mulf %1, %1 : vector<32x4xf32>
    %cst_3 = arith.constant dense<0.000000e+00> : vector<4xf32>
    %6 = vector.multi_reduction <add>, %5, %cst_3 [0] : vector<32x4xf32> to vector<4xf32>
    %7 = vector.shape_cast %6 : vector<4xf32> to vector<1x4xf32>
    %c0_4 = arith.constant 0 : index
    %c0_5 = arith.constant 0 : index
    %8 = vector.load %arg3[%c0_4, %c0_5] : memref<1x4xf32, #tpu.memory_space<vmem>>, vector<1x4xf32>
    tpu.vector_store %arg3[%c0_4, %c0_5], %7 {strides = array<i32>} : memref<1x4xf32, #tpu.memory_space<vmem>>, vector<1x4xf32>,
    return
  }
  func.func @transform_0(%arg0: i32) -> (i32, i32) {
    %c0_i32 = arith.constant 0 : i32
    %c0_i32_0 = arith.constant 0 : i32
    return %arg0, %c0_i32 : i32, i32
  }
  func.func @transform_1(%arg0: i32) -> (i32, i32) {
    %c0_i32 = arith.constant 0 : i32
    %c0_i32_0 = arith.constant 0 : i32
    return %arg0, %c0_i32 : i32, i32
  }
  func.func @transform_2(%arg0: i32) -> (i32, i32) {
    %c0_i32 = arith.constant 0 : i32
    %c0_i32_0 = arith.constant 0 : i32
    return %arg0, %c0_i32 : i32, i32
  }
}

module attributes {stable_mosaic.version = 11 : i64} {
  func.func @_matmul_kernel(%arg0: i32, %arg1: i32, %arg2: i32, %arg3: memref<32x128xbf16, #tpu.memory_space<vmem>>, %arg4: memref<1x128xf32, #tpu.memory_space<vmem>>, %arg5: memref<1x128xf32, #tpu.memory_space<vmem>>, %arg6: memref<128x128xbf16, #tpu.memory_space<vmem>>, %arg7: memref<32x128xbf16, #tpu.memory_space<vmem>>, %arg8: memref<1x128xf32, #tpu.memory_space<vmem>>, %arg9: memref<1x128xf32, #tpu.memory_space<vmem>>, %arg10: memref<32x128xf32, #tpu.memory_space<vmem>>) attributes {dimension_semantics = [#tpu.dimension_semantics<parallel>, #tpu.dimension_semantics<parallel>, #tpu.dimension_semantics<arbitrary>], iteration_bounds = array<i64: 1, 1, 1>, scalar_prefetch = 0 : i64, scratch_operands = 1 : i64, tpu.core_type = #tpu.core_type<tc>, window_params = [{transform_indices = @transform_0, window_bounds = array<i64: 32, 128>}, {transform_indices = @transform_1, window_bounds = array<i64: 1, 128>}, {transform_indices = @transform_2, window_bounds = array<i64: 1, 128>}, {transform_indices = @transform_3, window_bounds = array<i64: 128, 128>}, {transform_indices = @transform_4, window_bounds = array<i64: 32, 128>}, {transform_indices = @transform_5, window_bounds = array<i64: 1, 128>}, {transform_indices = @transform_6, window_bounds = array<i64: 1, 128>}]} {
    %c0_i32 = arith.constant 0 : i32
    %0 = arith.cmpi eq, %arg2, %c0_i32 : i32
    %1 = arith.extui %0 : i1 to i32
    %c0_i32_0 = arith.constant 0 : i32
    %2 = arith.cmpi ne, %1, %c0_i32_0 : i32
    scf.if %2 {
      %cst_15 = arith.constant 0.000000e+00 : f32
      %22 = vector.broadcast %cst_15 : f32 to vector<32x128xf32>
      %c0_16 = arith.constant 0 : index
      %c0_17 = arith.constant 0 : index
      %23 = vector.load %arg10[%c0_16, %c0_17] : memref<32x128xf32, #tpu.memory_space<vmem>>, vector<32x128xf32>
      tpu.vector_store %arg10[%c0_16, %c0_17], %22 {strides = array<i32>} : memref<32x128xf32, #tpu.memory_space<vmem>>, vector<32x128xf32>,
    } else {
    }
    %c0 = arith.constant 0 : index
    %c0_1 = arith.constant 0 : index
    %3 = vector.load %arg3[%c0, %c0_1] : memref<32x128xbf16, #tpu.memory_space<vmem>>, vector<32x128xbf16>
    %4 = arith.extf %3 : vector<32x128xbf16> to vector<32x128xf32>
    %c0_2 = arith.constant 0 : index
    %c0_3 = arith.constant 0 : index
    %5 = vector.load %arg4[%c0_2, %c0_3] : memref<1x128xf32, #tpu.memory_space<vmem>>, vector<1x128xf32>
    %6 = vector.broadcast %5 : vector<1x128xf32> to vector<32x128xf32>
    %7 = arith.mulf %4, %6 : vector<32x128xf32>
    %c0_4 = arith.constant 0 : index
    %c0_5 = arith.constant 0 : index
    %8 = vector.load %arg5[%c0_4, %c0_5] : memref<1x128xf32, #tpu.memory_space<vmem>>, vector<1x128xf32>
    %9 = vector.broadcast %8 : vector<1x128xf32> to vector<32x128xf32>
    %10 = arith.addf %7, %9 : vector<32x128xf32>
    %cst = arith.constant 0.000000e+00 : f32
    %11 = vector.broadcast %cst : f32 to vector<32x128xf32>
    %12 = arith.maximumf %10, %11 : vector<32x128xf32>
    %13 = arith.truncf %12 : vector<32x128xf32> to vector<32x128xbf16>
    %c0_6 = arith.constant 0 : index
    %c0_7 = arith.constant 0 : index
    %14 = vector.load %arg10[%c0_6, %c0_7] : memref<32x128xf32, #tpu.memory_space<vmem>>, vector<32x128xf32>
    %c0_8 = arith.constant 0 : index
    %c0_9 = arith.constant 0 : index
    %15 = vector.load %arg6[%c0_8, %c0_9] : memref<128x128xbf16, #tpu.memory_space<vmem>>, vector<128x128xbf16>
    %cst_10 = arith.constant dense<0.000000e+00> : vector<32x128xf32>
    %16 = tpu.matmul %13, %15, %cst_10 {dimension_numbers = #tpu.dot_dimension_numbers<[1], [0], [0], [1], [0, 0, 1, 1], [], []>} : vector<32x128xbf16>, vector<128x128xbf16>, vector<32x128xf32> -> vector<32x128xf32>
    %17 = arith.addf %14, %16 : vector<32x128xf32>
    %c0_11 = arith.constant 0 : index
    %c0_12 = arith.constant 0 : index
    %18 = vector.load %arg10[%c0_11, %c0_12] : memref<32x128xf32, #tpu.memory_space<vmem>>, vector<32x128xf32>
    tpu.vector_store %arg10[%c0_11, %c0_12], %17 {strides = array<i32>} : memref<32x128xf32, #tpu.memory_space<vmem>>, vector<32x128xf32>,
    %c0_i32_13 = arith.constant 0 : i32
    %19 = arith.cmpi eq, %arg2, %c0_i32_13 : i32
    %20 = arith.extui %19 : i1 to i32
    %c0_i32_14 = arith.constant 0 : i32
    %21 = arith.cmpi ne, %20, %c0_i32_14 : i32
    scf.if %21 {
      %c0_15 = arith.constant 0 : index
      %c0_16 = arith.constant 0 : index
      %22 = vector.load %arg10[%c0_15, %c0_16] : memref<32x128xf32, #tpu.memory_space<vmem>>, vector<32x128xf32>
      %23 = arith.truncf %22 : vector<32x128xf32> to vector<32x128xbf16>
      %c0_17 = arith.constant 0 : index
      %c0_18 = arith.constant 0 : index
      %24 = vector.load %arg7[%c0_17, %c0_18] : memref<32x128xbf16, #tpu.memory_space<vmem>>, vector<32x128xbf16>
      tpu.vector_store %arg7[%c0_17, %c0_18], %23 {strides = array<i32>} : memref<32x128xbf16, #tpu.memory_space<vmem>>, vector<32x128xbf16>,
      %cst_19 = arith.constant dense<0.000000e+00> : vector<128xf32>
      %25 = vector.multi_reduction <add>, %22, %cst_19 [0] : vector<32x128xf32> to vector<128xf32>
      %26 = vector.shape_cast %25 : vector<128xf32> to vector<1x128xf32>
      %c0_20 = arith.constant 0 : index
      %c0_21 = arith.constant 0 : index
      %27 = vector.load %arg8[%c0_20, %c0_21] : memref<1x128xf32, #tpu.memory_space<vmem>>, vector<1x128xf32>
      tpu.vector_store %arg8[%c0_20, %c0_21], %26 {strides = array<i32>} : memref<1x128xf32, #tpu.memory_space<vmem>>, vector<1x128xf32>,
      %28 = arith.mulf %22, %22 : vector<32x128xf32>
      %cst_22 = arith.constant dense<0.000000e+00> : vector<128xf32>
      %29 = vector.multi_reduction <add>, %28, %cst_22 [0] : vector<32x128xf32> to vector<128xf32>
      %30 = vector.shape_cast %29 : vector<128xf32> to vector<1x128xf32>
      %c0_23 = arith.constant 0 : index
      %c0_24 = arith.constant 0 : index
      %31 = vector.load %arg9[%c0_23, %c0_24] : memref<1x128xf32, #tpu.memory_space<vmem>>, vector<1x128xf32>
      tpu.vector_store %arg9[%c0_23, %c0_24], %30 {strides = array<i32>} : memref<1x128xf32, #tpu.memory_space<vmem>>, vector<1x128xf32>,
    } else {
    }
    return
  }
  func.func @transform_0(%arg0: i32, %arg1: i32, %arg2: i32) -> (i32, i32) {
    %c0_i32 = arith.constant 0 : i32
    return %arg0, %arg2 : i32, i32
  }
  func.func @transform_1(%arg0: i32, %arg1: i32, %arg2: i32) -> (i32, i32) {
    %c0_i32 = arith.constant 0 : i32
    %c0_i32_0 = arith.constant 0 : i32
    return %c0_i32, %arg2 : i32, i32
  }
  func.func @transform_2(%arg0: i32, %arg1: i32, %arg2: i32) -> (i32, i32) {
    %c0_i32 = arith.constant 0 : i32
    %c0_i32_0 = arith.constant 0 : i32
    return %c0_i32, %arg2 : i32, i32
  }
  func.func @transform_3(%arg0: i32, %arg1: i32, %arg2: i32) -> (i32, i32) {
    %c0_i32 = arith.constant 0 : i32
    return %arg2, %arg1 : i32, i32
  }
  func.func @transform_4(%arg0: i32, %arg1: i32, %arg2: i32) -> (i32, i32) {
    %c0_i32 = arith.constant 0 : i32
    return %arg0, %arg1 : i32, i32
  }
  func.func @transform_5(%arg0: i32, %arg1: i32, %arg2: i32) -> (i32, i32) {
    %c0_i32 = arith.constant 0 : i32
    return %arg0, %arg1 : i32, i32
  }
  func.func @transform_6(%arg0: i32, %arg1: i32, %arg2: i32) -> (i32, i32) {
    %c0_i32 = arith.constant 0 : i32
    return %arg0, %arg1 : i32, i32
  }
}

module attributes {stable_mosaic.version = 11 : i64} {
  func.func @_matmul_kernel(%arg0: i32, %arg1: i32, %arg2: i32, %arg3: memref<32x128xbf16, #tpu.memory_space<vmem>>, %arg4: memref<128x128xbf16, #tpu.memory_space<vmem>>, %arg5: memref<32x128xbf16, #tpu.memory_space<vmem>>, %arg6: memref<1x128xf32, #tpu.memory_space<vmem>>, %arg7: memref<1x128xf32, #tpu.memory_space<vmem>>, %arg8: memref<32x128xf32, #tpu.memory_space<vmem>>) attributes {dimension_semantics = [#tpu.dimension_semantics<parallel>, #tpu.dimension_semantics<parallel>, #tpu.dimension_semantics<arbitrary>], iteration_bounds = array<i64: 1, 1, 1>, scalar_prefetch = 0 : i64, scratch_operands = 1 : i64, tpu.core_type = #tpu.core_type<tc>, window_params = [{transform_indices = @transform_0, window_bounds = array<i64: 32, 128>}, {transform_indices = @transform_1, window_bounds = array<i64: 128, 128>}, {transform_indices = @transform_2, window_bounds = array<i64: 32, 128>}, {transform_indices = @transform_3, window_bounds = array<i64: 1, 128>}, {transform_indices = @transform_4, window_bounds = array<i64: 1, 128>}]} {
    %c0_i32 = arith.constant 0 : i32
    %0 = arith.cmpi eq, %arg2, %c0_i32 : i32
    %1 = arith.extui %0 : i1 to i32
    %c0_i32_0 = arith.constant 0 : i32
    %2 = arith.cmpi ne, %1, %c0_i32_0 : i32
    scf.if %2 {
      %cst_10 = arith.constant 0.000000e+00 : f32
      %12 = vector.broadcast %cst_10 : f32 to vector<32x128xf32>
      %c0_11 = arith.constant 0 : index
      %c0_12 = arith.constant 0 : index
      %13 = vector.load %arg8[%c0_11, %c0_12] : memref<32x128xf32, #tpu.memory_space<vmem>>, vector<32x128xf32>
      tpu.vector_store %arg8[%c0_11, %c0_12], %12 {strides = array<i32>} : memref<32x128xf32, #tpu.memory_space<vmem>>, vector<32x128xf32>,
    } else {
    }
    %c0 = arith.constant 0 : index
    %c0_1 = arith.constant 0 : index
    %3 = vector.load %arg3[%c0, %c0_1] : memref<32x128xbf16, #tpu.memory_space<vmem>>, vector<32x128xbf16>
    %c0_2 = arith.constant 0 : index
    %c0_3 = arith.constant 0 : index
    %4 = vector.load %arg8[%c0_2, %c0_3] : memref<32x128xf32, #tpu.memory_space<vmem>>, vector<32x128xf32>
    %c0_4 = arith.constant 0 : index
    %c0_5 = arith.constant 0 : index
    %5 = vector.load %arg4[%c0_4, %c0_5] : memref<128x128xbf16, #tpu.memory_space<vmem>>, vector<128x128xbf16>
    %cst = arith.constant dense<0.000000e+00> : vector<32x128xf32>
    %6 = tpu.matmul %3, %5, %cst {dimension_numbers = #tpu.dot_dimension_numbers<[1], [0], [0], [1], [0, 0, 1, 1], [], []>} : vector<32x128xbf16>, vector<128x128xbf16>, vector<32x128xf32> -> vector<32x128xf32>
    %7 = arith.addf %4, %6 : vector<32x128xf32>
    %c0_6 = arith.constant 0 : index
    %c0_7 = arith.constant 0 : index
    %8 = vector.load %arg8[%c0_6, %c0_7] : memref<32x128xf32, #tpu.memory_space<vmem>>, vector<32x128xf32>
    tpu.vector_store %arg8[%c0_6, %c0_7], %7 {strides = array<i32>} : memref<32x128xf32, #tpu.memory_space<vmem>>, vector<32x128xf32>,
    %c0_i32_8 = arith.constant 0 : i32
    %9 = arith.cmpi eq, %arg2, %c0_i32_8 : i32
    %10 = arith.extui %9 : i1 to i32
    %c0_i32_9 = arith.constant 0 : i32
    %11 = arith.cmpi ne, %10, %c0_i32_9 : i32
    scf.if %11 {
      %c0_10 = arith.constant 0 : index
      %c0_11 = arith.constant 0 : index
      %12 = vector.load %arg8[%c0_10, %c0_11] : memref<32x128xf32, #tpu.memory_space<vmem>>, vector<32x128xf32>
      %13 = arith.truncf %12 : vector<32x128xf32> to vector<32x128xbf16>
      %c0_12 = arith.constant 0 : index
      %c0_13 = arith.constant 0 : index
      %14 = vector.load %arg5[%c0_12, %c0_13] : memref<32x128xbf16, #tpu.memory_space<vmem>>, vector<32x128xbf16>
      tpu.vector_store %arg5[%c0_12, %c0_13], %13 {strides = array<i32>} : memref<32x128xbf16, #tpu.memory_space<vmem>>, vector<32x128xbf16>,
      %cst_14 = arith.constant dense<0.000000e+00> : vector<128xf32>
      %15 = vector.multi_reduction <add>, %12, %cst_14 [0] : vector<32x128xf32> to vector<128xf32>
      %16 = vector.shape_cast %15 : vector<128xf32> to vector<1x128xf32>
      %c0_15 = arith.constant 0 : index
      %c0_16 = arith.constant 0 : index
      %17 = vector.load %arg6[%c0_15, %c0_16] : memref<1x128xf32, #tpu.memory_space<vmem>>, vector<1x128xf32>
      tpu.vector_store %arg6[%c0_15, %c0_16], %16 {strides = array<i32>} : memref<1x128xf32, #tpu.memory_space<vmem>>, vector<1x128xf32>,
      %18 = arith.mulf %12, %12 : vector<32x128xf32>
      %cst_17 = arith.constant dense<0.000000e+00> : vector<128xf32>
      %19 = vector.multi_reduction <add>, %18, %cst_17 [0] : vector<32x128xf32> to vector<128xf32>
      %20 = vector.shape_cast %19 : vector<128xf32> to vector<1x128xf32>
      %c0_18 = arith.constant 0 : index
      %c0_19 = arith.constant 0 : index
      %21 = vector.load %arg7[%c0_18, %c0_19] : memref<1x128xf32, #tpu.memory_space<vmem>>, vector<1x128xf32>
      tpu.vector_store %arg7[%c0_18, %c0_19], %20 {strides = array<i32>} : memref<1x128xf32, #tpu.memory_space<vmem>>, vector<1x128xf32>,
    } else {
    }
    return
  }
  func.func @transform_0(%arg0: i32, %arg1: i32, %arg2: i32) -> (i32, i32) {
    %c0_i32 = arith.constant 0 : i32
    return %arg0, %arg2 : i32, i32
  }
  func.func @transform_1(%arg0: i32, %arg1: i32, %arg2: i32) -> (i32, i32) {
    %c0_i32 = arith.constant 0 : i32
    return %arg2, %arg1 : i32, i32
  }
  func.func @transform_2(%arg0: i32, %arg1: i32, %arg2: i32) -> (i32, i32) {
    %c0_i32 = arith.constant 0 : i32
    return %arg0, %arg1 : i32, i32
  }
  func.func @transform_3(%arg0: i32, %arg1: i32, %arg2: i32) -> (i32, i32) {
    %c0_i32 = arith.constant 0 : i32
    return %arg0, %arg1 : i32, i32
  }
  func.func @transform_4(%arg0: i32, %arg1: i32, %arg2: i32) -> (i32, i32) {
    %c0_i32 = arith.constant 0 : i32
    return %arg0, %arg1 : i32, i32
  }
}

module attributes {stable_mosaic.version = 11 : i64} {
  func.func @_bn_residual_kernel(%arg0: i32, %arg1: memref<32x16xbf16, #tpu.memory_space<vmem>>, %arg2: memref<1x16xf32, #tpu.memory_space<vmem>>, %arg3: memref<1x16xf32, #tpu.memory_space<vmem>>, %arg4: memref<32x16xbf16, #tpu.memory_space<vmem>>, %arg5: memref<1x16xf32, #tpu.memory_space<vmem>>, %arg6: memref<1x16xf32, #tpu.memory_space<vmem>>, %arg7: memref<32x16xbf16, #tpu.memory_space<vmem>>) attributes {dimension_semantics = [#tpu.dimension_semantics<parallel>], iteration_bounds = array<i64: 1>, scalar_prefetch = 0 : i64, scratch_operands = 0 : i64, tpu.core_type = #tpu.core_type<tc>, window_params = [{transform_indices = @transform_0, window_bounds = array<i64: 32, 16>}, {pipeline_mode = #tpu.pipeline_mode<synchronous>, transform_indices = @transform_1, window_bounds = array<i64: 1, 16>}, {pipeline_mode = #tpu.pipeline_mode<synchronous>, transform_indices = @transform_2, window_bounds = array<i64: 1, 16>}, {transform_indices = @transform_3, window_bounds = array<i64: 32, 16>}, {pipeline_mode = #tpu.pipeline_mode<synchronous>, transform_indices = @transform_4, window_bounds = array<i64: 1, 16>}, {pipeline_mode = #tpu.pipeline_mode<synchronous>, transform_indices = @transform_5, window_bounds = array<i64: 1, 16>}, {transform_indices = @transform_6, window_bounds = array<i64: 32, 16>}]} {
    %c0 = arith.constant 0 : index
    %c0_0 = arith.constant 0 : index
    %0 = vector.load %arg1[%c0, %c0_0] : memref<32x16xbf16, #tpu.memory_space<vmem>>, vector<32x16xbf16>
    %1 = arith.extf %0 : vector<32x16xbf16> to vector<32x16xf32>
    %c0_1 = arith.constant 0 : index
    %c0_2 = arith.constant 0 : index
    %2 = vector.load %arg2[%c0_1, %c0_2] : memref<1x16xf32, #tpu.memory_space<vmem>>, vector<1x16xf32>
    %3 = vector.broadcast %2 : vector<1x16xf32> to vector<32x16xf32>
    %4 = arith.mulf %1, %3 : vector<32x16xf32>
    %c0_3 = arith.constant 0 : index
    %c0_4 = arith.constant 0 : index
    %5 = vector.load %arg3[%c0_3, %c0_4] : memref<1x16xf32, #tpu.memory_space<vmem>>, vector<1x16xf32>
    %6 = vector.broadcast %5 : vector<1x16xf32> to vector<32x16xf32>
    %7 = arith.addf %4, %6 : vector<32x16xf32>
    %c0_5 = arith.constant 0 : index
    %c0_6 = arith.constant 0 : index
    %8 = vector.load %arg4[%c0_5, %c0_6] : memref<32x16xbf16, #tpu.memory_space<vmem>>, vector<32x16xbf16>
    %9 = arith.extf %8 : vector<32x16xbf16> to vector<32x16xf32>
    %c0_7 = arith.constant 0 : index
    %c0_8 = arith.constant 0 : index
    %10 = vector.load %arg5[%c0_7, %c0_8] : memref<1x16xf32, #tpu.memory_space<vmem>>, vector<1x16xf32>
    %11 = vector.broadcast %10 : vector<1x16xf32> to vector<32x16xf32>
    %12 = arith.mulf %9, %11 : vector<32x16xf32>
    %c0_9 = arith.constant 0 : index
    %c0_10 = arith.constant 0 : index
    %13 = vector.load %arg6[%c0_9, %c0_10] : memref<1x16xf32, #tpu.memory_space<vmem>>, vector<1x16xf32>
    %14 = vector.broadcast %13 : vector<1x16xf32> to vector<32x16xf32>
    %15 = arith.addf %12, %14 : vector<32x16xf32>
    %cst = arith.constant 0.000000e+00 : f32
    %16 = vector.broadcast %cst : f32 to vector<32x16xf32>
    %17 = arith.maximumf %15, %16 : vector<32x16xf32>
    %18 = arith.addf %7, %17 : vector<32x16xf32>
    %cst_11 = arith.constant 0.000000e+00 : f32
    %19 = vector.broadcast %cst_11 : f32 to vector<32x16xf32>
    %20 = arith.maximumf %18, %19 : vector<32x16xf32>
    %21 = arith.truncf %20 : vector<32x16xf32> to vector<32x16xbf16>
    %c0_12 = arith.constant 0 : index
    %c0_13 = arith.constant 0 : index
    %22 = vector.load %arg7[%c0_12, %c0_13] : memref<32x16xbf16, #tpu.memory_space<vmem>>, vector<32x16xbf16>
    tpu.vector_store %arg7[%c0_12, %c0_13], %21 {strides = array<i32>} : memref<32x16xbf16, #tpu.memory_space<vmem>>, vector<32x16xbf16>,
    return
  }
  func.func @transform_0(%arg0: i32) -> (i32, i32) {
    %c0_i32 = arith.constant 0 : i32
    %c0_i32_0 = arith.constant 0 : i32
    return %arg0, %c0_i32 : i32, i32
  }
  func.func @transform_1(%arg0: i32) -> (i32, i32) {
    %c0_i32 = arith.constant 0 : i32
    %c0_i32_0 = arith.constant 0 : i32
    %c0_i32_1 = arith.constant 0 : i32
    return %c0_i32, %c0_i32_0 : i32, i32
  }
  func.func @transform_2(%arg0: i32) -> (i32, i32) {
    %c0_i32 = arith.constant 0 : i32
    %c0_i32_0 = arith.constant 0 : i32
    %c0_i32_1 = arith.constant 0 : i32
    return %c0_i32, %c0_i32_0 : i32, i32
  }
  func.func @transform_3(%arg0: i32) -> (i32, i32) {
    %c0_i32 = arith.constant 0 : i32
    %c0_i32_0 = arith.constant 0 : i32
    return %arg0, %c0_i32 : i32, i32
  }
  func.func @transform_4(%arg0: i32) -> (i32, i32) {
    %c0_i32 = arith.constant 0 : i32
    %c0_i32_0 = arith.constant 0 : i32
    %c0_i32_1 = arith.constant 0 : i32
    return %c0_i32, %c0_i32_0 : i32, i32
  }
  func.func @transform_5(%arg0: i32) -> (i32, i32) {
    %c0_i32 = arith.constant 0 : i32
    %c0_i32_0 = arith.constant 0 : i32
    %c0_i32_1 = arith.constant 0 : i32
    return %c0_i32, %c0_i32_0 : i32, i32
  }
  func.func @transform_6(%arg0: i32) -> (i32, i32) {
    %c0_i32 = arith.constant 0 : i32
    %c0_i32_0 = arith.constant 0 : i32
    return %arg0, %c0_i32 : i32, i32
  }
}

module attributes {stable_mosaic.version = 11 : i64} {
  func.func @_matmul_kernel(%arg0: i32, %arg1: i32, %arg2: i32, %arg3: memref<32x128xbf16, #tpu.memory_space<vmem>>, %arg4: memref<1x128xf32, #tpu.memory_space<vmem>>, %arg5: memref<1x128xf32, #tpu.memory_space<vmem>>, %arg6: memref<128x128xbf16, #tpu.memory_space<vmem>>, %arg7: memref<32x128xbf16, #tpu.memory_space<vmem>>, %arg8: memref<32x128xf32, #tpu.memory_space<vmem>>) attributes {dimension_semantics = [#tpu.dimension_semantics<parallel>, #tpu.dimension_semantics<parallel>, #tpu.dimension_semantics<arbitrary>], iteration_bounds = array<i64: 1, 1, 1>, scalar_prefetch = 0 : i64, scratch_operands = 1 : i64, tpu.core_type = #tpu.core_type<tc>, window_params = [{transform_indices = @transform_0, window_bounds = array<i64: 32, 128>}, {transform_indices = @transform_1, window_bounds = array<i64: 1, 128>}, {transform_indices = @transform_2, window_bounds = array<i64: 1, 128>}, {transform_indices = @transform_3, window_bounds = array<i64: 128, 128>}, {transform_indices = @transform_4, window_bounds = array<i64: 32, 128>}]} {
    %c0_i32 = arith.constant 0 : i32
    %0 = arith.cmpi eq, %arg2, %c0_i32 : i32
    %1 = arith.extui %0 : i1 to i32
    %c0_i32_0 = arith.constant 0 : i32
    %2 = arith.cmpi ne, %1, %c0_i32_0 : i32
    scf.if %2 {
      %cst_15 = arith.constant 0.000000e+00 : f32
      %22 = vector.broadcast %cst_15 : f32 to vector<32x128xf32>
      %c0_16 = arith.constant 0 : index
      %c0_17 = arith.constant 0 : index
      %23 = vector.load %arg8[%c0_16, %c0_17] : memref<32x128xf32, #tpu.memory_space<vmem>>, vector<32x128xf32>
      tpu.vector_store %arg8[%c0_16, %c0_17], %22 {strides = array<i32>} : memref<32x128xf32, #tpu.memory_space<vmem>>, vector<32x128xf32>,
    } else {
    }
    %c0 = arith.constant 0 : index
    %c0_1 = arith.constant 0 : index
    %3 = vector.load %arg3[%c0, %c0_1] : memref<32x128xbf16, #tpu.memory_space<vmem>>, vector<32x128xbf16>
    %4 = arith.extf %3 : vector<32x128xbf16> to vector<32x128xf32>
    %c0_2 = arith.constant 0 : index
    %c0_3 = arith.constant 0 : index
    %5 = vector.load %arg4[%c0_2, %c0_3] : memref<1x128xf32, #tpu.memory_space<vmem>>, vector<1x128xf32>
    %6 = vector.broadcast %5 : vector<1x128xf32> to vector<32x128xf32>
    %7 = arith.mulf %4, %6 : vector<32x128xf32>
    %c0_4 = arith.constant 0 : index
    %c0_5 = arith.constant 0 : index
    %8 = vector.load %arg5[%c0_4, %c0_5] : memref<1x128xf32, #tpu.memory_space<vmem>>, vector<1x128xf32>
    %9 = vector.broadcast %8 : vector<1x128xf32> to vector<32x128xf32>
    %10 = arith.addf %7, %9 : vector<32x128xf32>
    %cst = arith.constant 0.000000e+00 : f32
    %11 = vector.broadcast %cst : f32 to vector<32x128xf32>
    %12 = arith.maximumf %10, %11 : vector<32x128xf32>
    %13 = arith.truncf %12 : vector<32x128xf32> to vector<32x128xbf16>
    %c0_6 = arith.constant 0 : index
    %c0_7 = arith.constant 0 : index
    %14 = vector.load %arg8[%c0_6, %c0_7] : memref<32x128xf32, #tpu.memory_space<vmem>>, vector<32x128xf32>
    %c0_8 = arith.constant 0 : index
    %c0_9 = arith.constant 0 : index
    %15 = vector.load %arg6[%c0_8, %c0_9] : memref<128x128xbf16, #tpu.memory_space<vmem>>, vector<128x128xbf16>
    %cst_10 = arith.constant dense<0.000000e+00> : vector<32x128xf32>
    %16 = tpu.matmul %13, %15, %cst_10 {dimension_numbers = #tpu.dot_dimension_numbers<[1], [0], [0], [1], [0, 0, 1, 1], [], []>} : vector<32x128xbf16>, vector<128x128xbf16>, vector<32x128xf32> -> vector<32x128xf32>
    %17 = arith.addf %14, %16 : vector<32x128xf32>
    %c0_11 = arith.constant 0 : index
    %c0_12 = arith.constant 0 : index
    %18 = vector.load %arg8[%c0_11, %c0_12] : memref<32x128xf32, #tpu.memory_space<vmem>>, vector<32x128xf32>
    tpu.vector_store %arg8[%c0_11, %c0_12], %17 {strides = array<i32>} : memref<32x128xf32, #tpu.memory_space<vmem>>, vector<32x128xf32>,
    %c0_i32_13 = arith.constant 0 : i32
    %19 = arith.cmpi eq, %arg2, %c0_i32_13 : i32
    %20 = arith.extui %19 : i1 to i32
    %c0_i32_14 = arith.constant 0 : i32
    %21 = arith.cmpi ne, %20, %c0_i32_14 : i32
    scf.if %21 {
      %c0_15 = arith.constant 0 : index
      %c0_16 = arith.constant 0 : index
      %22 = vector.load %arg8[%c0_15, %c0_16] : memref<32x128xf32, #tpu.memory_space<vmem>>, vector<32x128xf32>
      %23 = arith.truncf %22 : vector<32x128xf32> to vector<32x128xbf16>
      %c0_17 = arith.constant 0 : index
      %c0_18 = arith.constant 0 : index
      %24 = vector.load %arg7[%c0_17, %c0_18] : memref<32x128xbf16, #tpu.memory_space<vmem>>, vector<32x128xbf16>
      tpu.vector_store %arg7[%c0_17, %c0_18], %23 {strides = array<i32>} : memref<32x128xbf16, #tpu.memory_space<vmem>>, vector<32x128xbf16>,
    } else {
    }
    return
  }
  func.func @transform_0(%arg0: i32, %arg1: i32, %arg2: i32) -> (i32, i32) {
    %c0_i32 = arith.constant 0 : i32
    return %arg0, %arg2 : i32, i32
  }
  func.func @transform_1(%arg0: i32, %arg1: i32, %arg2: i32) -> (i32, i32) {
    %c0_i32 = arith.constant 0 : i32
    %c0_i32_0 = arith.constant 0 : i32
    return %c0_i32, %arg2 : i32, i32
  }
  func.func @transform_2(%arg0: i32, %arg1: i32, %arg2: i32) -> (i32, i32) {
    %c0_i32 = arith.constant 0 : i32
    %c0_i32_0 = arith.constant 0 : i32
    return %c0_i32, %arg2 : i32, i32
  }
  func.func @transform_3(%arg0: i32, %arg1: i32, %arg2: i32) -> (i32, i32) {
    %c0_i32 = arith.constant 0 : i32
    return %arg2, %arg1 : i32, i32
  }
  func.func @transform_4(%arg0: i32, %arg1: i32, %arg2: i32) -> (i32, i32) {
    %c0_i32 = arith.constant 0 : i32
    return %arg0, %arg1 : i32, i32
  }
}

module attributes {stable_mosaic.version = 11 : i64} {
  func.func @_attention_kernel(%arg0: i32, %arg1: i32, %arg2: memref<4x16x8xbf16, #tpu.memory_space<vmem>>, %arg3: memref<4x16x8xbf16, #tpu.memory_space<vmem>>, %arg4: memref<4x16x8xbf16, #tpu.memory_space<vmem>>, %arg5: memref<4x16x16xbf16, #tpu.memory_space<vmem>>, %arg6: memref<4x16x8xbf16, #tpu.memory_space<vmem>>) attributes {dimension_semantics = [#tpu.dimension_semantics<parallel>, #tpu.dimension_semantics<parallel>], iteration_bounds = array<i64: 1, 1>, scalar_prefetch = 0 : i64, scratch_operands = 0 : i64, tpu.core_type = #tpu.core_type<tc>, window_params = [{transform_indices = @transform_0, window_bounds = array<i64: 4, 16, 8>}, {transform_indices = @transform_1, window_bounds = array<i64: 4, 16, 8>}, {transform_indices = @transform_2, window_bounds = array<i64: 4, 16, 8>}, {transform_indices = @transform_3, window_bounds = array<i64: 4, 16, 16>}, {transform_indices = @transform_4, window_bounds = array<i64: 4, 16, 8>}]} {
    %c0 = arith.constant 0 : index
    %c0_0 = arith.constant 0 : index
    %c0_1 = arith.constant 0 : index
    %0 = vector.load %arg2[%c0, %c0_0, %c0_1] : memref<4x16x8xbf16, #tpu.memory_space<vmem>>, vector<4x16x8xbf16>
    %c0_2 = arith.constant 0 : index
    %c0_3 = arith.constant 0 : index
    %c0_4 = arith.constant 0 : index
    %1 = vector.load %arg3[%c0_2, %c0_3, %c0_4] : memref<4x16x8xbf16, #tpu.memory_space<vmem>>, vector<4x16x8xbf16>
    %c0_5 = arith.constant 0 : index
    %c0_6 = arith.constant 0 : index
    %c0_7 = arith.constant 0 : index
    %2 = vector.load %arg4[%c0_5, %c0_6, %c0_7] : memref<4x16x8xbf16, #tpu.memory_space<vmem>>, vector<4x16x8xbf16>
    "tpu.trace_start"() <{level = 10 : i32, message = "hqd,hkd->hqk"}> : () -> ()
    %cst = arith.constant dense<0.000000e+00> : vector<4x16x16xf32>
    %3 = tpu.matmul %0, %1, %cst {dimension_numbers = #tpu.dot_dimension_numbers<[2], [2], [1], [1], [0, 0, 0, 1, 1, 1], [0], [0]>} : vector<4x16x8xbf16>, vector<4x16x8xbf16>, vector<4x16x16xf32> -> vector<4x16x16xf32>
    "tpu.trace_stop"() : () -> ()
    %c0_8 = arith.constant 0 : index
    %c0_9 = arith.constant 0 : index
    %c0_10 = arith.constant 0 : index
    %4 = vector.load %arg5[%c0_8, %c0_9, %c0_10] : memref<4x16x16xbf16, #tpu.memory_space<vmem>>, vector<4x16x16xbf16>
    %5 = arith.extf %4 : vector<4x16x16xbf16> to vector<4x16x16xf32>
    %6 = arith.addf %3, %5 : vector<4x16x16xf32>
    %cst_11 = arith.constant dense<0xFF800000> : vector<4x16xf32>
    %7 = vector.multi_reduction <maximumf>, %6, %cst_11 [2] : vector<4x16x16xf32> to vector<4x16xf32>
    %8 = vector.shape_cast %7 : vector<4x16xf32> to vector<4x16x1xf32>
    %9 = vector.broadcast %8 : vector<4x16x1xf32> to vector<4x16x16xf32>
    %10 = arith.subf %6, %9 : vector<4x16x16xf32>
    %11 = math.exp %10 : vector<4x16x16xf32>
    %cst_12 = arith.constant dense<0.000000e+00> : vector<4x16xf32>
    %12 = vector.multi_reduction <add>, %11, %cst_12 [2] : vector<4x16x16xf32> to vector<4x16xf32>
    %13 = vector.shape_cast %12 : vector<4x16xf32> to vector<4x16x1xf32>
    %14 = tpu.reciprocal %13 {approx = true} : vector<4x16x1xf32> -> vector<4x16x1xf32>
    %15 = vector.broadcast %14 : vector<4x16x1xf32> to vector<4x16x16xf32>
    %16 = arith.mulf %11, %15 : vector<4x16x16xf32>
    %17 = arith.truncf %16 : vector<4x16x16xf32> to vector<4x16x16xbf16>
    "tpu.trace_start"() <{level = 10 : i32, message = "hqk,hkd->hqd"}> : () -> ()
    %cst_13 = arith.constant dense<0.000000e+00> : vector<4x16x8xf32>
    %18 = tpu.matmul %17, %2, %cst_13 {dimension_numbers = #tpu.dot_dimension_numbers<[2], [1], [1], [2], [0, 0, 0, 1, 1, 2], [0], [0]>} : vector<4x16x16xbf16>, vector<4x16x8xbf16>, vector<4x16x8xf32> -> vector<4x16x8xf32>
    "tpu.trace_stop"() : () -> ()
    %19 = arith.truncf %18 : vector<4x16x8xf32> to vector<4x16x8xbf16>
    %c0_14 = arith.constant 0 : index
    %c0_15 = arith.constant 0 : index
    %c0_16 = arith.constant 0 : index
    %20 = vector.load %arg6[%c0_14, %c0_15, %c0_16] : memref<4x16x8xbf16, #tpu.memory_space<vmem>>, vector<4x16x8xbf16>
    tpu.vector_store %arg6[%c0_14, %c0_15, %c0_16], %19 {strides = array<i32>} : memref<4x16x8xbf16, #tpu.memory_space<vmem>>, vector<4x16x8xbf16>,
    return
  }
  func.func @transform_0(%arg0: i32, %arg1: i32) -> (i32, i32, i32) {
    %c0_i32 = arith.constant 0 : i32
    %c0_i32_0 = arith.constant 0 : i32
    return %arg0, %arg1, %c0_i32 : i32, i32, i32
  }
  func.func @transform_1(%arg0: i32, %arg1: i32) -> (i32, i32, i32) {
    %c0_i32 = arith.constant 0 : i32
    %c0_i32_0 = arith.constant 0 : i32
    %c0_i32_1 = arith.constant 0 : i32
    return %arg0, %c0_i32, %c0_i32_0 : i32, i32, i32
  }
  func.func @transform_2(%arg0: i32, %arg1: i32) -> (i32, i32, i32) {
    %c0_i32 = arith.constant 0 : i32
    %c0_i32_0 = arith.constant 0 : i32
    %c0_i32_1 = arith.constant 0 : i32
    return %arg0, %c0_i32, %c0_i32_0 : i32, i32, i32
  }
  func.func @transform_3(%arg0: i32, %arg1: i32) -> (i32, i32, i32) {
    %c0_i32 = arith.constant 0 : i32
    %c0_i32_0 = arith.constant 0 : i32
    return %arg0, %arg1, %c0_i32 : i32, i32, i32
  }
  func.func @transform_4(%arg0: i32, %arg1: i32) -> (i32, i32, i32) {
    %c0_i32 = arith.constant 0 : i32
    %c0_i32_0 = arith.constant 0 : i32
    return %arg0, %arg1, %c0_i32 : i32, i32, i32
  }
}

module attributes {stable_mosaic.version = 11 : i64} {
  func.func @_bn_residual_kernel(%arg0: i32, %arg1: memref<32x16xbf16, #tpu.memory_space<vmem>>, %arg2: memref<1x16xf32, #tpu.memory_space<vmem>>, %arg3: memref<1x16xf32, #tpu.memory_space<vmem>>, %arg4: memref<32x16xbf16, #tpu.memory_space<vmem>>, %arg5: memref<32x16xbf16, #tpu.memory_space<vmem>>) attributes {dimension_semantics = [#tpu.dimension_semantics<parallel>], iteration_bounds = array<i64: 1>, scalar_prefetch = 0 : i64, scratch_operands = 0 : i64, tpu.core_type = #tpu.core_type<tc>, window_params = [{transform_indices = @transform_0, window_bounds = array<i64: 32, 16>}, {pipeline_mode = #tpu.pipeline_mode<synchronous>, transform_indices = @transform_1, window_bounds = array<i64: 1, 16>}, {pipeline_mode = #tpu.pipeline_mode<synchronous>, transform_indices = @transform_2, window_bounds = array<i64: 1, 16>}, {transform_indices = @transform_3, window_bounds = array<i64: 32, 16>}, {transform_indices = @transform_4, window_bounds = array<i64: 32, 16>}]} {
    %c0 = arith.constant 0 : index
    %c0_0 = arith.constant 0 : index
    %0 = vector.load %arg1[%c0, %c0_0] : memref<32x16xbf16, #tpu.memory_space<vmem>>, vector<32x16xbf16>
    %1 = arith.extf %0 : vector<32x16xbf16> to vector<32x16xf32>
    %c0_1 = arith.constant 0 : index
    %c0_2 = arith.constant 0 : index
    %2 = vector.load %arg2[%c0_1, %c0_2] : memref<1x16xf32, #tpu.memory_space<vmem>>, vector<1x16xf32>
    %3 = vector.broadcast %2 : vector<1x16xf32> to vector<32x16xf32>
    %4 = arith.mulf %1, %3 : vector<32x16xf32>
    %c0_3 = arith.constant 0 : index
    %c0_4 = arith.constant 0 : index
    %5 = vector.load %arg3[%c0_3, %c0_4] : memref<1x16xf32, #tpu.memory_space<vmem>>, vector<1x16xf32>
    %6 = vector.broadcast %5 : vector<1x16xf32> to vector<32x16xf32>
    %7 = arith.addf %4, %6 : vector<32x16xf32>
    %c0_5 = arith.constant 0 : index
    %c0_6 = arith.constant 0 : index
    %8 = vector.load %arg4[%c0_5, %c0_6] : memref<32x16xbf16, #tpu.memory_space<vmem>>, vector<32x16xbf16>
    %9 = arith.extf %8 : vector<32x16xbf16> to vector<32x16xf32>
    %10 = arith.addf %7, %9 : vector<32x16xf32>
    %cst = arith.constant 0.000000e+00 : f32
    %11 = vector.broadcast %cst : f32 to vector<32x16xf32>
    %12 = arith.maximumf %10, %11 : vector<32x16xf32>
    %13 = arith.truncf %12 : vector<32x16xf32> to vector<32x16xbf16>
    %c0_7 = arith.constant 0 : index
    %c0_8 = arith.constant 0 : index
    %14 = vector.load %arg5[%c0_7, %c0_8] : memref<32x16xbf16, #tpu.memory_space<vmem>>, vector<32x16xbf16>
    tpu.vector_store %arg5[%c0_7, %c0_8], %13 {strides = array<i32>} : memref<32x16xbf16, #tpu.memory_space<vmem>>, vector<32x16xbf16>,
    return
  }
  func.func @transform_0(%arg0: i32) -> (i32, i32) {
    %c0_i32 = arith.constant 0 : i32
    %c0_i32_0 = arith.constant 0 : i32
    return %arg0, %c0_i32 : i32, i32
  }
  func.func @transform_1(%arg0: i32) -> (i32, i32) {
    %c0_i32 = arith.constant 0 : i32
    %c0_i32_0 = arith.constant 0 : i32
    %c0_i32_1 = arith.constant 0 : i32
    return %c0_i32, %c0_i32_0 : i32, i32
  }
  func.func @transform_2(%arg0: i32) -> (i32, i32) {
    %c0_i32 = arith.constant 0 : i32
    %c0_i32_0 = arith.constant 0 : i32
    %c0_i32_1 = arith.constant 0 : i32
    return %c0_i32, %c0_i32_0 : i32, i32
  }
  func.func @transform_3(%arg0: i32) -> (i32, i32) {
    %c0_i32 = arith.constant 0 : i32
    %c0_i32_0 = arith.constant 0 : i32
    return %arg0, %c0_i32 : i32, i32
  }
  func.func @transform_4(%arg0: i32) -> (i32, i32) {
    %c0_i32 = arith.constant 0 : i32
    %c0_i32_0 = arith.constant 0 : i32
    return %arg0, %c0_i32 : i32, i32
  }
}

</mosaic_0001>

<llo_original>
// kernel: bottle_stack_forward.15
$region0: #{bottle_stack_forward.15}
  #allocation0 [shape = 'u32[]', space=smem, size = 0x4, offset = 0x4, fixed_abs, tag = 'smem constant byte address 0x4 - core index']
  #allocation1 [shape = 'u32[144,128]{1,0:T(1,128)}', space=vmem, size = 0x12000, scoped, tag = 'internal scratch']
  #allocation2 [shape = 'f32[128,128]{1,0:T(8,128)}', space=vmem, size = 0x10000, scoped, tag = 'scratch operand']
  %s0 = inlined_call_operand.vmem [shape: bf16[128,128], index: 0, kind: input, shape index: {}]
  %s1 = inlined_call_operand.vmem [shape: bf16[128,128], index: 1, kind: input, shape index: {}]
  %s2 = inlined_call_operand.vmem [shape: bf16[128,128], index: 2, kind: output, shape index: {0}]
  %s3 = inlined_call_operand.vmem [shape: f32[1,128], index: 3, kind: output, shape index: {1}]
  %s4 = inlined_call_operand.vmem [shape: f32[1,128], index: 4, kind: output, shape index: {2}]
  %5 = xla_tuple %s2, %s3, %s4
  %s6 = sld [smem:[#allocation0]]
  $region42: #{bottle_stack_forward.15} parent=0
    _
  %s8 = ssub.s32 1, %s6
  %s9 = scalar_select 0, %s8, %s6
  // Predicated region
  $region2: #{bottle_stack_forward.15} parent=0 // pred_check
    _
  $region3: #{bottle_stack_forward.15} parent=0 // pred_check_branch
    %11 = sbr.rel (0) target = $region5
  $region4: #{bottle_stack_forward.15} parent=0 // pred_region
    _
  $region5: #{bottle_stack_forward.15} parent=0 // pred_fallthru
    _
  // Predicated region
  $region6: #{bottle_stack_forward.15} parent=0 // pred_check
    _
  $region7: #{bottle_stack_forward.15} parent=0 // pred_check_branch
    %13 = sbr.rel (0) target = $region9
  $region8: #{bottle_stack_forward.15} parent=0 // pred_region
    _
  $region9: #{bottle_stack_forward.15} parent=0 // pred_fallthru
    _
  %p15 = scmp.eq.s32.totalorder 0, 0
  // Predicated region
  $region10: #{bottle_stack_forward.15} parent=0 // pred_check
    %p16 = pneg %p15
  $region11: #{bottle_stack_forward.15} parent=0 // pred_check_branch
    %18 = sbr.rel (%p16) target = $region13
  $region12: #{bottle_stack_forward.15} parent=0 // pred_region
    %19 = vst [vmem:[#allocation2] sm:$0xff] 0.0
    %20 = vst [vmem:[#allocation2 + $0x8] sm:$0xff] 0.0
    %21 = vst [vmem:[#allocation2 + $0x10] sm:$0xff] 0.0
    %22 = vst [vmem:[#allocation2 + $0x18] sm:$0xff] 0.0
    %23 = vst [vmem:[#allocation2 + $0x20] sm:$0xff] 0.0
    %24 = vst [vmem:[#allocation2 + $0x28] sm:$0xff] 0.0
    %25 = vst [vmem:[#allocation2 + $0x30] sm:$0xff] 0.0
    %26 = vst [vmem:[#allocation2 + $0x38] sm:$0xff] 0.0
    %27 = vst [vmem:[#allocation2 + $0x40] sm:$0xff] 0.0
    %28 = vst [vmem:[#allocation2 + $0x48] sm:$0xff] 0.0
    %29 = vst [vmem:[#allocation2 + $0x50] sm:$0xff] 0.0
    %30 = vst [vmem:[#allocation2 + $0x58] sm:$0xff] 0.0
    %31 = vst [vmem:[#allocation2 + $0x60] sm:$0xff] 0.0
    %32 = vst [vmem:[#allocation2 + $0x68] sm:$0xff] 0.0
    %33 = vst [vmem:[#allocation2 + $0x70] sm:$0xff] 0.0
    %34 = vst [vmem:[#allocation2 + $0x78] sm:$0xff] 0.0
  $region13: #{bottle_stack_forward.15} parent=0 // pred_fallthru
    _
  %v35 = vld [vmem:[%s0] sm:$0xf]
  %v36 = vld [vmem:[%s0 + $0x4] sm:$0xf]
  %v37 = vld [vmem:[%s0 + $0x8] sm:$0xf]
  %v38 = vld [vmem:[%s0 + $0xc] sm:$0xf]
  %v39 = vld [vmem:[%s0 + $0x10] sm:$0xf]
  %v40 = vld [vmem:[%s0 + $0x14] sm:$0xf]
  %v41 = vld [vmem:[%s0 + $0x18] sm:$0xf]
  %v42 = vld [vmem:[%s0 + $0x1c] sm:$0xf]
  %v43 = vld [vmem:[%s0 + $0x20] sm:$0xf]
  %v44 = vld [vmem:[%s0 + $0x24] sm:$0xf]
  %v45 = vld [vmem:[%s0 + $0x28] sm:$0xf]
  %v46 = vld [vmem:[%s0 + $0x2c] sm:$0xf]
  %v47 = vld [vmem:[%s0 + $0x30] sm:$0xf]
  %v48 = vld [vmem:[%s0 + $0x34] sm:$0xf]
  %v49 = vld [vmem:[%s0 + $0x38] sm:$0xf]
  %v50 = vld [vmem:[%s0 + $0x3c] sm:$0xf]
  %v51 = vld [vmem:[#allocation2] sm:$0xff]
  %v52 = vld [vmem:[#allocation2 + $0x8] sm:$0xff]
  %v53 = vld [vmem:[#allocation2 + $0x10] sm:$0xff]
  %v54 = vld [vmem:[#allocation2 + $0x18] sm:$0xff]
  %v55 = vld [vmem:[#allocation2 + $0x20] sm:$0xff]
  %v56 = vld [vmem:[#allocation2 + $0x28] sm:$0xff]
  %v57 = vld [vmem:[#allocation2 + $0x30] sm:$0xff]
  %v58 = vld [vmem:[#allocation2 + $0x38] sm:$0xff]
  %v59 = vld [vmem:[#allocation2 + $0x40] sm:$0xff]
  %v60 = vld [vmem:[#allocation2 + $0x48] sm:$0xff]
  %v61 = vld [vmem:[#allocation2 + $0x50] sm:$0xff]
  %v62 = vld [vmem:[#allocation2 + $0x58] sm:$0xff]
  %v63 = vld [vmem:[#allocation2 + $0x60] sm:$0xff]
  %v64 = vld [vmem:[#allocation2 + $0x68] sm:$0xff]
  %v65 = vld [vmem:[#allocation2 + $0x70] sm:$0xff]
  %v66 = vld [vmem:[#allocation2 + $0x78] sm:$0xff]
  %v67 = vld [vmem:[%s1] sm:$0xf]
  %v68 = vld [vmem:[%s1 + $0x4] sm:$0xf]
  %v69 = vld [vmem:[%s1 + $0x8] sm:$0xf]
  %v70 = vld [vmem:[%s1 + $0xc] sm:$0xf]
  %v71 = vld [vmem:[%s1 + $0x10] sm:$0xf]
  %v72 = vld [vmem:[%s1 + $0x14] sm:$0xf]
  %v73 = vld [vmem:[%s1 + $0x18] sm:$0xf]
  %v74 = vld [vmem:[%s1 + $0x1c] sm:$0xf]
  %v75 = vld [vmem:[%s1 + $0x20] sm:$0xf]
  %v76 = vld [vmem:[%s1 + $0x24] sm:$0xf]
  %v77 = vld [vmem:[%s1 + $0x28] sm:$0xf]
  %v78 = vld [vmem:[%s1 + $0x2c] sm:$0xf]
  %v79 = vld [vmem:[%s1 + $0x30] sm:$0xf]
  %v80 = vld [vmem:[%s1 + $0x34] sm:$0xf]
  %v81 = vld [vmem:[%s1 + $0x38] sm:$0xf]
  %v82 = vld [vmem:[%s1 + $0x3c] sm:$0xf]
  %v99 = vunpack.c.l.b16 %v35
  %v100 = vunpack.c.l.b16 %v36
  %v101 = vunpack.c.l.b16 %v37
  %v102 = vunpack.c.l.b16 %v38
  %v103 = vunpack.c.l.b16 %v39
  %v104 = vunpack.c.l.b16 %v40
  %v105 = vunpack.c.l.b16 %v41
  %v106 = vunpack.c.l.b16 %v42
  %v107 = vunpack.c.l.b16 %v43
  %v108 = vunpack.c.l.b16 %v44
  %v109 = vunpack.c.l.b16 %v45
  %v110 = vunpack.c.l.b16 %v46
  %v111 = vunpack.c.l.b16 %v47
  %v112 = vunpack.c.l.b16 %v48
  %v113 = vunpack.c.l.b16 %v49
  %v114 = vunpack.c.l.b16 %v50
  %v115 = vpack.c.b16 %v100, %v99
  %v116 = vpack.c.b16 %v102, %v101
  %v117 = vpack.c.b16 %v104, %v103
  %v118 = vpack.c.b16 %v106, %v105
  %v119 = vpack.c.b16 %v108, %v107
  %v120 = vpack.c.b16 %v110, %v109
  %v121 = vpack.c.b16 %v112, %v111
  %v122 = vpack.c.b16 %v114, %v113
  %v147 = vunpack.c.l.b16 %v67
  %v148 = vunpack.c.l.b16 %v68
  %v149 = vunpack.c.l.b16 %v69
  %v150 = vunpack.c.l.b16 %v70
  %v151 = vunpack.c.l.b16 %v71
  %v152 = vunpack.c.l.b16 %v72
  %v153 = vunpack.c.l.b16 %v73
  %v154 = vunpack.c.l.b16 %v74
  %v155 = vunpack.c.l.b16 %v75
  %v156 = vunpack.c.l.b16 %v76
  %v157 = vunpack.c.l.b16 %v77
  %v158 = vunpack.c.l.b16 %v78
  %v159 = vunpack.c.l.b16 %v79
  %v160 = vunpack.c.l.b16 %v80
  %v161 = vunpack.c.l.b16 %v81
  %v162 = vunpack.c.l.b16 %v82
  %v163 = vpack.c.b16 %v148, %v147
  %v164 = vpack.c.b16 %v150, %v149
  %v165 = vpack.c.b16 %v152, %v151
  %v166 = vpack.c.b16 %v154, %v153
  %v167 = vpack.c.b16 %v156, %v155
  %v168 = vpack.c.b16 %v158, %v157
  %v169 = vpack.c.b16 %v160, %v159
  %v170 = vpack.c.b16 %v162, %v161
  %179 = vmatprep.subr.bf16.mxu0 0
  %180 = vmatpush1.bf16.msra.mxu0 %v170
  %181 = vmatprep.subr.bf16.mxu0 0
  %182 = vmatpush1.bf16.msra.mxu0 %v169
  %183 = vmatprep.subr.bf16.mxu0 0
  %184 = vmatpush1.bf16.msra.mxu0 %v168
  %185 = vmatprep.subr.bf16.mxu0 0
  %186 = vmatpush1.bf16.msra.mxu0 %v167
  %187 = vmatprep.subr.bf16.mxu0 0
  %188 = vmatpush1.bf16.msra.mxu0 %v166
  %189 = vmatprep.subr.bf16.mxu0 0
  %190 = vmatpush1.bf16.msra.mxu0 %v165
  %191 = vmatprep.subr.bf16.mxu0 0
  %192 = vmatpush1.bf16.msra.mxu0 %v164
  %193 = vmatprep.subr.bf16.mxu0 0
  %194 = vmatpush1.bf16.msra.mxu0 %v163
  %195 = vmatprep.subr.bf16.mxu0 0
  %196 = vmatpush2.bf16.msra.mxu0 0
  %197 = vmatprep.subr.bf16.mxu0 0
  %198 = vmatpush2.bf16.msra.mxu0 0
  %199 = vmatprep.subr.bf16.mxu0 0
  %200 = vmatpush2.bf16.msra.mxu0 0
  %201 = vmatprep.subr.bf16.mxu0 0
  %202 = vmatpush2.bf16.msra.mxu0 0
  %203 = vmatprep.subr.bf16.mxu0 0
  %204 = vmatpush2.bf16.msra.mxu0 0
  %205 = vmatprep.subr.bf16.mxu0 0
  %206 = vmatpush2.bf16.msra.mxu0 0
  %207 = vmatprep.subr.bf16.mxu0 0
  %208 = vmatpush2.bf16.msra.mxu0 0
  %209 = vmatprep.subr.bf16.mxu0 0
  %210 = vmatpush2.bf16.msra.mxu0 0
  %211 = vmatprep.mubr.bf16.mxu0 0
  %212 = vmatmul.mubr.bf16.gmra.mxu0 %v115
  %v213 = vpop.f32.mrf.mxu0
  %v214 = vadd.f32 0.0, %v213
  %v215 = vpop.f32.mrf.mxu0
  %v216 = vpop.f32.mrf.mxu0
  %v217 = vadd.f32 0.0, %v216
  %v218 = vpop.f32.mrf.mxu0
  %219 = vmatprep.mubr.bf16.mxu0 0
  %220 = vmatmul.mubr.bf16.gmra.mxu0 %v116
  %v221 = vpop.f32.mrf.mxu0
  %v222 = vadd.f32 0.0, %v221
  %v223 = vpop.f32.mrf.mxu0
  %v224 = vpop.f32.mrf.mxu0
  %v225 = vadd.f32 0.0, %v224
  %v226 = vpop.f32.mrf.mxu0
  %227 = vmatprep.mubr.bf16.mxu0 0
  %228 = vmatmul.mubr.bf16.gmra.mxu0 %v117
  %v229 = vpop.f32.mrf.mxu0
  %v230 = vadd.f32 0.0, %v229
  %v231 = vpop.f32.mrf.mxu0
  %v232 = vpop.f32.mrf.mxu0
  %v233 = vadd.f32 0.0, %v232
  %v234 = vpop.f32.mrf.mxu0
  %235 = vmatprep.mubr.bf16.mxu0 0
  %236 = vmatmul.mubr.bf16.gmra.mxu0 %v118
  %v237 = vpop.f32.mrf.mxu0
  %v238 = vadd.f32 0.0, %v237
  %v239 = vpop.f32.mrf.mxu0
  %v240 = vpop.f32.mrf.mxu0
  %v241 = vadd.f32 0.0, %v240
  %v242 = vpop.f32.mrf.mxu0
  %243 = vmatprep.mubr.bf16.mxu0 0
  %244 = vmatmul.mubr.bf16.gmra.mxu0 %v119
  %v245 = vpop.f32.mrf.mxu0
  %v246 = vadd.f32 0.0, %v245
  %v247 = vpop.f32.mrf.mxu0
  %v248 = vpop.f32.mrf.mxu0
  %v249 = vadd.f32 0.0, %v248
  %v250 = vpop.f32.mrf.mxu0
  %251 = vmatprep.mubr.bf16.mxu0 0
  %252 = vmatmul.mubr.bf16.gmra.mxu0 %v120
  %v253 = vpop.f32.mrf.mxu0
  %v254 = vadd.f32 0.0, %v253
  %v255 = vpop.f32.mrf.mxu0
  %v256 = vpop.f32.mrf.mxu0
  %v257 = vadd.f32 0.0, %v256
  %v258 = vpop.f32.mrf.mxu0
  %259 = vmatprep.mubr.bf16.mxu0 0
  %260 = vmatmul.mubr.bf16.gmra.mxu0 %v121
  %v261 = vpop.f32.mrf.mxu0
  %v262 = vadd.f32 0.0, %v261
  %v263 = vpop.f32.mrf.mxu0
  %v264 = vpop.f32.mrf.mxu0
  %v265 = vadd.f32 0.0, %v264
  %v266 = vpop.f32.mrf.mxu0
  %267 = vmatprep.mubr.bf16.mxu0 0
  %268 = vmatmul.mubr.bf16.gmra.mxu0 %v122
  %v269 = vpop.f32.mrf.mxu0
  %v270 = vadd.f32 0.0, %v269
  %v271 = vpop.f32.mrf.mxu0
  %v272 = vpop.f32.mrf.mxu0
  %v273 = vadd.f32 0.0, %v272
  %v274 = vpop.f32.mrf.mxu0
  %275 = vdwg.mxu0
  %v276 = vadd.f32 %v51, %v214
  %v277 = vadd.f32 %v52, %v217
  %v278 = vadd.f32 %v53, %v222
  %v279 = vadd.f32 %v54, %v225
  %v280 = vadd.f32 %v55, %v230
  %v281 = vadd.f32 %v56, %v233
  %v282 = vadd.f32 %v57, %v238
  %v283 = vadd.f32 %v58, %v241
  %v284 = vadd.f32 %v59, %v246
  %v285 = vadd.f32 %v60, %v249
  %v286 = vadd.f32 %v61, %v254
  %v287 = vadd.f32 %v62, %v257
  %v288 = vadd.f32 %v63, %v262
  %v289 = vadd.f32 %v64, %v265
  %v290 = vadd.f32 %v65, %v270
  %v291 = vadd.f32 %v66, %v273
  %292 = vst [vmem:[#allocation2] sm:$0xff] %v276
  %293 = vst [vmem:[#allocation2 + $0x8] sm:$0xff] %v277
  %294 = vst [vmem:[#allocation2 + $0x10] sm:$0xff] %v278
  %295 = vst [vmem:[#allocation2 + $0x18] sm:$0xff] %v279
  %296 = vst [vmem:[#allocation2 + $0x20] sm:$0xff] %v280
  %297 = vst [vmem:[#allocation2 + $0x28] sm:$0xff] %v281
  %298 = vst [vmem:[#allocation2 + $0x30] sm:$0xff] %v282
  %299 = vst [vmem:[#allocation2 + $0x38] sm:$0xff] %v283
  %300 = vst [vmem:[#allocation2 + $0x40] sm:$0xff] %v284
  %301 = vst [vmem:[#allocation2 + $0x48] sm:$0xff] %v285
  %302 = vst [vmem:[#allocation2 + $0x50] sm:$0xff] %v286
  %303 = vst [vmem:[#allocation2 + $0x58] sm:$0xff] %v287
  %304 = vst [vmem:[#allocation2 + $0x60] sm:$0xff] %v288
  %305 = vst [vmem:[#allocation2 + $0x68] sm:$0xff] %v289
  %306 = vst [vmem:[#allocation2 + $0x70] sm:$0xff] %v290
  %307 = vst [vmem:[#allocation2 + $0x78] sm:$0xff] %v291
  // Predicated region
  $region14: #{bottle_stack_forward.15} parent=0 // pred_check
    %p308 = pneg %p15
  $region15: #{bottle_stack_forward.15} parent=0 // pred_check_branch
    %310 = sbr.rel (%p308) target = $region17
  $region16: #{bottle_stack_forward.15} parent=0 // pred_region
    %v311 = vld [vmem:[#allocation2] sm:$0xff]
    %v312 = vld [vmem:[#allocation2 + $0x8] sm:$0xff]
    %v313 = vld [vmem:[#allocation2 + $0x10] sm:$0xff]
    %v314 = vld [vmem:[#allocation2 + $0x18] sm:$0xff]
    %v315 = vld [vmem:[#allocation2 + $0x20] sm:$0xff]
    %v316 = vld [vmem:[#allocation2 + $0x28] sm:$0xff]
    %v317 = vld [vmem:[#allocation2 + $0x30] sm:$0xff]
    %v318 = vld [vmem:[#allocation2 + $0x38] sm:$0xff]
    %v319 = vld [vmem:[#allocation2 + $0x40] sm:$0xff]
    %v320 = vld [vmem:[#allocation2 + $0x48] sm:$0xff]
    %v321 = vld [vmem:[#allocation2 + $0x50] sm:$0xff]
    %v322 = vld [vmem:[#allocation2 + $0x58] sm:$0xff]
    %v323 = vld [vmem:[#allocation2 + $0x60] sm:$0xff]
    %v324 = vld [vmem:[#allocation2 + $0x68] sm:$0xff]
    %v325 = vld [vmem:[#allocation2 + $0x70] sm:$0xff]
    %v326 = vld [vmem:[#allocation2 + $0x78] sm:$0xff]
    %v327 = vpack.c.bf16 %v312, %v311
    %v328 = vpack.c.bf16 %v314, %v313
    %v329 = vpack.c.bf16 %v316, %v315
    %v330 = vpack.c.bf16 %v318, %v317
    %v331 = vpack.c.bf16 %v320, %v319
    %v332 = vpack.c.bf16 %v322, %v321
    %v333 = vpack.c.bf16 %v324, %v323
    %v334 = vpack.c.bf16 %v326, %v325
    %v343 = vunpack.c.l.b16 %v327
    %v344 = vunpack.c.h.b16 %v327
    %v345 = vunpack.c.l.b16 %v328
    %v346 = vunpack.c.h.b16 %v328
    %v347 = vunpack.c.l.b16 %v329
    %v348 = vunpack.c.h.b16 %v329
    %v349 = vunpack.c.l.b16 %v330
    %v350 = vunpack.c.h.b16 %v330
    %v351 = vunpack.c.l.b16 %v331
    %v352 = vunpack.c.h.b16 %v331
    %v353 = vunpack.c.l.b16 %v332
    %v354 = vunpack.c.h.b16 %v332
    %v355 = vunpack.c.l.b16 %v333
    %v356 = vunpack.c.h.b16 %v333
    %v357 = vunpack.c.l.b16 %v334
    %v358 = vunpack.c.h.b16 %v334
    %v359 = vpack.c.b16 %v343, %v343
    %v360 = vpack.c.b16 %v344, %v344
    %v361 = vpack.c.b16 %v345, %v345
    %v362 = vpack.c.b16 %v346, %v346
    %v363 = vpack.c.b16 %v347, %v347
    %v364 = vpack.c.b16 %v348, %v348
    %v365 = vpack.c.b16 %v349, %v349
    %v366 = vpack.c.b16 %v350, %v350
    %v367 = vpack.c.b16 %v351, %v351
    %v368 = vpack.c.b16 %v352, %v352
    %v369 = vpack.c.b16 %v353, %v353
    %v370 = vpack.c.b16 %v354, %v354
    %v371 = vpack.c.b16 %v355, %v355
    %v372 = vpack.c.b16 %v356, %v356
    %v373 = vpack.c.b16 %v357, %v357
    %v374 = vpack.c.b16 %v358, %v358
    %391 = vst [vmem:[%s2] sm:$0xf] %v359
    %392 = vst [vmem:[%s2 + $0x4] sm:$0xf] %v360
    %393 = vst [vmem:[%s2 + $0x8] sm:$0xf] %v361
    %394 = vst [vmem:[%s2 + $0xc] sm:$0xf] %v362
    %395 = vst [vmem:[%s2 + $0x10] sm:$0xf] %v363
    %396 = vst [vmem:[%s2 + $0x14] sm:$0xf] %v364
    %397 = vst [vmem:[%s2 + $0x18] sm:$0xf] %v365
    %398 = vst [vmem:[%s2 + $0x1c] sm:$0xf] %v366
    %399 = vst [vmem:[%s2 + $0x20] sm:$0xf] %v367
    %400 = vst [vmem:[%s2 + $0x24] sm:$0xf] %v368
    %401 = vst [vmem:[%s2 + $0x28] sm:$0xf] %v369
    %402 = vst [vmem:[%s2 + $0x2c] sm:$0xf] %v370
    %403 = vst [vmem:[%s2 + $0x30] sm:$0xf] %v371
    %404 = vst [vmem:[%s2 + $0x34] sm:$0xf] %v372
    %405 = vst [vmem:[%s2 + $0x38] sm:$0xf] %v373
    %406 = vst [vmem:[%s2 + $0x3c] sm:$0xf] %v374
    %v407 = vadd.f32 %v311, %v312
    %v408 = vadd.f32 %v407, %v313
    %v409 = vadd.f32 %v408, %v314
    %v410 = vadd.f32 %v409, %v315
    %v411 = vadd.f32 %v410, %v316
    %v412 = vadd.f32 %v411, %v317
    %v413 = vadd.f32 %v412, %v318
    %v414 = vadd.f32 %v413, %v319
    %v415 = vadd.f32 %v414, %v320
    %v416 = vadd.f32 %v415, %v321
    %v417 = vadd.f32 %v416, %v322
    %v418 = vadd.f32 %v417, %v323
    %v419 = vadd.f32 %v418, %v324
    %v420 = vadd.f32 %v419, %v325
    %v421 = vadd.f32 %v420, %v326
    %v422 = vrot.slane %v421, 4
    %v423 = vadd.f32 %v421, %v422
    %v424 = vrot.slane %v423, 2
    %v425 = vadd.f32 %v423, %v424
    %v426 = vrot.slane %v425, 1
    %v427 = vadd.f32 %v425, %v426
    %428 = vst [vmem:[%s3] sm:$0x1] %v427
    %v429 = vmul.f32 %v311, %v311
    %v430 = vmul.f32 %v312, %v312
    %v431 = vmul.f32 %v313, %v313
    %v432 = vmul.f32 %v314, %v314
    %v433 = vmul.f32 %v315, %v315
    %v434 = vmul.f32 %v316, %v316
    %v435 = vmul.f32 %v317, %v317
    %v436 = vmul.f32 %v318, %v318
    %v437 = vmul.f32 %v319, %v319
    %v438 = vmul.f32 %v320, %v320
    %v439 = vmul.f32 %v321, %v321
    %v440 = vmul.f32 %v322, %v322
    %v441 = vmul.f32 %v323, %v323
    %v442 = vmul.f32 %v324, %v324
    %v443 = vmul.f32 %v325, %v325
    %v444 = vmul.f32 %v326, %v326
    %v445 = vadd.f32 %v429, %v430
    %v446 = vadd.f32 %v445, %v431
    %v447 = vadd.f32 %v446, %v432
    %v448 = vadd.f32 %v447, %v433
    %v449 = vadd.f32 %v448, %v434
    %v450 = vadd.f32 %v449, %v435
    %v451 = vadd.f32 %v450, %v436
    %v452 = vadd.f32 %v451, %v437
    %v453 = vadd.f32 %v452, %v438
    %v454 = vadd.f32 %v453, %v439
    %v455 = vadd.f32 %v454, %v440
    %v456 = vadd.f32 %v455, %v441
    %v457 = vadd.f32 %v456, %v442
    %v458 = vadd.f32 %v457, %v443
    %v459 = vadd.f32 %v458, %v444
    %v460 = vrot.slane %v459, 4
    %v461 = vadd.f32 %v459, %v460
    %v462 = vrot.slane %v461, 2
    %v463 = vadd.f32 %v461, %v462
    %v464 = vrot.slane %v463, 1
    %v465 = vadd.f32 %v463, %v464
    %466 = vst [vmem:[%s4] sm:$0x1] %v465
  $region17: #{bottle_stack_forward.15} parent=0 // pred_fallthru
    _
  // Predicated region
  $region18: #{bottle_stack_forward.15} parent=0 // pred_check
    _
  $region19: #{bottle_stack_forward.15} parent=0 // pred_check_branch
    %468 = sbr.rel (0) target = $region21
  $region20: #{bottle_stack_forward.15} parent=0 // pred_region
    _
  $region21: #{bottle_stack_forward.15} parent=0 // pred_fallthru
    _
  // Predicated region
  $region22: #{bottle_stack_forward.15} parent=0 // pred_check
    _
  $region23: #{bottle_stack_forward.15} parent=0 // pred_check_branch
    %470 = sbr.rel (0) target = $region25
  $region24: #{bottle_stack_forward.15} parent=0 // pred_region
    _
  $region25: #{bottle_stack_forward.15} parent=0 // pred_fallthru
    _
  // Predicated region
  $region26: #{bottle_stack_forward.15} parent=0 // pred_check
    _
  $region27: #{bottle_stack_forward.15} parent=0 // pred_check_branch
    %472 = sbr.rel (0) target = $region29
  $region28: #{bottle_stack_forward.15} parent=0 // pred_region
    _
  $region29: #{bottle_stack_forward.15} parent=0 // pred_fallthru
    _
  // Predicated region
  $region30: #{bottle_stack_forward.15} parent=0 // pred_check
    _
  $region31: #{bottle_stack_forward.15} parent=0 // pred_check_branch
    %474 = sbr.rel (0) target = $region33
  $region32: #{bottle_stack_forward.15} parent=0 // pred_region
    _
  $region33: #{bottle_stack_forward.15} parent=0 // pred_fallthru
    _
  // Predicated region
  $region34: #{bottle_stack_forward.15} parent=0 // pred_check
    _
  $region35: #{bottle_stack_forward.15} parent=0 // pred_check_branch
    %476 = sbr.rel (0) target = $region37
  $region36: #{bottle_stack_forward.15} parent=0 // pred_region
    _
  $region37: #{bottle_stack_forward.15} parent=0 // pred_fallthru
    _
  // Predicated region
  $region38: #{bottle_stack_forward.15} parent=0 // pred_check
    _
  $region39: #{bottle_stack_forward.15} parent=0 // pred_check_branch
    %478 = sbr.rel (0) target = $region41
  $region40: #{bottle_stack_forward.15} parent=0 // pred_region
    _
  $region41: #{bottle_stack_forward.15} parent=0 // pred_fallthru
    _

// kernel: bottle_stack_forward.16
$region0: #{bottle_stack_forward.16}
  #allocation0 [shape = 'u32[]', space=smem, size = 0x4, offset = 0x4, fixed_abs, tag = 'smem constant byte address 0x4 - core index']
  #allocation1 [shape = 'u32[144,128]{1,0:T(1,128)}', space=vmem, size = 0x12000, scoped, tag = 'internal scratch']
  #allocation2 [shape = 'f32[128,128]{1,0:T(8,128)}', space=vmem, size = 0x10000, scoped, tag = 'scratch operand']
  %s0 = inlined_call_operand.vmem [shape: bf16[128,128], index: 0, kind: input, shape index: {}]
  %s1 = inlined_call_operand.vmem [shape: f32[1,128], index: 1, kind: input, shape index: {}]
  %s2 = inlined_call_operand.vmem [shape: f32[1,128], index: 2, kind: input, shape index: {}]
  %s3 = inlined_call_operand.vmem [shape: bf16[128,128], index: 3, kind: input, shape index: {}]
  %s4 = inlined_call_operand.vmem [shape: bf16[128,128], index: 4, kind: output, shape index: {}]
  %s5 = sld [smem:[#allocation0]]
  $region34: #{bottle_stack_forward.16} parent=0
    _
  %s7 = ssub.s32 1, %s5
  %s8 = scalar_select 0, %s7, %s5
  // Predicated region
  $region2: #{bottle_stack_forward.16} parent=0 // pred_check
    _
  $region3: #{bottle_stack_forward.16} parent=0 // pred_check_branch
    %10 = sbr.rel (0) target = $region5
  $region4: #{bottle_stack_forward.16} parent=0 // pred_region
    _
  $region5: #{bottle_stack_forward.16} parent=0 // pred_fallthru
    _
  // Predicated region
  $region6: #{bottle_stack_forward.16} parent=0 // pred_check
    _
  $region7: #{bottle_stack_forward.16} parent=0 // pred_check_branch
    %12 = sbr.rel (0) target = $region9
  $region8: #{bottle_stack_forward.16} parent=0 // pred_region
    _
  $region9: #{bottle_stack_forward.16} parent=0 // pred_fallthru
    _
  // Predicated region
  $region10: #{bottle_stack_forward.16} parent=0 // pred_check
    _
  $region11: #{bottle_stack_forward.16} parent=0 // pred_check_branch
    %14 = sbr.rel (0) target = $region13
  $region12: #{bottle_stack_forward.16} parent=0 // pred_region
    _
  $region13: #{bottle_stack_forward.16} parent=0 // pred_fallthru
    _
  // Predicated region
  $region14: #{bottle_stack_forward.16} parent=0 // pred_check
    _
  $region15: #{bottle_stack_forward.16} parent=0 // pred_check_branch
    %16 = sbr.rel (0) target = $region17
  $region16: #{bottle_stack_forward.16} parent=0 // pred_region
    _
  $region17: #{bottle_stack_forward.16} parent=0 // pred_fallthru
    _
  %p18 = scmp.eq.s32.totalorder 0, 0
  // Predicated region
  $region18: #{bottle_stack_forward.16} parent=0 // pred_check
    %p19 = pneg %p18
  $region19: #{bottle_stack_forward.16} parent=0 // pred_check_branch
    %21 = sbr.rel (%p19) target = $region21
  $region20: #{bottle_stack_forward.16} parent=0 // pred_region
    %22 = vst [vmem:[#allocation2] sm:$0xff] 0.0
    %23 = vst [vmem:[#allocation2 + $0x8] sm:$0xff] 0.0
    %24 = vst [vmem:[#allocation2 + $0x10] sm:$0xff] 0.0
    %25 = vst [vmem:[#allocation2 + $0x18] sm:$0xff] 0.0
    %26 = vst [vmem:[#allocation2 + $0x20] sm:$0xff] 0.0
    %27 = vst [vmem:[#allocation2 + $0x28] sm:$0xff] 0.0
    %28 = vst [vmem:[#allocation2 + $0x30] sm:$0xff] 0.0
    %29 = vst [vmem:[#allocation2 + $0x38] sm:$0xff] 0.0
    %30 = vst [vmem:[#allocation2 + $0x40] sm:$0xff] 0.0
    %31 = vst [vmem:[#allocation2 + $0x48] sm:$0xff] 0.0
    %32 = vst [vmem:[#allocation2 + $0x50] sm:$0xff] 0.0
    %33 = vst [vmem:[#allocation2 + $0x58] sm:$0xff] 0.0
    %34 = vst [vmem:[#allocation2 + $0x60] sm:$0xff] 0.0
    %35 = vst [vmem:[#allocation2 + $0x68] sm:$0xff] 0.0
    %36 = vst [vmem:[#allocation2 + $0x70] sm:$0xff] 0.0
    %37 = vst [vmem:[#allocation2 + $0x78] sm:$0xff] 0.0
  $region21: #{bottle_stack_forward.16} parent=0 // pred_fallthru
    _
  %v38 = vld [vmem:[%s0] sm:$0xf]
  %v39 = vld [vmem:[%s0 + $0x4] sm:$0xf]
  %v40 = vld [vmem:[%s0 + $0x8] sm:$0xf]
  %v41 = vld [vmem:[%s0 + $0xc] sm:$0xf]
  %v42 = vld [vmem:[%s0 + $0x10] sm:$0xf]
  %v43 = vld [vmem:[%s0 + $0x14] sm:$0xf]
  %v44 = vld [vmem:[%s0 + $0x18] sm:$0xf]
  %v45 = vld [vmem:[%s0 + $0x1c] sm:$0xf]
  %v46 = vld [vmem:[%s0 + $0x20] sm:$0xf]
  %v47 = vld [vmem:[%s0 + $0x24] sm:$0xf]
  %v48 = vld [vmem:[%s0 + $0x28] sm:$0xf]
  %v49 = vld [vmem:[%s0 + $0x2c] sm:$0xf]
  %v50 = vld [vmem:[%s0 + $0x30] sm:$0xf]
  %v51 = vld [vmem:[%s0 + $0x34] sm:$0xf]
  %v52 = vld [vmem:[%s0 + $0x38] sm:$0xf]
  %v53 = vld [vmem:[%s0 + $0x3c] sm:$0xf]
  %v54 = vunpack.c.l.bf16 %v38
  %v55 = vunpack.c.l.bf16 %v39
  %v56 = vunpack.c.l.bf16 %v40
  %v57 = vunpack.c.l.bf16 %v41
  %v58 = vunpack.c.l.bf16 %v42
  %v59 = vunpack.c.l.bf16 %v43
  %v60 = vunpack.c.l.bf16 %v44
  %v61 = vunpack.c.l.bf16 %v45
  %v62 = vunpack.c.l.bf16 %v46
  %v63 = vunpack.c.l.bf16 %v47
  %v64 = vunpack.c.l.bf16 %v48
  %v65 = vunpack.c.l.bf16 %v49
  %v66 = vunpack.c.l.bf16 %v50
  %v67 = vunpack.c.l.bf16 %v51
  %v68 = vunpack.c.l.bf16 %v52
  %v69 = vunpack.c.l.bf16 %v53
  %v70 = vld [vmem:[%s1] sm:$0x1]
  %v72 = vlaneseq
  %v73 = vshrl.u32 %v72, 7
  %v74 = vsub.s32 0, %v73
  %v75 = vrot.slane %v70, %v74
  %v77 = vmul.f32 %v54, %v75
  %v78 = vmul.f32 %v55, %v75
  %v79 = vmul.f32 %v56, %v75
  %v80 = vmul.f32 %v57, %v75
  %v81 = vmul.f32 %v58, %v75
  %v82 = vmul.f32 %v59, %v75
  %v83 = vmul.f32 %v60, %v75
  %v84 = vmul.f32 %v61, %v75
  %v85 = vmul.f32 %v62, %v75
  %v86 = vmul.f32 %v63, %v75
  %v87 = vmul.f32 %v64, %v75
  %v88 = vmul.f32 %v65, %v75
  %v89 = vmul.f32 %v66, %v75
  %v90 = vmul.f32 %v67, %v75
  %v91 = vmul.f32 %v68, %v75
  %v92 = vmul.f32 %v69, %v75
  %v93 = vld [vmem:[%s2] sm:$0x1]
  %v95 = vlaneseq
  %v96 = vshrl.u32 %v95, 7
  %v97 = vsub.s32 0, %v96
  %v98 = vrot.slane %v93, %v97
  %v100 = vadd.f32 %v77, %v98
  %v101 = vadd.f32 %v78, %v98
  %v102 = vadd.f32 %v79, %v98
  %v103 = vadd.f32 %v80, %v98
  %v104 = vadd.f32 %v81, %v98
  %v105 = vadd.f32 %v82, %v98
  %v106 = vadd.f32 %v83, %v98
  %v107 = vadd.f32 %v84, %v98
  %v108 = vadd.f32 %v85, %v98
  %v109 = vadd.f32 %v86, %v98
  %v110 = vadd.f32 %v87, %v98
  %v111 = vadd.f32 %v88, %v98
  %v112 = vadd.f32 %v89, %v98
  %v113 = vadd.f32 %v90, %v98
  %v114 = vadd.f32 %v91, %v98
  %v115 = vadd.f32 %v92, %v98
  %v116 = vmax.f32 %v100, 0.0
  %v117 = vmax.f32 %v101, 0.0
  %v118 = vmax.f32 %v102, 0.0
  %v119 = vmax.f32 %v103, 0.0
  %v120 = vmax.f32 %v104, 0.0
  %v121 = vmax.f32 %v105, 0.0
  %v122 = vmax.f32 %v106, 0.0
  %v123 = vmax.f32 %v107, 0.0
  %v124 = vmax.f32 %v108, 0.0
  %v125 = vmax.f32 %v109, 0.0
  %v126 = vmax.f32 %v110, 0.0
  %v127 = vmax.f32 %v111, 0.0
  %v128 = vmax.f32 %v112, 0.0
  %v129 = vmax.f32 %v113, 0.0
  %v130 = vmax.f32 %v114, 0.0
  %v131 = vmax.f32 %v115, 0.0
  %v132 = vpack.c.bf16 %v117, %v116
  %v133 = vpack.c.bf16 %v119, %v118
  %v134 = vpack.c.bf16 %v121, %v120
  %v135 = vpack.c.bf16 %v123, %v122
  %v136 = vpack.c.bf16 %v125, %v124
  %v137 = vpack.c.bf16 %v127, %v126
  %v138 = vpack.c.bf16 %v129, %v128
  %v139 = vpack.c.bf16 %v131, %v130
  %v140 = vld [vmem:[#allocation2] sm:$0xff]
  %v141 = vld [vmem:[#allocation2 + $0x8] sm:$0xff]
  %v142 = vld [vmem:[#allocation2 + $0x10] sm:$0xff]
  %v143 = vld [vmem:[#allocation2 + $0x18] sm:$0xff]
  %v144 = vld [vmem:[#allocation2 + $0x20] sm:$0xff]
  %v145 = vld [vmem:[#allocation2 + $0x28] sm:$0xff]
  %v146 = vld [vmem:[#allocation2 + $0x30] sm:$0xff]
  %v147 = vld [vmem:[#allocation2 + $0x38] sm:$0xff]
  %v148 = vld [vmem:[#allocation2 + $0x40] sm:$0xff]
  %v149 = vld [vmem:[#allocation2 + $0x48] sm:$0xff]
  %v150 = vld [vmem:[#allocation2 + $0x50] sm:$0xff]
  %v151 = vld [vmem:[#allocation2 + $0x58] sm:$0xff]
  %v152 = vld [vmem:[#allocation2 + $0x60] sm:$0xff]
  %v153 = vld [vmem:[#allocation2 + $0x68] sm:$0xff]
  %v154 = vld [vmem:[#allocation2 + $0x70] sm:$0xff]
  %v155 = vld [vmem:[#allocation2 + $0x78] sm:$0xff]
  %v156 = vld [vmem:[%s3] sm:$0xf]
  %v157 = vld [vmem:[%s3 + $0x4] sm:$0xf]
  %v158 = vld [vmem:[%s3 + $0x8] sm:$0xf]
  %v159 = vld [vmem:[%s3 + $0xc] sm:$0xf]
  %v160 = vld [vmem:[%s3 + $0x10] sm:$0xf]
  %v161 = vld [vmem:[%s3 + $0x14] sm:$0xf]
  %v162 = vld [vmem:[%s3 + $0x18] sm:$0xf]
  %v163 = vld [vmem:[%s3 + $0x1c] sm:$0xf]
  %v164 = vld [vmem:[%s3 + $0x20] sm:$0xf]
  %v165 = vld [vmem:[%s3 + $0x24] sm:$0xf]
  %v166 = vld [vmem:[%s3 + $0x28] sm:$0xf]
  %v167 = vld [vmem:[%s3 + $0x2c] sm:$0xf]
  %v168 = vld [vmem:[%s3 + $0x30] sm:$0xf]
  %v169 = vld [vmem:[%s3 + $0x34] sm:$0xf]
  %v170 = vld [vmem:[%s3 + $0x38] sm:$0xf]
  %v171 = vld [vmem:[%s3 + $0x3c] sm:$0xf]
  %v188 = vunpack.c.l.b16 %v156
  %v189 = vunpack.c.l.b16 %v157
  %v190 = vunpack.c.l.b16 %v158
  %v191 = vunpack.c.l.b16 %v159
  %v192 = vunpack.c.l.b16 %v160
  %v193 = vunpack.c.l.b16 %v161
  %v194 = vunpack.c.l.b16 %v162
  %v195 = vunpack.c.l.b16 %v163
  %v196 = vunpack.c.l.b16 %v164
  %v197 = vunpack.c.l.b16 %v165
  %v198 = vunpack.c.l.b16 %v166
  %v199 = vunpack.c.l.b16 %v167
  %v200 = vunpack.c.l.b16 %v168
  %v201 = vunpack.c.l.b16 %v169
  %v202 = vunpack.c.l.b16 %v170
  %v203 = vunpack.c.l.b16 %v171
  %v204 = vpack.c.b16 %v189, %v188
  %v205 = vpack.c.b16 %v191, %v190
  %v206 = vpack.c.b16 %v193, %v192
  %v207 = vpack.c.b16 %v195, %v194
  %v208 = vpack.c.b16 %v197, %v196
  %v209 = vpack.c.b16 %v199, %v198
  %v210 = vpack.c.b16 %v201, %v200
  %v211 = vpack.c.b16 %v203, %v202
  %220 = vmatprep.subr.bf16.mxu0 0
  %221 = vmatpush1.bf16.msra.mxu0 %v211
  %222 = vmatprep.subr.bf16.mxu0 0
  %223 = vmatpush1.bf16.msra.mxu0 %v210
  %224 = vmatprep.subr.bf16.mxu0 0
  %225 = vmatpush1.bf16.msra.mxu0 %v209
  %226 = vmatprep.subr.bf16.mxu0 0
  %227 = vmatpush1.bf16.msra.mxu0 %v208
  %228 = vmatprep.subr.bf16.mxu0 0
  %229 = vmatpush1.bf16.msra.mxu0 %v207
  %230 = vmatprep.subr.bf16.mxu0 0
  %231 = vmatpush1.bf16.msra.mxu0 %v206
  %232 = vmatprep.subr.bf16.mxu0 0
  %233 = vmatpush1.bf16.msra.mxu0 %v205
  %234 = vmatprep.subr.bf16.mxu0 0
  %235 = vmatpush1.bf16.msra.mxu0 %v204
  %236 = vmatprep.subr.bf16.mxu0 0
  %237 = vmatpush2.bf16.msra.mxu0 0
  %238 = vmatprep.subr.bf16.mxu0 0
  %239 = vmatpush2.bf16.msra.mxu0 0
  %240 = vmatprep.subr.bf16.mxu0 0
  %241 = vmatpush2.bf16.msra.mxu0 0
  %242 = vmatprep.subr.bf16.mxu0 0
  %243 = vmatpush2.bf16.msra.mxu0 0
  %244 = vmatprep.subr.bf16.mxu0 0
  %245 = vmatpush2.bf16.msra.mxu0 0
  %246 = vmatprep.subr.bf16.mxu0 0
  %247 = vmatpush2.bf16.msra.mxu0 0
  %248 = vmatprep.subr.bf16.mxu0 0
  %249 = vmatpush2.bf16.msra.mxu0 0
  %250 = vmatprep.subr.bf16.mxu0 0
  %251 = vmatpush2.bf16.msra.mxu0 0
  %252 = vmatprep.mubr.bf16.mxu0 0
  %253 = vmatmul.mubr.bf16.gmra.mxu0 %v132
  %v254 = vpop.f32.mrf.mxu0
  %v255 = vadd.f32 0.0, %v254
  %v256 = vpop.f32.mrf.mxu0
  %v257 = vpop.f32.mrf.mxu0
  %v258 = vadd.f32 0.0, %v257
  %v259 = vpop.f32.mrf.mxu0
  %260 = vmatprep.mubr.bf16.mxu0 0
  %261 = vmatmul.mubr.bf16.gmra.mxu0 %v133
  %v262 = vpop.f32.mrf.mxu0
  %v263 = vadd.f32 0.0, %v262
  %v264 = vpop.f32.mrf.mxu0
  %v265 = vpop.f32.mrf.mxu0
  %v266 = vadd.f32 0.0, %v265
  %v267 = vpop.f32.mrf.mxu0
  %268 = vmatprep.mubr.bf16.mxu0 0
  %269 = vmatmul.mubr.bf16.gmra.mxu0 %v134
  %v270 = vpop.f32.mrf.mxu0
  %v271 = vadd.f32 0.0, %v270
  %v272 = vpop.f32.mrf.mxu0
  %v273 = vpop.f32.mrf.mxu0
  %v274 = vadd.f32 0.0, %v273
  %v275 = vpop.f32.mrf.mxu0
  %276 = vmatprep.mubr.bf16.mxu0 0
  %277 = vmatmul.mubr.bf16.gmra.mxu0 %v135
  %v278 = vpop.f32.mrf.mxu0
  %v279 = vadd.f32 0.0, %v278
  %v280 = vpop.f32.mrf.mxu0
  %v281 = vpop.f32.mrf.mxu0
  %v282 = vadd.f32 0.0, %v281
  %v283 = vpop.f32.mrf.mxu0
  %284 = vmatprep.mubr.bf16.mxu0 0
  %285 = vmatmul.mubr.bf16.gmra.mxu0 %v136
  %v286 = vpop.f32.mrf.mxu0
  %v287 = vadd.f32 0.0, %v286
  %v288 = vpop.f32.mrf.mxu0
  %v289 = vpop.f32.mrf.mxu0
  %v290 = vadd.f32 0.0, %v289
  %v291 = vpop.f32.mrf.mxu0
  %292 = vmatprep.mubr.bf16.mxu0 0
  %293 = vmatmul.mubr.bf16.gmra.mxu0 %v137
  %v294 = vpop.f32.mrf.mxu0
  %v295 = vadd.f32 0.0, %v294
  %v296 = vpop.f32.mrf.mxu0
  %v297 = vpop.f32.mrf.mxu0
  %v298 = vadd.f32 0.0, %v297
  %v299 = vpop.f32.mrf.mxu0
  %300 = vmatprep.mubr.bf16.mxu0 0
  %301 = vmatmul.mubr.bf16.gmra.mxu0 %v138
  %v302 = vpop.f32.mrf.mxu0
  %v303 = vadd.f32 0.0, %v302
  %v304 = vpop.f32.mrf.mxu0
  %v305 = vpop.f32.mrf.mxu0
  %v306 = vadd.f32 0.0, %v305
  %v307 = vpop.f32.mrf.mxu0
  %308 = vmatprep.mubr.bf16.mxu0 0
  %309 = vmatmul.mubr.bf16.gmra.mxu0 %v139
  %v310 = vpop.f32.mrf.mxu0
  %v311 = vadd.f32 0.0, %v310
  %v312 = vpop.f32.mrf.mxu0
  %v313 = vpop.f32.mrf.mxu0
  %v314 = vadd.f32 0.0, %v313
  %v315 = vpop.f32.mrf.mxu0
  %316 = vdwg.mxu0
  %v317 = vadd.f32 %v140, %v255
  %v318 = vadd.f32 %v141, %v258
  %v319 = vadd.f32 %v142, %v263
  %v320 = vadd.f32 %v143, %v266
  %v321 = vadd.f32 %v144, %v271
  %v322 = vadd.f32 %v145, %v274
  %v323 = vadd.f32 %v146, %v279
  %v324 = vadd.f32 %v147, %v282
  %v325 = vadd.f32 %v148, %v287
  %v326 = vadd.f32 %v149, %v290
  %v327 = vadd.f32 %v150, %v295
  %v328 = vadd.f32 %v151, %v298
  %v329 = vadd.f32 %v152, %v303
  %v330 = vadd.f32 %v153, %v306
  %v331 = vadd.f32 %v154, %v311
  %v332 = vadd.f32 %v155, %v314
  %333 = vst [vmem:[#allocation2] sm:$0xff] %v317
  %334 = vst [vmem:[#allocation2 + $0x8] sm:$0xff] %v318
  %335 = vst [vmem:[#allocation2 + $0x10] sm:$0xff] %v319
  %336 = vst [vmem:[#allocation2 + $0x18] sm:$0xff] %v320
  %337 = vst [vmem:[#allocation2 + $0x20] sm:$0xff] %v321
  %338 = vst [vmem:[#allocation2 + $0x28] sm:$0xff] %v322
  %339 = vst [vmem:[#allocation2 + $0x30] sm:$0xff] %v323
  %340 = vst [vmem:[#allocation2 + $0x38] sm:$0xff] %v324
  %341 = vst [vmem:[#allocation2 + $0x40] sm:$0xff] %v325
  %342 = vst [vmem:[#allocation2 + $0x48] sm:$0xff] %v326
  %343 = vst [vmem:[#allocation2 + $0x50] sm:$0xff] %v327
  %344 = vst [vmem:[#allocation2 + $0x58] sm:$0xff] %v328
  %345 = vst [vmem:[#allocation2 + $0x60] sm:$0xff] %v329
  %346 = vst [vmem:[#allocation2 + $0x68] sm:$0xff] %v330
  %347 = vst [vmem:[#allocation2 + $0x70] sm:$0xff] %v331
  %348 = vst [vmem:[#allocation2 + $0x78] sm:$0xff] %v332
  // Predicated region
  $region22: #{bottle_stack_forward.16} parent=0 // pred_check
    %p349 = pneg %p18
  $region23: #{bottle_stack_forward.16} parent=0 // pred_check_branch
    %351 = sbr.rel (%p349) target = $region25
  $region24: #{bottle_stack_forward.16} parent=0 // pred_region
    %v352 = vld [vmem:[#allocation2] sm:$0xff]
    %v353 = vld [vmem:[#allocation2 + $0x8] sm:$0xff]
    %v354 = vld [vmem:[#allocation2 + $0x10] sm:$0xff]
    %v355 = vld [vmem:[#allocation2 + $0x18] sm:$0xff]
    %v356 = vld [vmem:[#allocation2 + $0x20] sm:$0xff]
    %v357 = vld [vmem:[#allocation2 + $0x28] sm:$0xff]
    %v358 = vld [vmem:[#allocation2 + $0x30] sm:$0xff]
    %v359 = vld [vmem:[#allocation2 + $0x38] sm:$0xff]
    %v360 = vld [vmem:[#allocation2 + $0x40] sm:$0xff]
    %v361 = vld [vmem:[#allocation2 + $0x48] sm:$0xff]
    %v362 = vld [vmem:[#allocation2 + $0x50] sm:$0xff]
    %v363 = vld [vmem:[#allocation2 + $0x58] sm:$0xff]
    %v364 = vld [vmem:[#allocation2 + $0x60] sm:$0xff]
    %v365 = vld [vmem:[#allocation2 + $0x68] sm:$0xff]
    %v366 = vld [vmem:[#allocation2 + $0x70] sm:$0xff]
    %v367 = vld [vmem:[#allocation2 + $0x78] sm:$0xff]
    %v368 = vpack.c.bf16 %v353, %v352
    %v369 = vpack.c.bf16 %v355, %v354
    %v370 = vpack.c.bf16 %v357, %v356
    %v371 = vpack.c.bf16 %v359, %v358
    %v372 = vpack.c.bf16 %v361, %v360
    %v373 = vpack.c.bf16 %v363, %v362
    %v374 = vpack.c.bf16 %v365, %v364
    %v375 = vpack.c.bf16 %v367, %v366
    %v384 = vunpack.c.l.b16 %v368
    %v385 = vunpack.c.h.b16 %v368
    %v386 = vunpack.c.l.b16 %v369
    %v387 = vunpack.c.h.b16 %v369
    %v388 = vunpack.c.l.b16 %v370
    %v389 = vunpack.c.h.b16 %v370
    %v390 = vunpack.c.l.b16 %v371
    %v391 = vunpack.c.h.b16 %v371
    %v392 = vunpack.c.l.b16 %v372
    %v393 = vunpack.c.h.b16 %v372
    %v394 = vunpack.c.l.b16 %v373
    %v395 = vunpack.c.h.b16 %v373
    %v396 = vunpack.c.l.b16 %v374
    %v397 = vunpack.c.h.b16 %v374
    %v398 = vunpack.c.l.b16 %v375
    %v399 = vunpack.c.h.b16 %v375
    %v400 = vpack.c.b16 %v384, %v384
    %v401 = vpack.c.b16 %v385, %v385
    %v402 = vpack.c.b16 %v386, %v386
    %v403 = vpack.c.b16 %v387, %v387
    %v404 = vpack.c.b16 %v388, %v388
    %v405 = vpack.c.b16 %v389, %v389
    %v406 = vpack.c.b16 %v390, %v390
    %v407 = vpack.c.b16 %v391, %v391
    %v408 = vpack.c.b16 %v392, %v392
    %v409 = vpack.c.b16 %v393, %v393
    %v410 = vpack.c.b16 %v394, %v394
    %v411 = vpack.c.b16 %v395, %v395
    %v412 = vpack.c.b16 %v396, %v396
    %v413 = vpack.c.b16 %v397, %v397
    %v414 = vpack.c.b16 %v398, %v398
    %v415 = vpack.c.b16 %v399, %v399
    %432 = vst [vmem:[%s4] sm:$0xf] %v400
    %433 = vst [vmem:[%s4 + $0x4] sm:$0xf] %v401
    %434 = vst [vmem:[%s4 + $0x8] sm:$0xf] %v402
    %435 = vst [vmem:[%s4 + $0xc] sm:$0xf] %v403
    %436 = vst [vmem:[%s4 + $0x10] sm:$0xf] %v404
    %437 = vst [vmem:[%s4 + $0x14] sm:$0xf] %v405
    %438 = vst [vmem:[%s4 + $0x18] sm:$0xf] %v406
    %439 = vst [vmem:[%s4 + $0x1c] sm:$0xf] %v407
    %440 = vst [vmem:[%s4 + $0x20] sm:$0xf] %v408
    %441 = vst [vmem:[%s4 + $0x24] sm:$0xf] %v409
    %442 = vst [vmem:[%s4 + $0x28] sm:$0xf] %v410
    %443 = vst [vmem:[%s4 + $0x2c] sm:$0xf] %v411
    %444 = vst [vmem:[%s4 + $0x30] sm:$0xf] %v412
    %445 = vst [vmem:[%s4 + $0x34] sm:$0xf] %v413
    %446 = vst [vmem:[%s4 + $0x38] sm:$0xf] %v414
    %447 = vst [vmem:[%s4 + $0x3c] sm:$0xf] %v415
  $region25: #{bottle_stack_forward.16} parent=0 // pred_fallthru
    _
  // Predicated region
  $region26: #{bottle_stack_forward.16} parent=0 // pred_check
    _
  $region27: #{bottle_stack_forward.16} parent=0 // pred_check_branch
    %449 = sbr.rel (0) target = $region29
  $region28: #{bottle_stack_forward.16} parent=0 // pred_region
    _
  $region29: #{bottle_stack_forward.16} parent=0 // pred_fallthru
    _
  // Predicated region
  $region30: #{bottle_stack_forward.16} parent=0 // pred_check
    _
  $region31: #{bottle_stack_forward.16} parent=0 // pred_check_branch
    %451 = sbr.rel (0) target = $region33
  $region32: #{bottle_stack_forward.16} parent=0 // pred_region
    _
  $region33: #{bottle_stack_forward.16} parent=0 // pred_fallthru
    _

// kernel: bottle_stack_forward.18
$region0: #{bottle_stack_forward.18}
  #allocation0 [shape = 'u32[]', space=smem, size = 0x4, offset = 0x4, fixed_abs, tag = 'smem constant byte address 0x4 - core index']
  #allocation1 [shape = 'u32[144,128]{1,0:T(1,128)}', space=vmem, size = 0x12000, scoped, tag = 'internal scratch']
  #allocation2 [shape = 'f32[128,128]{1,0:T(8,128)}', space=vmem, size = 0x10000, scoped, tag = 'scratch operand']
  %s0 = inlined_call_operand.vmem [shape: bf16[128,128], index: 0, kind: input, shape index: {}]
  %s1 = inlined_call_operand.vmem [shape: bf16[128,128], index: 1, kind: input, shape index: {}]
  %s2 = inlined_call_operand.vmem [shape: bf16[128,128], index: 2, kind: output, shape index: {}]
  %s3 = sld [smem:[#allocation0]]
  $region26: #{bottle_stack_forward.18} parent=0
    _
  %s5 = ssub.s32 1, %s3
  %s6 = scalar_select 0, %s5, %s3
  // Predicated region
  $region2: #{bottle_stack_forward.18} parent=0 // pred_check
    _
  $region3: #{bottle_stack_forward.18} parent=0 // pred_check_branch
    %8 = sbr.rel (0) target = $region5
  $region4: #{bottle_stack_forward.18} parent=0 // pred_region
    _
  $region5: #{bottle_stack_forward.18} parent=0 // pred_fallthru
    _
  // Predicated region
  $region6: #{bottle_stack_forward.18} parent=0 // pred_check
    _
  $region7: #{bottle_stack_forward.18} parent=0 // pred_check_branch
    %10 = sbr.rel (0) target = $region9
  $region8: #{bottle_stack_forward.18} parent=0 // pred_region
    _
  $region9: #{bottle_stack_forward.18} parent=0 // pred_fallthru
    _
  %p12 = scmp.eq.s32.totalorder 0, 0
  // Predicated region
  $region10: #{bottle_stack_forward.18} parent=0 // pred_check
    %p13 = pneg %p12
  $region11: #{bottle_stack_forward.18} parent=0 // pred_check_branch
    %15 = sbr.rel (%p13) target = $region13
  $region12: #{bottle_stack_forward.18} parent=0 // pred_region
    %16 = vst [vmem:[#allocation2] sm:$0xff] 0.0
    %17 = vst [vmem:[#allocation2 + $0x8] sm:$0xff] 0.0
    %18 = vst [vmem:[#allocation2 + $0x10] sm:$0xff] 0.0
    %19 = vst [vmem:[#allocation2 + $0x18] sm:$0xff] 0.0
    %20 = vst [vmem:[#allocation2 + $0x20] sm:$0xff] 0.0
    %21 = vst [vmem:[#allocation2 + $0x28] sm:$0xff] 0.0
    %22 = vst [vmem:[#allocation2 + $0x30] sm:$0xff] 0.0
    %23 = vst [vmem:[#allocation2 + $0x38] sm:$0xff] 0.0
    %24 = vst [vmem:[#allocation2 + $0x40] sm:$0xff] 0.0
    %25 = vst [vmem:[#allocation2 + $0x48] sm:$0xff] 0.0
    %26 = vst [vmem:[#allocation2 + $0x50] sm:$0xff] 0.0
    %27 = vst [vmem:[#allocation2 + $0x58] sm:$0xff] 0.0
    %28 = vst [vmem:[#allocation2 + $0x60] sm:$0xff] 0.0
    %29 = vst [vmem:[#allocation2 + $0x68] sm:$0xff] 0.0
    %30 = vst [vmem:[#allocation2 + $0x70] sm:$0xff] 0.0
    %31 = vst [vmem:[#allocation2 + $0x78] sm:$0xff] 0.0
  $region13: #{bottle_stack_forward.18} parent=0 // pred_fallthru
    _
  %v32 = vld [vmem:[%s0] sm:$0xf]
  %v33 = vld [vmem:[%s0 + $0x4] sm:$0xf]
  %v34 = vld [vmem:[%s0 + $0x8] sm:$0xf]
  %v35 = vld [vmem:[%s0 + $0xc] sm:$0xf]
  %v36 = vld [vmem:[%s0 + $0x10] sm:$0xf]
  %v37 = vld [vmem:[%s0 + $0x14] sm:$0xf]
  %v38 = vld [vmem:[%s0 + $0x18] sm:$0xf]
  %v39 = vld [vmem:[%s0 + $0x1c] sm:$0xf]
  %v40 = vld [vmem:[%s0 + $0x20] sm:$0xf]
  %v41 = vld [vmem:[%s0 + $0x24] sm:$0xf]
  %v42 = vld [vmem:[%s0 + $0x28] sm:$0xf]
  %v43 = vld [vmem:[%s0 + $0x2c] sm:$0xf]
  %v44 = vld [vmem:[%s0 + $0x30] sm:$0xf]
  %v45 = vld [vmem:[%s0 + $0x34] sm:$0xf]
  %v46 = vld [vmem:[%s0 + $0x38] sm:$0xf]
  %v47 = vld [vmem:[%s0 + $0x3c] sm:$0xf]
  %v48 = vld [vmem:[#allocation2] sm:$0xff]
  %v49 = vld [vmem:[#allocation2 + $0x8] sm:$0xff]
  %v50 = vld [vmem:[#allocation2 + $0x10] sm:$0xff]
  %v51 = vld [vmem:[#allocation2 + $0x18] sm:$0xff]
  %v52 = vld [vmem:[#allocation2 + $0x20] sm:$0xff]
  %v53 = vld [vmem:[#allocation2 + $0x28] sm:$0xff]
  %v54 = vld [vmem:[#allocation2 + $0x30] sm:$0xff]
  %v55 = vld [vmem:[#allocation2 + $0x38] sm:$0xff]
  %v56 = vld [vmem:[#allocation2 + $0x40] sm:$0xff]
  %v57 = vld [vmem:[#allocation2 + $0x48] sm:$0xff]
  %v58 = vld [vmem:[#allocation2 + $0x50] sm:$0xff]
  %v59 = vld [vmem:[#allocation2 + $0x58] sm:$0xff]
  %v60 = vld [vmem:[#allocation2 + $0x60] sm:$0xff]
  %v61 = vld [vmem:[#allocation2 + $0x68] sm:$0xff]
  %v62 = vld [vmem:[#allocation2 + $0x70] sm:$0xff]
  %v63 = vld [vmem:[#allocation2 + $0x78] sm:$0xff]
  %v64 = vld [vmem:[%s1] sm:$0xf]
  %v65 = vld [vmem:[%s1 + $0x4] sm:$0xf]
  %v66 = vld [vmem:[%s1 + $0x8] sm:$0xf]
  %v67 = vld [vmem:[%s1 + $0xc] sm:$0xf]
  %v68 = vld [vmem:[%s1 + $0x10] sm:$0xf]
  %v69 = vld [vmem:[%s1 + $0x14] sm:$0xf]
  %v70 = vld [vmem:[%s1 + $0x18] sm:$0xf]
  %v71 = vld [vmem:[%s1 + $0x1c] sm:$0xf]
  %v72 = vld [vmem:[%s1 + $0x20] sm:$0xf]
  %v73 = vld [vmem:[%s1 + $0x24] sm:$0xf]
  %v74 = vld [vmem:[%s1 + $0x28] sm:$0xf]
  %v75 = vld [vmem:[%s1 + $0x2c] sm:$0xf]
  %v76 = vld [vmem:[%s1 + $0x30] sm:$0xf]
  %v77 = vld [vmem:[%s1 + $0x34] sm:$0xf]
  %v78 = vld [vmem:[%s1 + $0x38] sm:$0xf]
  %v79 = vld [vmem:[%s1 + $0x3c] sm:$0xf]
  %v96 = vunpack.c.l.b16 %v32
  %v97 = vunpack.c.l.b16 %v33
  %v98 = vunpack.c.l.b16 %v34
  %v99 = vunpack.c.l.b16 %v35
  %v100 = vunpack.c.l.b16 %v36
  %v101 = vunpack.c.l.b16 %v37
  %v102 = vunpack.c.l.b16 %v38
  %v103 = vunpack.c.l.b16 %v39
  %v104 = vunpack.c.l.b16 %v40
  %v105 = vunpack.c.l.b16 %v41
  %v106 = vunpack.c.l.b16 %v42
  %v107 = vunpack.c.l.b16 %v43
  %v108 = vunpack.c.l.b16 %v44
  %v109 = vunpack.c.l.b16 %v45
  %v110 = vunpack.c.l.b16 %v46
  %v111 = vunpack.c.l.b16 %v47
  %v112 = vpack.c.b16 %v97, %v96
  %v113 = vpack.c.b16 %v99, %v98
  %v114 = vpack.c.b16 %v101, %v100
  %v115 = vpack.c.b16 %v103, %v102
  %v116 = vpack.c.b16 %v105, %v104
  %v117 = vpack.c.b16 %v107, %v106
  %v118 = vpack.c.b16 %v109, %v108
  %v119 = vpack.c.b16 %v111, %v110
  %v144 = vunpack.c.l.b16 %v64
  %v145 = vunpack.c.l.b16 %v65
  %v146 = vunpack.c.l.b16 %v66
  %v147 = vunpack.c.l.b16 %v67
  %v148 = vunpack.c.l.b16 %v68
  %v149 = vunpack.c.l.b16 %v69
  %v150 = vunpack.c.l.b16 %v70
  %v151 = vunpack.c.l.b16 %v71
  %v152 = vunpack.c.l.b16 %v72
  %v153 = vunpack.c.l.b16 %v73
  %v154 = vunpack.c.l.b16 %v74
  %v155 = vunpack.c.l.b16 %v75
  %v156 = vunpack.c.l.b16 %v76
  %v157 = vunpack.c.l.b16 %v77
  %v158 = vunpack.c.l.b16 %v78
  %v159 = vunpack.c.l.b16 %v79
  %v160 = vpack.c.b16 %v145, %v144
  %v161 = vpack.c.b16 %v147, %v146
  %v162 = vpack.c.b16 %v149, %v148
  %v163 = vpack.c.b16 %v151, %v150
  %v164 = vpack.c.b16 %v153, %v152
  %v165 = vpack.c.b16 %v155, %v154
  %v166 = vpack.c.b16 %v157, %v156
  %v167 = vpack.c.b16 %v159, %v158
  %176 = vmatprep.subr.bf16.mxu0 0
  %177 = vmatpush1.bf16.msra.mxu0 %v167
  %178 = vmatprep.subr.bf16.mxu0 0
  %179 = vmatpush1.bf16.msra.mxu0 %v166
  %180 = vmatprep.subr.bf16.mxu0 0
  %181 = vmatpush1.bf16.msra.mxu0 %v165
  %182 = vmatprep.subr.bf16.mxu0 0
  %183 = vmatpush1.bf16.msra.mxu0 %v164
  %184 = vmatprep.subr.bf16.mxu0 0
  %185 = vmatpush1.bf16.msra.mxu0 %v163
  %186 = vmatprep.subr.bf16.mxu0 0
  %187 = vmatpush1.bf16.msra.mxu0 %v162
  %188 = vmatprep.subr.bf16.mxu0 0
  %189 = vmatpush1.bf16.msra.mxu0 %v161
  %190 = vmatprep.subr.bf16.mxu0 0
  %191 = vmatpush1.bf16.msra.mxu0 %v160
  %192 = vmatprep.subr.bf16.mxu0 0
  %193 = vmatpush2.bf16.msra.mxu0 0
  %194 = vmatprep.subr.bf16.mxu0 0
  %195 = vmatpush2.bf16.msra.mxu0 0
  %196 = vmatprep.subr.bf16.mxu0 0
  %197 = vmatpush2.bf16.msra.mxu0 0
  %198 = vmatprep.subr.bf16.mxu0 0
  %199 = vmatpush2.bf16.msra.mxu0 0
  %200 = vmatprep.subr.bf16.mxu0 0
  %201 = vmatpush2.bf16.msra.mxu0 0
  %202 = vmatprep.subr.bf16.mxu0 0
  %203 = vmatpush2.bf16.msra.mxu0 0
  %204 = vmatprep.subr.bf16.mxu0 0
  %205 = vmatpush2.bf16.msra.mxu0 0
  %206 = vmatprep.subr.bf16.mxu0 0
  %207 = vmatpush2.bf16.msra.mxu0 0
  %208 = vmatprep.mubr.bf16.mxu0 0
  %209 = vmatmul.mubr.bf16.gmra.mxu0 %v112
  %v210 = vpop.f32.mrf.mxu0
  %v211 = vadd.f32 0.0, %v210
  %v212 = vpop.f32.mrf.mxu0
  %v213 = vpop.f32.mrf.mxu0
  %v214 = vadd.f32 0.0, %v213
  %v215 = vpop.f32.mrf.mxu0
  %216 = vmatprep.mubr.bf16.mxu0 0
  %217 = vmatmul.mubr.bf16.gmra.mxu0 %v113
  %v218 = vpop.f32.mrf.mxu0
  %v219 = vadd.f32 0.0, %v218
  %v220 = vpop.f32.mrf.mxu0
  %v221 = vpop.f32.mrf.mxu0
  %v222 = vadd.f32 0.0, %v221
  %v223 = vpop.f32.mrf.mxu0
  %224 = vmatprep.mubr.bf16.mxu0 0
  %225 = vmatmul.mubr.bf16.gmra.mxu0 %v114
  %v226 = vpop.f32.mrf.mxu0
  %v227 = vadd.f32 0.0, %v226
  %v228 = vpop.f32.mrf.mxu0
  %v229 = vpop.f32.mrf.mxu0
  %v230 = vadd.f32 0.0, %v229
  %v231 = vpop.f32.mrf.mxu0
  %232 = vmatprep.mubr.bf16.mxu0 0
  %233 = vmatmul.mubr.bf16.gmra.mxu0 %v115
  %v234 = vpop.f32.mrf.mxu0
  %v235 = vadd.f32 0.0, %v234
  %v236 = vpop.f32.mrf.mxu0
  %v237 = vpop.f32.mrf.mxu0
  %v238 = vadd.f32 0.0, %v237
  %v239 = vpop.f32.mrf.mxu0
  %240 = vmatprep.mubr.bf16.mxu0 0
  %241 = vmatmul.mubr.bf16.gmra.mxu0 %v116
  %v242 = vpop.f32.mrf.mxu0
  %v243 = vadd.f32 0.0, %v242
  %v244 = vpop.f32.mrf.mxu0
  %v245 = vpop.f32.mrf.mxu0
  %v246 = vadd.f32 0.0, %v245
  %v247 = vpop.f32.mrf.mxu0
  %248 = vmatprep.mubr.bf16.mxu0 0
  %249 = vmatmul.mubr.bf16.gmra.mxu0 %v117
  %v250 = vpop.f32.mrf.mxu0
  %v251 = vadd.f32 0.0, %v250
  %v252 = vpop.f32.mrf.mxu0
  %v253 = vpop.f32.mrf.mxu0
  %v254 = vadd.f32 0.0, %v253
  %v255 = vpop.f32.mrf.mxu0
  %256 = vmatprep.mubr.bf16.mxu0 0
  %257 = vmatmul.mubr.bf16.gmra.mxu0 %v118
  %v258 = vpop.f32.mrf.mxu0
  %v259 = vadd.f32 0.0, %v258
  %v260 = vpop.f32.mrf.mxu0
  %v261 = vpop.f32.mrf.mxu0
  %v262 = vadd.f32 0.0, %v261
  %v263 = vpop.f32.mrf.mxu0
  %264 = vmatprep.mubr.bf16.mxu0 0
  %265 = vmatmul.mubr.bf16.gmra.mxu0 %v119
  %v266 = vpop.f32.mrf.mxu0
  %v267 = vadd.f32 0.0, %v266
  %v268 = vpop.f32.mrf.mxu0
  %v269 = vpop.f32.mrf.mxu0
  %v270 = vadd.f32 0.0, %v269
  %v271 = vpop.f32.mrf.mxu0
  %272 = vdwg.mxu0
  %v273 = vadd.f32 %v48, %v211
  %v274 = vadd.f32 %v49, %v214
  %v275 = vadd.f32 %v50, %v219
  %v276 = vadd.f32 %v51, %v222
  %v277 = vadd.f32 %v52, %v227
  %v278 = vadd.f32 %v53, %v230
  %v279 = vadd.f32 %v54, %v235
  %v280 = vadd.f32 %v55, %v238
  %v281 = vadd.f32 %v56, %v243
  %v282 = vadd.f32 %v57, %v246
  %v283 = vadd.f32 %v58, %v251
  %v284 = vadd.f32 %v59, %v254
  %v285 = vadd.f32 %v60, %v259
  %v286 = vadd.f32 %v61, %v262
  %v287 = vadd.f32 %v62, %v267
  %v288 = vadd.f32 %v63, %v270
  %289 = vst [vmem:[#allocation2] sm:$0xff] %v273
  %290 = vst [vmem:[#allocation2 + $0x8] sm:$0xff] %v274
  %291 = vst [vmem:[#allocation2 + $0x10] sm:$0xff] %v275
  %292 = vst [vmem:[#allocation2 + $0x18] sm:$0xff] %v276
  %293 = vst [vmem:[#allocation2 + $0x20] sm:$0xff] %v277
  %294 = vst [vmem:[#allocation2 + $0x28] sm:$0xff] %v278
  %295 = vst [vmem:[#allocation2 + $0x30] sm:$0xff] %v279
  %296 = vst [vmem:[#allocation2 + $0x38] sm:$0xff] %v280
  %297 = vst [vmem:[#allocation2 + $0x40] sm:$0xff] %v281
  %298 = vst [vmem:[#allocation2 + $0x48] sm:$0xff] %v282
  %299 = vst [vmem:[#allocation2 + $0x50] sm:$0xff] %v283
  %300 = vst [vmem:[#allocation2 + $0x58] sm:$0xff] %v284
  %301 = vst [vmem:[#allocation2 + $0x60] sm:$0xff] %v285
  %302 = vst [vmem:[#allocation2 + $0x68] sm:$0xff] %v286
  %303 = vst [vmem:[#allocation2 + $0x70] sm:$0xff] %v287
  %304 = vst [vmem:[#allocation2 + $0x78] sm:$0xff] %v288
  // Predicated region
  $region14: #{bottle_stack_forward.18} parent=0 // pred_check
    %p305 = pneg %p12
  $region15: #{bottle_stack_forward.18} parent=0 // pred_check_branch
    %307 = sbr.rel (%p305) target = $region17
  $region16: #{bottle_stack_forward.18} parent=0 // pred_region
    %v308 = vld [vmem:[#allocation2] sm:$0xff]
    %v309 = vld [vmem:[#allocation2 + $0x8] sm:$0xff]
    %v310 = vld [vmem:[#allocation2 + $0x10] sm:$0xff]
    %v311 = vld [vmem:[#allocation2 + $0x18] sm:$0xff]
    %v312 = vld [vmem:[#allocation2 + $0x20] sm:$0xff]
    %v313 = vld [vmem:[#allocation2 + $0x28] sm:$0xff]
    %v314 = vld [vmem:[#allocation2 + $0x30] sm:$0xff]
    %v315 = vld [vmem:[#allocation2 + $0x38] sm:$0xff]
    %v316 = vld [vmem:[#allocation2 + $0x40] sm:$0xff]
    %v317 = vld [vmem:[#allocation2 + $0x48] sm:$0xff]
    %v318 = vld [vmem:[#allocation2 + $0x50] sm:$0xff]
    %v319 = vld [vmem:[#allocation2 + $0x58] sm:$0xff]
    %v320 = vld [vmem:[#allocation2 + $0x60] sm:$0xff]
    %v321 = vld [vmem:[#allocation2 + $0x68] sm:$0xff]
    %v322 = vld [vmem:[#allocation2 + $0x70] sm:$0xff]
    %v323 = vld [vmem:[#allocation2 + $0x78] sm:$0xff]
    %v324 = vpack.c.bf16 %v309, %v308
    %v325 = vpack.c.bf16 %v311, %v310
    %v326 = vpack.c.bf16 %v313, %v312
    %v327 = vpack.c.bf16 %v315, %v314
    %v328 = vpack.c.bf16 %v317, %v316
    %v329 = vpack.c.bf16 %v319, %v318
    %v330 = vpack.c.bf16 %v321, %v320
    %v331 = vpack.c.bf16 %v323, %v322
    %v340 = vunpack.c.l.b16 %v324
    %v341 = vunpack.c.h.b16 %v324
    %v342 = vunpack.c.l.b16 %v325
    %v343 = vunpack.c.h.b16 %v325
    %v344 = vunpack.c.l.b16 %v326
    %v345 = vunpack.c.h.b16 %v326
    %v346 = vunpack.c.l.b16 %v327
    %v347 = vunpack.c.h.b16 %v327
    %v348 = vunpack.c.l.b16 %v328
    %v349 = vunpack.c.h.b16 %v328
    %v350 = vunpack.c.l.b16 %v329
    %v351 = vunpack.c.h.b16 %v329
    %v352 = vunpack.c.l.b16 %v330
    %v353 = vunpack.c.h.b16 %v330
    %v354 = vunpack.c.l.b16 %v331
    %v355 = vunpack.c.h.b16 %v331
    %v356 = vpack.c.b16 %v340, %v340
    %v357 = vpack.c.b16 %v341, %v341
    %v358 = vpack.c.b16 %v342, %v342
    %v359 = vpack.c.b16 %v343, %v343
    %v360 = vpack.c.b16 %v344, %v344
    %v361 = vpack.c.b16 %v345, %v345
    %v362 = vpack.c.b16 %v346, %v346
    %v363 = vpack.c.b16 %v347, %v347
    %v364 = vpack.c.b16 %v348, %v348
    %v365 = vpack.c.b16 %v349, %v349
    %v366 = vpack.c.b16 %v350, %v350
    %v367 = vpack.c.b16 %v351, %v351
    %v368 = vpack.c.b16 %v352, %v352
    %v369 = vpack.c.b16 %v353, %v353
    %v370 = vpack.c.b16 %v354, %v354
    %v371 = vpack.c.b16 %v355, %v355
    %388 = vst [vmem:[%s2] sm:$0xf] %v356
    %389 = vst [vmem:[%s2 + $0x4] sm:$0xf] %v357
    %390 = vst [vmem:[%s2 + $0x8] sm:$0xf] %v358
    %391 = vst [vmem:[%s2 + $0xc] sm:$0xf] %v359
    %392 = vst [vmem:[%s2 + $0x10] sm:$0xf] %v360
    %393 = vst [vmem:[%s2 + $0x14] sm:$0xf] %v361
    %394 = vst [vmem:[%s2 + $0x18] sm:$0xf] %v362
    %395 = vst [vmem:[%s2 + $0x1c] sm:$0xf] %v363
    %396 = vst [vmem:[%s2 + $0x20] sm:$0xf] %v364
    %397 = vst [vmem:[%s2 + $0x24] sm:$0xf] %v365
    %398 = vst [vmem:[%s2 + $0x28] sm:$0xf] %v366
    %399 = vst [vmem:[%s2 + $0x2c] sm:$0xf] %v367
    %400 = vst [vmem:[%s2 + $0x30] sm:$0xf] %v368
    %401 = vst [vmem:[%s2 + $0x34] sm:$0xf] %v369
    %402 = vst [vmem:[%s2 + $0x38] sm:$0xf] %v370
    %403 = vst [vmem:[%s2 + $0x3c] sm:$0xf] %v371
  $region17: #{bottle_stack_forward.18} parent=0 // pred_fallthru
    _
  // Predicated region
  $region18: #{bottle_stack_forward.18} parent=0 // pred_check
    _
  $region19: #{bottle_stack_forward.18} parent=0 // pred_check_branch
    %405 = sbr.rel (0) target = $region21
  $region20: #{bottle_stack_forward.18} parent=0 // pred_region
    _
  $region21: #{bottle_stack_forward.18} parent=0 // pred_fallthru
    _
  // Predicated region
  $region22: #{bottle_stack_forward.18} parent=0 // pred_check
    _
  $region23: #{bottle_stack_forward.18} parent=0 // pred_check_branch
    %407 = sbr.rel (0) target = $region25
  $region24: #{bottle_stack_forward.18} parent=0 // pred_region
    _
  $region25: #{bottle_stack_forward.18} parent=0 // pred_fallthru
    _

// kernel: bottle_stack_forward.19
$region0: #{bottle_stack_forward.19}
  #allocation0 [shape = 'u32[]', space=smem, size = 0x4, offset = 0x4, fixed_abs, tag = 'smem constant byte address 0x4 - core index']
  #allocation1 [shape = 'u32[144,128]{1,0:T(1,128)}', space=vmem, size = 0x12000, scoped, tag = 'internal scratch']
  %s0 = inlined_call_operand.vmem [shape: bf16[32,4], index: 0, kind: input, shape index: {}]
  %s1 = inlined_call_operand.vmem [shape: f32[1,4], index: 1, kind: output, shape index: {0}]
  %s2 = inlined_call_operand.vmem [shape: f32[1,4], index: 2, kind: output, shape index: {1}]
  %3 = xla_tuple %s1, %s2
  %s4 = sld [smem:[#allocation0]]
  $region22: #{bottle_stack_forward.19} parent=0
    _
  %s6 = ssub.s32 1, %s4
  %s7 = scalar_select 0, %s6, %s4
  // Predicated region
  $region2: #{bottle_stack_forward.19} parent=0 // pred_check
    _
  $region3: #{bottle_stack_forward.19} parent=0 // pred_check_branch
    %9 = sbr.rel (0) target = $region5
  $region4: #{bottle_stack_forward.19} parent=0 // pred_region
    _
  $region5: #{bottle_stack_forward.19} parent=0 // pred_fallthru
    _
  %v10 = vld [vmem:[%s0] sm:$0xf]
  %v11 = vld [vmem:[%s0 + $0x4] sm:$0xf]
  %v12 = vld [vmem:[%s0 + $0x8] sm:$0xf]
  %v13 = vld [vmem:[%s0 + $0xc] sm:$0xf]
  %v14 = vunpack.c.l.bf16 %v10
  %v15 = vunpack.c.l.bf16 %v11
  %v16 = vunpack.c.l.bf16 %v12
  %v17 = vunpack.c.l.bf16 %v13
  %vm18 = vcmask 31744
  %v19 = vsel %vm18, %v14, 0.0
  %v20 = vsel %vm18, %v15, 0.0
  %v21 = vadd.f32 %v19, %v20
  %v22 = vsel %vm18, %v16, 0.0
  %v23 = vadd.f32 %v21, %v22
  %v24 = vsel %vm18, %v17, 0.0
  %v25 = vadd.f32 %v23, %v24
  %v26 = vrot.slane %v25, 4
  %v27 = vadd.f32 %v25, %v26
  %v28 = vrot.slane %v27, 2
  %v29 = vadd.f32 %v27, %v28
  %v30 = vrot.slane %v29, 1
  %v31 = vadd.f32 %v29, %v30
  %vm32 = vcmask 24576
  %33 = vst.msk [vmem:[%s1] sm:$0x1] %vm32, %v31
  %v34 = vmul.f32 %v14, %v14
  %v35 = vmul.f32 %v15, %v15
  %v36 = vmul.f32 %v16, %v16
  %v37 = vmul.f32 %v17, %v17
  %v38 = vsel %vm18, %v34, 0.0
  %v39 = vsel %vm18, %v35, 0.0
  %v40 = vadd.f32 %v38, %v39
  %v41 = vsel %vm18, %v36, 0.0
  %v42 = vadd.f32 %v40, %v41
  %v43 = vsel %vm18, %v37, 0.0
  %v44 = vadd.f32 %v42, %v43
  %v45 = vrot.slane %v44, 4
  %v46 = vadd.f32 %v44, %v45
  %v47 = vrot.slane %v46, 2
  %v48 = vadd.f32 %v46, %v47
  %v49 = vrot.slane %v48, 1
  %v50 = vadd.f32 %v48, %v49
  %51 = vst.msk [vmem:[%s2] sm:$0x1] %vm32, %v50
  // Predicated region
  $region6: #{bottle_stack_forward.19} parent=0 // pred_check
    _
  $region7: #{bottle_stack_forward.19} parent=0 // pred_check_branch
    %53 = sbr.rel (0) target = $region9
  $region8: #{bottle_stack_forward.19} parent=0 // pred_region
    _
  $region9: #{bottle_stack_forward.19} parent=0 // pred_fallthru
    _
  // Predicated region
  $region10: #{bottle_stack_forward.19} parent=0 // pred_check
    _
  $region11: #{bottle_stack_forward.19} parent=0 // pred_check_branch
    %55 = sbr.rel (0) target = $region13
  $region12: #{bottle_stack_forward.19} parent=0 // pred_region
    _
  $region13: #{bottle_stack_forward.19} parent=0 // pred_fallthru
    _
  // Predicated region
  $region14: #{bottle_stack_forward.19} parent=0 // pred_check
    _
  $region15: #{bottle_stack_forward.19} parent=0 // pred_check_branch
    %57 = sbr.rel (0) target = $region17
  $region16: #{bottle_stack_forward.19} parent=0 // pred_region
    _
  $region17: #{bottle_stack_forward.19} parent=0 // pred_fallthru
    _
  // Predicated region
  $region18: #{bottle_stack_forward.19} parent=0 // pred_check
    _
  $region19: #{bottle_stack_forward.19} parent=0 // pred_check_branch
    %59 = sbr.rel (0) target = $region21
  $region20: #{bottle_stack_forward.19} parent=0 // pred_region
    _
  $region21: #{bottle_stack_forward.19} parent=0 // pred_fallthru
    _

// kernel: bottle_stack_forward.17
$region0: #{bottle_stack_forward.17}
  #allocation0 [shape = 'u32[]', space=smem, size = 0x4, offset = 0x4, fixed_abs, tag = 'smem constant byte address 0x4 - core index']
  #allocation1 [shape = 'u32[144,128]{1,0:T(1,128)}', space=vmem, size = 0x12000, scoped, tag = 'internal scratch']
  %s0 = inlined_call_operand.vmem [shape: bf16[4,64,8], index: 0, kind: input, shape index: {}]
  %s1 = inlined_call_operand.vmem [shape: bf16[4,64,8], index: 1, kind: input, shape index: {}]
  %s2 = inlined_call_operand.vmem [shape: bf16[4,64,8], index: 2, kind: input, shape index: {}]
  %s3 = inlined_call_operand.vmem [shape: bf16[4,64,64], index: 3, kind: input, shape index: {}]
  %s4 = inlined_call_operand.vmem [shape: bf16[4,64,8], index: 4, kind: output, shape index: {}]
  %s5 = sld [smem:[#allocation0]]
  $region26: #{bottle_stack_forward.17} parent=0
    _
  %s7 = ssub.s32 1, %s5
  %s8 = scalar_select 0, %s7, %s5
  // Predicated region
  $region2: #{bottle_stack_forward.17} parent=0 // pred_check
    _
  $region3: #{bottle_stack_forward.17} parent=0 // pred_check_branch
    %10 = sbr.rel (0) target = $region5
  $region4: #{bottle_stack_forward.17} parent=0 // pred_region
    _
  $region5: #{bottle_stack_forward.17} parent=0 // pred_fallthru
    _
  // Predicated region
  $region6: #{bottle_stack_forward.17} parent=0 // pred_check
    _
  $region7: #{bottle_stack_forward.17} parent=0 // pred_check_branch
    %12 = sbr.rel (0) target = $region9
  $region8: #{bottle_stack_forward.17} parent=0 // pred_region
    _
  $region9: #{bottle_stack_forward.17} parent=0 // pred_fallthru
    _
  // Predicated region
  $region10: #{bottle_stack_forward.17} parent=0 // pred_check
    _
  $region11: #{bottle_stack_forward.17} parent=0 // pred_check_branch
    %14 = sbr.rel (0) target = $region13
  $region12: #{bottle_stack_forward.17} parent=0 // pred_region
    _
  $region13: #{bottle_stack_forward.17} parent=0 // pred_fallthru
    _
  // Predicated region
  $region14: #{bottle_stack_forward.17} parent=0 // pred_check
    _
  $region15: #{bottle_stack_forward.17} parent=0 // pred_check_branch
    %16 = sbr.rel (0) target = $region17
  $region16: #{bottle_stack_forward.17} parent=0 // pred_region
    _
  $region17: #{bottle_stack_forward.17} parent=0 // pred_fallthru
    _
  %v18 = vld [vmem:[%s0] sm:$0xf]
  %v19 = vld [vmem:[%s0 + $0x4] sm:$0xf]
  %v20 = vld [vmem:[%s0 + $0x8] sm:$0xf]
  %v21 = vld [vmem:[%s0 + $0xc] sm:$0xf]
  %v22 = vld [vmem:[%s0 + $0x10] sm:$0xf]
  %v23 = vld [vmem:[%s0 + $0x14] sm:$0xf]
  %v24 = vld [vmem:[%s0 + $0x18] sm:$0xf]
  %v25 = vld [vmem:[%s0 + $0x1c] sm:$0xf]
  %v26 = vld [vmem:[%s0 + $0x20] sm:$0xf]
  %v27 = vld [vmem:[%s0 + $0x24] sm:$0xf]
  %v28 = vld [vmem:[%s0 + $0x28] sm:$0xf]
  %v29 = vld [vmem:[%s0 + $0x2c] sm:$0xf]
  %v30 = vld [vmem:[%s0 + $0x30] sm:$0xf]
  %v31 = vld [vmem:[%s0 + $0x34] sm:$0xf]
  %v32 = vld [vmem:[%s0 + $0x38] sm:$0xf]
  %v33 = vld [vmem:[%s0 + $0x3c] sm:$0xf]
  %v34 = vld [vmem:[%s0 + $0x40] sm:$0xf]
  %v35 = vld [vmem:[%s0 + $0x44] sm:$0xf]
  %v36 = vld [vmem:[%s0 + $0x48] sm:$0xf]
  %v37 = vld [vmem:[%s0 + $0x4c] sm:$0xf]
  %v38 = vld [vmem:[%s0 + $0x50] sm:$0xf]
  %v39 = vld [vmem:[%s0 + $0x54] sm:$0xf]
  %v40 = vld [vmem:[%s0 + $0x58] sm:$0xf]
  %v41 = vld [vmem:[%s0 + $0x5c] sm:$0xf]
  %v42 = vld [vmem:[%s0 + $0x60] sm:$0xf]
  %v43 = vld [vmem:[%s0 + $0x64] sm:$0xf]
  %v44 = vld [vmem:[%s0 + $0x68] sm:$0xf]
  %v45 = vld [vmem:[%s0 + $0x6c] sm:$0xf]
  %v46 = vld [vmem:[%s0 + $0x70] sm:$0xf]
  %v47 = vld [vmem:[%s0 + $0x74] sm:$0xf]
  %v48 = vld [vmem:[%s0 + $0x78] sm:$0xf]
  %v49 = vld [vmem:[%s0 + $0x7c] sm:$0xf]
  %v50 = vld [vmem:[%s1] sm:$0xf]
  %v51 = vld [vmem:[%s1 + $0x4] sm:$0xf]
  %v52 = vld [vmem:[%s1 + $0x8] sm:$0xf]
  %v53 = vld [vmem:[%s1 + $0xc] sm:$0xf]
  %v54 = vld [vmem:[%s1 + $0x10] sm:$0xf]
  %v55 = vld [vmem:[%s1 + $0x14] sm:$0xf]
  %v56 = vld [vmem:[%s1 + $0x18] sm:$0xf]
  %v57 = vld [vmem:[%s1 + $0x1c] sm:$0xf]
  %v58 = vld [vmem:[%s1 + $0x20] sm:$0xf]
  %v59 = vld [vmem:[%s1 + $0x24] sm:$0xf]
  %v60 = vld [vmem:[%s1 + $0x28] sm:$0xf]
  %v61 = vld [vmem:[%s1 + $0x2c] sm:$0xf]
  %v62 = vld [vmem:[%s1 + $0x30] sm:$0xf]
  %v63 = vld [vmem:[%s1 + $0x34] sm:$0xf]
  %v64 = vld [vmem:[%s1 + $0x38] sm:$0xf]
  %v65 = vld [vmem:[%s1 + $0x3c] sm:$0xf]
  %v66 = vld [vmem:[%s1 + $0x40] sm:$0xf]
  %v67 = vld [vmem:[%s1 + $0x44] sm:$0xf]
  %v68 = vld [vmem:[%s1 + $0x48] sm:$0xf]
  %v69 = vld [vmem:[%s1 + $0x4c] sm:$0xf]
  %v70 = vld [vmem:[%s1 + $0x50] sm:$0xf]
  %v71 = vld [vmem:[%s1 + $0x54] sm:$0xf]
  %v72 = vld [vmem:[%s1 + $0x58] sm:$0xf]
  %v73 = vld [vmem:[%s1 + $0x5c] sm:$0xf]
  %v74 = vld [vmem:[%s1 + $0x60] sm:$0xf]
  %v75 = vld [vmem:[%s1 + $0x64] sm:$0xf]
  %v76 = vld [vmem:[%s1 + $0x68] sm:$0xf]
  %v77 = vld [vmem:[%s1 + $0x6c] sm:$0xf]
  %v78 = vld [vmem:[%s1 + $0x70] sm:$0xf]
  %v79 = vld [vmem:[%s1 + $0x74] sm:$0xf]
  %v80 = vld [vmem:[%s1 + $0x78] sm:$0xf]
  %v81 = vld [vmem:[%s1 + $0x7c] sm:$0xf]
  %v82 = vld [vmem:[%s2] sm:$0xf]
  %v83 = vld [vmem:[%s2 + $0x4] sm:$0xf]
  %v84 = vld [vmem:[%s2 + $0x8] sm:$0xf]
  %v85 = vld [vmem:[%s2 + $0xc] sm:$0xf]
  %v86 = vld [vmem:[%s2 + $0x10] sm:$0xf]
  %v87 = vld [vmem:[%s2 + $0x14] sm:$0xf]
  %v88 = vld [vmem:[%s2 + $0x18] sm:$0xf]
  %v89 = vld [vmem:[%s2 + $0x1c] sm:$0xf]
  %v90 = vld [vmem:[%s2 + $0x20] sm:$0xf]
  %v91 = vld [vmem:[%s2 + $0x24] sm:$0xf]
  %v92 = vld [vmem:[%s2 + $0x28] sm:$0xf]
  %v93 = vld [vmem:[%s2 + $0x2c] sm:$0xf]
  %v94 = vld [vmem:[%s2 + $0x30] sm:$0xf]
  %v95 = vld [vmem:[%s2 + $0x34] sm:$0xf]
  %v96 = vld [vmem:[%s2 + $0x38] sm:$0xf]
  %v97 = vld [vmem:[%s2 + $0x3c] sm:$0xf]
  %v98 = vld [vmem:[%s2 + $0x40] sm:$0xf]
  %v99 = vld [vmem:[%s2 + $0x44] sm:$0xf]
  %v100 = vld [vmem:[%s2 + $0x48] sm:$0xf]
  %v101 = vld [vmem:[%s2 + $0x4c] sm:$0xf]
  %v102 = vld [vmem:[%s2 + $0x50] sm:$0xf]
  %v103 = vld [vmem:[%s2 + $0x54] sm:$0xf]
  %v104 = vld [vmem:[%s2 + $0x58] sm:$0xf]
  %v105 = vld [vmem:[%s2 + $0x5c] sm:$0xf]
  %v106 = vld [vmem:[%s2 + $0x60] sm:$0xf]
  %v107 = vld [vmem:[%s2 + $0x64] sm:$0xf]
  %v108 = vld [vmem:[%s2 + $0x68] sm:$0xf]
  %v109 = vld [vmem:[%s2 + $0x6c] sm:$0xf]
  %v110 = vld [vmem:[%s2 + $0x70] sm:$0xf]
  %v111 = vld [vmem:[%s2 + $0x74] sm:$0xf]
  %v112 = vld [vmem:[%s2 + $0x78] sm:$0xf]
  %v113 = vld [vmem:[%s2 + $0x7c] sm:$0xf]
  %v114 = vld [vmem:[%s3] sm:$0xf]
  %v115 = vld [vmem:[%s3 + $0x4] sm:$0xf]
  %v116 = vld [vmem:[%s3 + $0x8] sm:$0xf]
  %v117 = vld [vmem:[%s3 + $0xc] sm:$0xf]
  %v118 = vld [vmem:[%s3 + $0x10] sm:$0xf]
  %v119 = vld [vmem:[%s3 + $0x14] sm:$0xf]
  %v120 = vld [vmem:[%s3 + $0x18] sm:$0xf]
  %v121 = vld [vmem:[%s3 + $0x1c] sm:$0xf]
  %v122 = vld [vmem:[%s3 + $0x20] sm:$0xf]
  %v123 = vld [vmem:[%s3 + $0x24] sm:$0xf]
  %v124 = vld [vmem:[%s3 + $0x28] sm:$0xf]
  %v125 = vld [vmem:[%s3 + $0x2c] sm:$0xf]
  %v126 = vld [vmem:[%s3 + $0x30] sm:$0xf]
  %v127 = vld [vmem:[%s3 + $0x34] sm:$0xf]
  %v128 = vld [vmem:[%s3 + $0x38] sm:$0xf]
  %v129 = vld [vmem:[%s3 + $0x3c] sm:$0xf]
  %v130 = vld [vmem:[%s3 + $0x40] sm:$0xf]
  %v131 = vld [vmem:[%s3 + $0x44] sm:$0xf]
  %v132 = vld [vmem:[%s3 + $0x48] sm:$0xf]
  %v133 = vld [vmem:[%s3 + $0x4c] sm:$0xf]
  %v134 = vld [vmem:[%s3 + $0x50] sm:$0xf]
  %v135 = vld [vmem:[%s3 + $0x54] sm:$0xf]
  %v136 = vld [vmem:[%s3 + $0x58] sm:$0xf]
  %v137 = vld [vmem:[%s3 + $0x5c] sm:$0xf]
  %v138 = vld [vmem:[%s3 + $0x60] sm:$0xf]
  %v139 = vld [vmem:[%s3 + $0x64] sm:$0xf]
  %v140 = vld [vmem:[%s3 + $0x68] sm:$0xf]
  %v141 = vld [vmem:[%s3 + $0x6c] sm:$0xf]
  %v142 = vld [vmem:[%s3 + $0x70] sm:$0xf]
  %v143 = vld [vmem:[%s3 + $0x74] sm:$0xf]
  %v144 = vld [vmem:[%s3 + $0x78] sm:$0xf]
  %v145 = vld [vmem:[%s3 + $0x7c] sm:$0xf]
  %v146 = vunpack.c.l.bf16 %v114
  %v147 = vunpack.c.l.bf16 %v115
  %v148 = vunpack.c.l.bf16 %v116
  %v149 = vunpack.c.l.bf16 %v117
  %v150 = vunpack.c.l.bf16 %v118
  %v151 = vunpack.c.l.bf16 %v119
  %v152 = vunpack.c.l.bf16 %v120
  %v153 = vunpack.c.l.bf16 %v121
  %v154 = vunpack.c.l.bf16 %v122
  %v155 = vunpack.c.l.bf16 %v123
  %v156 = vunpack.c.l.bf16 %v124
  %v157 = vunpack.c.l.bf16 %v125
  %v158 = vunpack.c.l.bf16 %v126
  %v159 = vunpack.c.l.bf16 %v127
  %v160 = vunpack.c.l.bf16 %v128
  %v161 = vunpack.c.l.bf16 %v129
  %v162 = vunpack.c.l.bf16 %v130
  %v163 = vunpack.c.l.bf16 %v131
  %v164 = vunpack.c.l.bf16 %v132
  %v165 = vunpack.c.l.bf16 %v133
  %v166 = vunpack.c.l.bf16 %v134
  %v167 = vunpack.c.l.bf16 %v135
  %v168 = vunpack.c.l.bf16 %v136
  %v169 = vunpack.c.l.bf16 %v137
  %v170 = vunpack.c.l.bf16 %v138
  %v171 = vunpack.c.l.bf16 %v139
  %v172 = vunpack.c.l.bf16 %v140
  %v173 = vunpack.c.l.bf16 %v141
  %v174 = vunpack.c.l.bf16 %v142
  %v175 = vunpack.c.l.bf16 %v143
  %v176 = vunpack.c.l.bf16 %v144
  %v177 = vunpack.c.l.bf16 %v145
  %v186 = vunpack.c.l.b16 %v18
  %v187 = vunpack.c.l.b16 %v19
  %v188 = vunpack.c.l.b16 %v20
  %v189 = vunpack.c.l.b16 %v21
  %v190 = vunpack.c.l.b16 %v22
  %v191 = vunpack.c.l.b16 %v23
  %v192 = vunpack.c.l.b16 %v24
  %v193 = vunpack.c.l.b16 %v25
  %v194 = vpack.c.b16 %v187, %v186
  %v195 = vpack.c.b16 %v189, %v188
  %v196 = vpack.c.b16 %v191, %v190
  %v197 = vpack.c.b16 %v193, %v192
  %v206 = vunpack.c.l.b16 %v50
  %v207 = vunpack.c.l.b16 %v51
  %v208 = vunpack.c.l.b16 %v52
  %v209 = vunpack.c.l.b16 %v53
  %v210 = vunpack.c.l.b16 %v54
  %v211 = vunpack.c.l.b16 %v55
  %v212 = vunpack.c.l.b16 %v56
  %v213 = vunpack.c.l.b16 %v57
  %v214 = vpack.c.b16 %v207, %v206
  %v215 = vpack.c.b16 %v209, %v208
  %v216 = vpack.c.b16 %v211, %v210
  %v217 = vpack.c.b16 %v213, %v212
  %vm218 = vcmask 64512
  %v220 = vsel %vm218, %v194, 0
  %v223 = vsel %vm218, %v195, 0
  %v226 = vsel %vm218, %v196, 0
  %v229 = vsel %vm218, %v197, 0
  %v232 = vsel %vm218, %v214, 0
  %v235 = vsel %vm218, %v215, 0
  %v238 = vsel %vm218, %v216, 0
  %v241 = vsel %vm218, %v217, 0
  %243 = vmatprep.subr.bf16.mxu0 0
  %244 = vmatpush1.bf16.xpose.msra.mxu0 0
  %245 = vmatprep.subr.bf16.mxu0 0
  %246 = vmatpush1.bf16.xpose.msra.mxu0 0
  %247 = vmatprep.subr.bf16.mxu0 0
  %248 = vmatpush1.bf16.xpose.msra.mxu0 0
  %249 = vmatprep.subr.bf16.mxu0 0
  %250 = vmatpush1.bf16.xpose.msra.mxu0 0
  %251 = vmatprep.subr.bf16.mxu0 0
  %252 = vmatpush1.bf16.xpose.msra.mxu0 %v241
  %253 = vmatprep.subr.bf16.mxu0 0
  %254 = vmatpush1.bf16.xpose.msra.mxu0 %v238
  %255 = vmatprep.subr.bf16.mxu0 0
  %256 = vmatpush1.bf16.xpose.msra.mxu0 %v235
  %257 = vmatprep.subr.bf16.mxu0 0
  %258 = vmatpush1.bf16.xpose.msra.mxu0 %v232
  %259 = vmatprep.subr.bf16.mxu0 0
  %260 = vmatpush2.bf16.xpose.msra.mxu0 0
  %261 = vmatprep.subr.bf16.mxu0 0
  %262 = vmatpush2.bf16.xpose.msra.mxu0 0
  %263 = vmatprep.subr.bf16.mxu0 0
  %264 = vmatpush2.bf16.xpose.msra.mxu0 0
  %265 = vmatprep.subr.bf16.mxu0 0
  %266 = vmatpush2.bf16.xpose.msra.mxu0 0
  %267 = vmatprep.subr.bf16.mxu0 0
  %268 = vmatpush2.bf16.xpose.msra.mxu0 0
  %269 = vmatprep.subr.bf16.mxu0 0
  %270 = vmatpush2.bf16.xpose.msra.mxu0 0
  %271 = vmatprep.subr.bf16.mxu0 0
  %272 = vmatpush2.bf16.xpose.msra.mxu0 0
  %273 = vmatprep.subr.bf16.mxu0 0
  %274 = vmatpush2.bf16.xpose.msra.mxu0 0
  %275 = vmatprep.mubr.bf16.mxu0 0
  %276 = vmatmul.mubr.bf16.gmra.mxu0 %v220
  %v277 = vpop.f32.mrf.mxu0
  %v278 = vadd.f32 %v146, %v277
  %v279 = vpop.f32.mrf.mxu0
  %v280 = vpop.f32.mrf.mxu0
  %v281 = vadd.f32 %v147, %v280
  %v282 = vpop.f32.mrf.mxu0
  %283 = vmatprep.mubr.bf16.mxu0 0
  %284 = vmatmul.mubr.bf16.gmra.mxu0 %v223
  %v285 = vpop.f32.mrf.mxu0
  %v286 = vadd.f32 %v148, %v285
  %v287 = vpop.f32.mrf.mxu0
  %v288 = vpop.f32.mrf.mxu0
  %v289 = vadd.f32 %v149, %v288
  %v290 = vpop.f32.mrf.mxu0
  %291 = vmatprep.mubr.bf16.mxu0 0
  %292 = vmatmul.mubr.bf16.gmra.mxu0 %v226
  %v293 = vpop.f32.mrf.mxu0
  %v294 = vadd.f32 %v150, %v293
  %v295 = vpop.f32.mrf.mxu0
  %v296 = vpop.f32.mrf.mxu0
  %v297 = vadd.f32 %v151, %v296
  %v298 = vpop.f32.mrf.mxu0
  %299 = vmatprep.mubr.bf16.mxu0 0
  %300 = vmatmul.mubr.bf16.gmra.mxu0 %v229
  %v301 = vpop.f32.mrf.mxu0
  %v302 = vadd.f32 %v152, %v301
  %v303 = vpop.f32.mrf.mxu0
  %v304 = vpop.f32.mrf.mxu0
  %v305 = vadd.f32 %v153, %v304
  %v306 = vpop.f32.mrf.mxu0
  %307 = vdwg.mxu0
  %v316 = vunpack.c.l.b16 %v26
  %v317 = vunpack.c.l.b16 %v27
  %v318 = vunpack.c.l.b16 %v28
  %v319 = vunpack.c.l.b16 %v29
  %v320 = vunpack.c.l.b16 %v30
  %v321 = vunpack.c.l.b16 %v31
  %v322 = vunpack.c.l.b16 %v32
  %v323 = vunpack.c.l.b16 %v33
  %v324 = vpack.c.b16 %v317, %v316
  %v325 = vpack.c.b16 %v319, %v318
  %v326 = vpack.c.b16 %v321, %v320
  %v327 = vpack.c.b16 %v323, %v322
  %v336 = vunpack.c.l.b16 %v58
  %v337 = vunpack.c.l.b16 %v59
  %v338 = vunpack.c.l.b16 %v60
  %v339 = vunpack.c.l.b16 %v61
  %v340 = vunpack.c.l.b16 %v62
  %v341 = vunpack.c.l.b16 %v63
  %v342 = vunpack.c.l.b16 %v64
  %v343 = vunpack.c.l.b16 %v65
  %v344 = vpack.c.b16 %v337, %v336
  %v345 = vpack.c.b16 %v339, %v338
  %v346 = vpack.c.b16 %v341, %v340
  %v347 = vpack.c.b16 %v343, %v342
  %v349 = vsel %vm218, %v324, 0
  %v352 = vsel %vm218, %v325, 0
  %v355 = vsel %vm218, %v326, 0
  %v358 = vsel %vm218, %v327, 0
  %v361 = vsel %vm218, %v344, 0
  %v364 = vsel %vm218, %v345, 0
  %v367 = vsel %vm218, %v346, 0
  %v370 = vsel %vm218, %v347, 0
  %372 = vmatprep.subr.bf16.mxu0 0
  %373 = vmatpush1.bf16.xpose.msra.mxu0 0
  %374 = vmatprep.subr.bf16.mxu0 0
  %375 = vmatpush1.bf16.xpose.msra.mxu0 0
  %376 = vmatprep.subr.bf16.mxu0 0
  %377 = vmatpush1.bf16.xpose.msra.mxu0 0
  %378 = vmatprep.subr.bf16.mxu0 0
  %379 = vmatpush1.bf16.xpose.msra.mxu0 0
  %380 = vmatprep.subr.bf16.mxu0 0
  %381 = vmatpush1.bf16.xpose.msra.mxu0 %v370
  %382 = vmatprep.subr.bf16.mxu0 0
  %383 = vmatpush1.bf16.xpose.msra.mxu0 %v367
  %384 = vmatprep.subr.bf16.mxu0 0
  %385 = vmatpush1.bf16.xpose.msra.mxu0 %v364
  %386 = vmatprep.subr.bf16.mxu0 0
  %387 = vmatpush1.bf16.xpose.msra.mxu0 %v361
  %388 = vmatprep.subr.bf16.mxu0 0
  %389 = vmatpush2.bf16.xpose.msra.mxu0 0
  %390 = vmatprep.subr.bf16.mxu0 0
  %391 = vmatpush2.bf16.xpose.msra.mxu0 0
  %392 = vmatprep.subr.bf16.mxu0 0
  %393 = vmatpush2.bf16.xpose.msra.mxu0 0
  %394 = vmatprep.subr.bf16.mxu0 0
  %395 = vmatpush2.bf16.xpose.msra.mxu0 0
  %396 = vmatprep.subr.bf16.mxu0 0
  %397 = vmatpush2.bf16.xpose.msra.mxu0 0
  %398 = vmatprep.subr.bf16.mxu0 0
  %399 = vmatpush2.bf16.xpose.msra.mxu0 0
  %400 = vmatprep.subr.bf16.mxu0 0
  %401 = vmatpush2.bf16.xpose.msra.mxu0 0
  %402 = vmatprep.subr.bf16.mxu0 0
  %403 = vmatpush2.bf16.xpose.msra.mxu0 0
  %404 = vmatprep.mubr.bf16.mxu0 0
  %405 = vmatmul.mubr.bf16.gmra.mxu0 %v349
  %v406 = vpop.f32.mrf.mxu0
  %v407 = vadd.f32 %v154, %v406
  %v408 = vpop.f32.mrf.mxu0
  %v409 = vpop.f32.mrf.mxu0
  %v410 = vadd.f32 %v155, %v409
  %v411 = vpop.f32.mrf.mxu0
  %412 = vmatprep.mubr.bf16.mxu0 0
  %413 = vmatmul.mubr.bf16.gmra.mxu0 %v352
  %v414 = vpop.f32.mrf.mxu0
  %v415 = vadd.f32 %v156, %v414
  %v416 = vpop.f32.mrf.mxu0
  %v417 = vpop.f32.mrf.mxu0
  %v418 = vadd.f32 %v157, %v417
  %v419 = vpop.f32.mrf.mxu0
  %420 = vmatprep.mubr.bf16.mxu0 0
  %421 = vmatmul.mubr.bf16.gmra.mxu0 %v355
  %v422 = vpop.f32.mrf.mxu0
  %v423 = vadd.f32 %v158, %v422
  %v424 = vpop.f32.mrf.mxu0
  %v425 = vpop.f32.mrf.mxu0
  %v426 = vadd.f32 %v159, %v425
  %v427 = vpop.f32.mrf.mxu0
  %428 = vmatprep.mubr.bf16.mxu0 0
  %429 = vmatmul.mubr.bf16.gmra.mxu0 %v358
  %v430 = vpop.f32.mrf.mxu0
  %v431 = vadd.f32 %v160, %v430
  %v432 = vpop.f32.mrf.mxu0
  %v433 = vpop.f32.mrf.mxu0
  %v434 = vadd.f32 %v161, %v433
  %v435 = vpop.f32.mrf.mxu0
  %436 = vdwg.mxu0
  %v445 = vunpack.c.l.b16 %v34
  %v446 = vunpack.c.l.b16 %v35
  %v447 = vunpack.c.l.b16 %v36
  %v448 = vunpack.c.l.b16 %v37
  %v449 = vunpack.c.l.b16 %v38
  %v450 = vunpack.c.l.b16 %v39
  %v451 = vunpack.c.l.b16 %v40
  %v452 = vunpack.c.l.b16 %v41
  %v453 = vpack.c.b16 %v446, %v445
  %v454 = vpack.c.b16 %v448, %v447
  %v455 = vpack.c.b16 %v450, %v449
  %v456 = vpack.c.b16 %v452, %v451
  %v465 = vunpack.c.l.b16 %v66
  %v466 = vunpack.c.l.b16 %v67
  %v467 = vunpack.c.l.b16 %v68
  %v468 = vunpack.c.l.b16 %v69
  %v469 = vunpack.c.l.b16 %v70
  %v470 = vunpack.c.l.b16 %v71
  %v471 = vunpack.c.l.b16 %v72
  %v472 = vunpack.c.l.b16 %v73
  %v473 = vpack.c.b16 %v466, %v465
  %v474 = vpack.c.b16 %v468, %v467
  %v475 = vpack.c.b16 %v470, %v469
  %v476 = vpack.c.b16 %v472, %v471
  %v478 = vsel %vm218, %v453, 0
  %v481 = vsel %vm218, %v454, 0
  %v484 = vsel %vm218, %v455, 0
  %v487 = vsel %vm218, %v456, 0
  %v490 = vsel %vm218, %v473, 0
  %v493 = vsel %vm218, %v474, 0
  %v496 = vsel %vm218, %v475, 0
  %v499 = vsel %vm218, %v476, 0
  %501 = vmatprep.subr.bf16.mxu0 0
  %502 = vmatpush1.bf16.xpose.msra.mxu0 0
  %503 = vmatprep.subr.bf16.mxu0 0
  %504 = vmatpush1.bf16.xpose.msra.mxu0 0
  %505 = vmatprep.subr.bf16.mxu0 0
  %506 = vmatpush1.bf16.xpose.msra.mxu0 0
  %507 = vmatprep.subr.bf16.mxu0 0
  %508 = vmatpush1.bf16.xpose.msra.mxu0 0
  %509 = vmatprep.subr.bf16.mxu0 0
  %510 = vmatpush1.bf16.xpose.msra.mxu0 %v499
  %511 = vmatprep.subr.bf16.mxu0 0
  %512 = vmatpush1.bf16.xpose.msra.mxu0 %v496
  %513 = vmatprep.subr.bf16.mxu0 0
  %514 = vmatpush1.bf16.xpose.msra.mxu0 %v493
  %515 = vmatprep.subr.bf16.mxu0 0
  %516 = vmatpush1.bf16.xpose.msra.mxu0 %v490
  %517 = vmatprep.subr.bf16.mxu0 0
  %518 = vmatpush2.bf16.xpose.msra.mxu0 0
  %519 = vmatprep.subr.bf16.mxu0 0
  %520 = vmatpush2.bf16.xpose.msra.mxu0 0
  %521 = vmatprep.subr.bf16.mxu0 0
  %522 = vmatpush2.bf16.xpose.msra.mxu0 0
  %523 = vmatprep.subr.bf16.mxu0 0
  %524 = vmatpush2.bf16.xpose.msra.mxu0 0
  %525 = vmatprep.subr.bf16.mxu0 0
  %526 = vmatpush2.bf16.xpose.msra.mxu0 0
  %527 = vmatprep.subr.bf16.mxu0 0
  %528 = vmatpush2.bf16.xpose.msra.mxu0 0
  %529 = vmatprep.subr.bf16.mxu0 0
  %530 = vmatpush2.bf16.xpose.msra.mxu0 0
  %531 = vmatprep.subr.bf16.mxu0 0
  %532 = vmatpush2.bf16.xpose.msra.mxu0 0
  %533 = vmatprep.mubr.bf16.mxu0 0
  %534 = vmatmul.mubr.bf16.gmra.mxu0 %v478
  %v535 = vpop.f32.mrf.mxu0
  %v536 = vadd.f32 %v162, %v535
  %v537 = vpop.f32.mrf.mxu0
  %v538 = vpop.f32.mrf.mxu0
  %v539 = vadd.f32 %v163, %v538
  %v540 = vpop.f32.mrf.mxu0
  %541 = vmatprep.mubr.bf16.mxu0 0
  %542 = vmatmul.mubr.bf16.gmra.mxu0 %v481
  %v543 = vpop.f32.mrf.mxu0
  %v544 = vadd.f32 %v164, %v543
  %v545 = vpop.f32.mrf.mxu0
  %v546 = vpop.f32.mrf.mxu0
  %v547 = vadd.f32 %v165, %v546
  %v548 = vpop.f32.mrf.mxu0
  %549 = vmatprep.mubr.bf16.mxu0 0
  %550 = vmatmul.mubr.bf16.gmra.mxu0 %v484
  %v551 = vpop.f32.mrf.mxu0
  %v552 = vadd.f32 %v166, %v551
  %v553 = vpop.f32.mrf.mxu0
  %v554 = vpop.f32.mrf.mxu0
  %v555 = vadd.f32 %v167, %v554
  %v556 = vpop.f32.mrf.mxu0
  %557 = vmatprep.mubr.bf16.mxu0 0
  %558 = vmatmul.mubr.bf16.gmra.mxu0 %v487
  %v559 = vpop.f32.mrf.mxu0
  %v560 = vadd.f32 %v168, %v559
  %v561 = vpop.f32.mrf.mxu0
  %v562 = vpop.f32.mrf.mxu0
  %v563 = vadd.f32 %v169, %v562
  %v564 = vpop.f32.mrf.mxu0
  %565 = vdwg.mxu0
  %v574 = vunpack.c.l.b16 %v42
  %v575 = vunpack.c.l.b16 %v43
  %v576 = vunpack.c.l.b16 %v44
  %v577 = vunpack.c.l.b16 %v45
  %v578 = vunpack.c.l.b16 %v46
  %v579 = vunpack.c.l.b16 %v47
  %v580 = vunpack.c.l.b16 %v48
  %v581 = vunpack.c.l.b16 %v49
  %v582 = vpack.c.b16 %v575, %v574
  %v583 = vpack.c.b16 %v577, %v576
  %v584 = vpack.c.b16 %v579, %v578
  %v585 = vpack.c.b16 %v581, %v580
  %v594 = vunpack.c.l.b16 %v74
  %v595 = vunpack.c.l.b16 %v75
  %v596 = vunpack.c.l.b16 %v76
  %v597 = vunpack.c.l.b16 %v77
  %v598 = vunpack.c.l.b16 %v78
  %v599 = vunpack.c.l.b16 %v79
  %v600 = vunpack.c.l.b16 %v80
  %v601 = vunpack.c.l.b16 %v81
  %v602 = vpack.c.b16 %v595, %v594
  %v603 = vpack.c.b16 %v597, %v596
  %v604 = vpack.c.b16 %v599, %v598
  %v605 = vpack.c.b16 %v601, %v600
  %v607 = vsel %vm218, %v582, 0
  %v610 = vsel %vm218, %v583, 0
  %v613 = vsel %vm218, %v584, 0
  %v616 = vsel %vm218, %v585, 0
  %v619 = vsel %vm218, %v602, 0
  %v622 = vsel %vm218, %v603, 0
  %v625 = vsel %vm218, %v604, 0
  %v628 = vsel %vm218, %v605, 0
  %630 = vmatprep.subr.bf16.mxu0 0
  %631 = vmatpush1.bf16.xpose.msra.mxu0 0
  %632 = vmatprep.subr.bf16.mxu0 0
  %633 = vmatpush1.bf16.xpose.msra.mxu0 0
  %634 = vmatprep.subr.bf16.mxu0 0
  %635 = vmatpush1.bf16.xpose.msra.mxu0 0
  %636 = vmatprep.subr.bf16.mxu0 0
  %637 = vmatpush1.bf16.xpose.msra.mxu0 0
  %638 = vmatprep.subr.bf16.mxu0 0
  %639 = vmatpush1.bf16.xpose.msra.mxu0 %v628
  %640 = vmatprep.subr.bf16.mxu0 0
  %641 = vmatpush1.bf16.xpose.msra.mxu0 %v625
  %642 = vmatprep.subr.bf16.mxu0 0
  %643 = vmatpush1.bf16.xpose.msra.mxu0 %v622
  %644 = vmatprep.subr.bf16.mxu0 0
  %645 = vmatpush1.bf16.xpose.msra.mxu0 %v619
  %646 = vmatprep.subr.bf16.mxu0 0
  %647 = vmatpush2.bf16.xpose.msra.mxu0 0
  %648 = vmatprep.subr.bf16.mxu0 0
  %649 = vmatpush2.bf16.xpose.msra.mxu0 0
  %650 = vmatprep.subr.bf16.mxu0 0
  %651 = vmatpush2.bf16.xpose.msra.mxu0 0
  %652 = vmatprep.subr.bf16.mxu0 0
  %653 = vmatpush2.bf16.xpose.msra.mxu0 0
  %654 = vmatprep.subr.bf16.mxu0 0
  %655 = vmatpush2.bf16.xpose.msra.mxu0 0
  %656 = vmatprep.subr.bf16.mxu0 0
  %657 = vmatpush2.bf16.xpose.msra.mxu0 0
  %658 = vmatprep.subr.bf16.mxu0 0
  %659 = vmatpush2.bf16.xpose.msra.mxu0 0
  %660 = vmatprep.subr.bf16.mxu0 0
  %661 = vmatpush2.bf16.xpose.msra.mxu0 0
  %662 = vmatprep.mubr.bf16.mxu0 0
  %663 = vmatmul.mubr.bf16.gmra.mxu0 %v607
  %v664 = vpop.f32.mrf.mxu0
  %v665 = vadd.f32 %v170, %v664
  %v666 = vpop.f32.mrf.mxu0
  %v667 = vpop.f32.mrf.mxu0
  %v668 = vadd.f32 %v171, %v667
  %v669 = vpop.f32.mrf.mxu0
  %670 = vmatprep.mubr.bf16.mxu0 0
  %671 = vmatmul.mubr.bf16.gmra.mxu0 %v610
  %v672 = vpop.f32.mrf.mxu0
  %v673 = vadd.f32 %v172, %v672
  %v674 = vpop.f32.mrf.mxu0
  %v675 = vpop.f32.mrf.mxu0
  %v676 = vadd.f32 %v173, %v675
  %v677 = vpop.f32.mrf.mxu0
  %678 = vmatprep.mubr.bf16.mxu0 0
  %679 = vmatmul.mubr.bf16.gmra.mxu0 %v613
  %v680 = vpop.f32.mrf.mxu0
  %v681 = vadd.f32 %v174, %v680
  %v682 = vpop.f32.mrf.mxu0
  %v683 = vpop.f32.mrf.mxu0
  %v684 = vadd.f32 %v175, %v683
  %v685 = vpop.f32.mrf.mxu0
  %686 = vmatprep.mubr.bf16.mxu0 0
  %687 = vmatmul.mubr.bf16.gmra.mxu0 %v616
  %v688 = vpop.f32.mrf.mxu0
  %v689 = vadd.f32 %v176, %v688
  %v690 = vpop.f32.mrf.mxu0
  %v691 = vpop.f32.mrf.mxu0
  %v692 = vadd.f32 %v177, %v691
  %v693 = vpop.f32.mrf.mxu0
  %694 = vdwg.mxu0
  %vm695 = vcmask 523264
  %v696 = vsel %vm695, %v278, -inf
  %697 = vmax.xlane.f32.xlu0 %v696
  %v698 = vpop.xlane.xlu0 %697
  %v699 = vsel %vm695, %v281, -inf
  %700 = vmax.xlane.f32.xlu0 %v699
  %v701 = vpop.xlane.xlu0 %700
  %v702 = vsel %vm695, %v286, -inf
  %703 = vmax.xlane.f32.xlu0 %v702
  %v704 = vpop.xlane.xlu0 %703
  %v705 = vsel %vm695, %v289, -inf
  %706 = vmax.xlane.f32.xlu0 %v705
  %v707 = vpop.xlane.xlu0 %706
  %v708 = vsel %vm695, %v294, -inf
  %709 = vmax.xlane.f32.xlu0 %v708
  %v710 = vpop.xlane.xlu0 %709
  %v711 = vsel %vm695, %v297, -inf
  %712 = vmax.xlane.f32.xlu0 %v711
  %v713 = vpop.xlane.xlu0 %712
  %v714 = vsel %vm695, %v302, -inf
  %715 = vmax.xlane.f32.xlu0 %v714
  %v716 = vpop.xlane.xlu0 %715
  %v717 = vsel %vm695, %v305, -inf
  %718 = vmax.xlane.f32.xlu0 %v717
  %v719 = vpop.xlane.xlu0 %718
  %v720 = vsel %vm695, %v407, -inf
  %721 = vmax.xlane.f32.xlu0 %v720
  %v722 = vpop.xlane.xlu0 %721
  %v723 = vsel %vm695, %v410, -inf
  %724 = vmax.xlane.f32.xlu0 %v723
  %v725 = vpop.xlane.xlu0 %724
  %v726 = vsel %vm695, %v415, -inf
  %727 = vmax.xlane.f32.xlu0 %v726
  %v728 = vpop.xlane.xlu0 %727
  %v729 = vsel %vm695, %v418, -inf
  %730 = vmax.xlane.f32.xlu0 %v729
  %v731 = vpop.xlane.xlu0 %730
  %v732 = vsel %vm695, %v423, -inf
  %733 = vmax.xlane.f32.xlu0 %v732
  %v734 = vpop.xlane.xlu0 %733
  %v735 = vsel %vm695, %v426, -inf
  %736 = vmax.xlane.f32.xlu0 %v735
  %v737 = vpop.xlane.xlu0 %736
  %v738 = vsel %vm695, %v431, -inf
  %739 = vmax.xlane.f32.xlu0 %v738
  %v740 = vpop.xlane.xlu0 %739
  %v741 = vsel %vm695, %v434, -inf
  %742 = vmax.xlane.f32.xlu0 %v741
  %v743 = vpop.xlane.xlu0 %742
  %v744 = vsel %vm695, %v536, -inf
  %745 = vmax.xlane.f32.xlu0 %v744
  %v746 = vpop.xlane.xlu0 %745
  %v747 = vsel %vm695, %v539, -inf
  %748 = vmax.xlane.f32.xlu0 %v747
  %v749 = vpop.xlane.xlu0 %748
  %v750 = vsel %vm695, %v544, -inf
  %751 = vmax.xlane.f32.xlu0 %v750
  %v752 = vpop.xlane.xlu0 %751
  %v753 = vsel %vm695, %v547, -inf
  %754 = vmax.xlane.f32.xlu0 %v753
  %v755 = vpop.xlane.xlu0 %754
  %v756 = vsel %vm695, %v552, -inf
  %757 = vmax.xlane.f32.xlu0 %v756
  %v758 = vpop.xlane.xlu0 %757
  %v759 = vsel %vm695, %v555, -inf
  %760 = vmax.xlane.f32.xlu0 %v759
  %v761 = vpop.xlane.xlu0 %760
  %v762 = vsel %vm695, %v560, -inf
  %763 = vmax.xlane.f32.xlu0 %v762
  %v764 = vpop.xlane.xlu0 %763
  %v765 = vsel %vm695, %v563, -inf
  %766 = vmax.xlane.f32.xlu0 %v765
  %v767 = vpop.xlane.xlu0 %766
  %v768 = vsel %vm695, %v665, -inf
  %769 = vmax.xlane.f32.xlu0 %v768
  %v770 = vpop.xlane.xlu0 %769
  %v771 = vsel %vm695, %v668, -inf
  %772 = vmax.xlane.f32.xlu0 %v771
  %v773 = vpop.xlane.xlu0 %772
  %v774 = vsel %vm695, %v673, -inf
  %775 = vmax.xlane.f32.xlu0 %v774
  %v776 = vpop.xlane.xlu0 %775
  %v777 = vsel %vm695, %v676, -inf
  %778 = vmax.xlane.f32.xlu0 %v777
  %v779 = vpop.xlane.xlu0 %778
  %v780 = vsel %vm695, %v681, -inf
  %781 = vmax.xlane.f32.xlu0 %v780
  %v782 = vpop.xlane.xlu0 %781
  %v783 = vsel %vm695, %v684, -inf
  %784 = vmax.xlane.f32.xlu0 %v783
  %v785 = vpop.xlane.xlu0 %784
  %v786 = vsel %vm695, %v689, -inf
  %787 = vmax.xlane.f32.xlu0 %v786
  %v788 = vpop.xlane.xlu0 %787
  %v789 = vsel %vm695, %v692, -inf
  %790 = vmax.xlane.f32.xlu0 %v789
  %v791 = vpop.xlane.xlu0 %790
  %v792 = vsub.f32 %v278, %v698
  %v793 = vsub.f32 %v281, %v701
  %v794 = vsub.f32 %v286, %v704
  %v795 = vsub.f32 %v289, %v707
  %v796 = vsub.f32 %v294, %v710
  %v797 = vsub.f32 %v297, %v713
  %v798 = vsub.f32 %v302, %v716
  %v799 = vsub.f32 %v305, %v719
  %v800 = vsub.f32 %v407, %v722
  %v801 = vsub.f32 %v410, %v725
  %v802 = vsub.f32 %v415, %v728
  %v803 = vsub.f32 %v418, %v731
  %v804 = vsub.f32 %v423, %v734
  %v805 = vsub.f32 %v426, %v737
  %v806 = vsub.f32 %v431, %v740
  %v807 = vsub.f32 %v434, %v743
  %v808 = vsub.f32 %v536, %v746
  %v809 = vsub.f32 %v539, %v749
  %v810 = vsub.f32 %v544, %v752
  %v811 = vsub.f32 %v547, %v755
  %v812 = vsub.f32 %v552, %v758
  %v813 = vsub.f32 %v555, %v761
  %v814 = vsub.f32 %v560, %v764
  %v815 = vsub.f32 %v563, %v767
  %v816 = vsub.f32 %v665, %v770
  %v817 = vsub.f32 %v668, %v773
  %v818 = vsub.f32 %v673, %v776
  %v819 = vsub.f32 %v676, %v779
  %v820 = vsub.f32 %v681, %v782
  %v821 = vsub.f32 %v684, %v785
  %v822 = vsub.f32 %v689, %v788
  %v823 = vsub.f32 %v692, %v791
  %v824 = vmul.f32 %v792, 1.442695
  %v825 = vpow.pop %v824
  %v826 = vmul.f32 %v793, 1.442695
  %v827 = vpow.pop %v826
  %v828 = vmul.f32 %v794, 1.442695
  %v829 = vpow.pop %v828
  %v830 = vmul.f32 %v795, 1.442695
  %v831 = vpow.pop %v830
  %v832 = vmul.f32 %v796, 1.442695
  %v833 = vpow.pop %v832
  %v834 = vmul.f32 %v797, 1.442695
  %v835 = vpow.pop %v834
  %v836 = vmul.f32 %v798, 1.442695
  %v837 = vpow.pop %v836
  %v838 = vmul.f32 %v799, 1.442695
  %v839 = vpow.pop %v838
  %v840 = vmul.f32 %v800, 1.442695
  %v841 = vpow.pop %v840
  %v842 = vmul.f32 %v801, 1.442695
  %v843 = vpow.pop %v842
  %v844 = vmul.f32 %v802, 1.442695
  %v845 = vpow.pop %v844
  %v846 = vmul.f32 %v803, 1.442695
  %v847 = vpow.pop %v846
  %v848 = vmul.f32 %v804, 1.442695
  %v849 = vpow.pop %v848
  %v850 = vmul.f32 %v805, 1.442695
  %v851 = vpow.pop %v850
  %v852 = vmul.f32 %v806, 1.442695
  %v853 = vpow.pop %v852
  %v854 = vmul.f32 %v807, 1.442695
  %v855 = vpow.pop %v854
  %v856 = vmul.f32 %v808, 1.442695
  %v857 = vpow.pop %v856
  %v858 = vmul.f32 %v809, 1.442695
  %v859 = vpow.pop %v858
  %v860 = vmul.f32 %v810, 1.442695
  %v861 = vpow.pop %v860
  %v862 = vmul.f32 %v811, 1.442695
  %v863 = vpow.pop %v862
  %v864 = vmul.f32 %v812, 1.442695
  %v865 = vpow.pop %v864
  %v866 = vmul.f32 %v813, 1.442695
  %v867 = vpow.pop %v866
  %v868 = vmul.f32 %v814, 1.442695
  %v869 = vpow.pop %v868
  %v870 = vmul.f32 %v815, 1.442695
  %v871 = vpow.pop %v870
  %v872 = vmul.f32 %v816, 1.442695
  %v873 = vpow.pop %v872
  %v874 = vmul.f32 %v817, 1.442695
  %v875 = vpow.pop %v874
  %v876 = vmul.f32 %v818, 1.442695
  %v877 = vpow.pop %v876
  %v878 = vmul.f32 %v819, 1.442695
  %v879 = vpow.pop %v878
  %v880 = vmul.f32 %v820, 1.442695
  %v881 = vpow.pop %v880
  %v882 = vmul.f32 %v821, 1.442695
  %v883 = vpow.pop %v882
  %v884 = vmul.f32 %v822, 1.442695
  %v885 = vpow.pop %v884
  %v886 = vmul.f32 %v823, 1.442695
  %v887 = vpow.pop %v886
  %v888 = vsel %vm695, %v825, 0.0
  %889 = vadd.xlane.f32.xlu0 %v888
  %v890 = vpop.xlane.xlu0 %889
  %v891 = vsel %vm695, %v827, 0.0
  %892 = vadd.xlane.f32.xlu0 %v891
  %v893 = vpop.xlane.xlu0 %892
  %v894 = vsel %vm695, %v829, 0.0
  %895 = vadd.xlane.f32.xlu0 %v894
  %v896 = vpop.xlane.xlu0 %895
  %v897 = vsel %vm695, %v831, 0.0
  %898 = vadd.xlane.f32.xlu0 %v897
  %v899 = vpop.xlane.xlu0 %898
  %v900 = vsel %vm695, %v833, 0.0
  %901 = vadd.xlane.f32.xlu0 %v900
  %v902 = vpop.xlane.xlu0 %901
  %v903 = vsel %vm695, %v835, 0.0
  %904 = vadd.xlane.f32.xlu0 %v903
  %v905 = vpop.xlane.xlu0 %904
  %v906 = vsel %vm695, %v837, 0.0
  %907 = vadd.xlane.f32.xlu0 %v906
  %v908 = vpop.xlane.xlu0 %907
  %v909 = vsel %vm695, %v839, 0.0
  %910 = vadd.xlane.f32.xlu0 %v909
  %v911 = vpop.xlane.xlu0 %910
  %v912 = vsel %vm695, %v841, 0.0
  %913 = vadd.xlane.f32.xlu0 %v912
  %v914 = vpop.xlane.xlu0 %913
  %v915 = vsel %vm695, %v843, 0.0
  %916 = vadd.xlane.f32.xlu0 %v915
  %v917 = vpop.xlane.xlu0 %916
  %v918 = vsel %vm695, %v845, 0.0
  %919 = vadd.xlane.f32.xlu0 %v918
  %v920 = vpop.xlane.xlu0 %919
  %v921 = vsel %vm695, %v847, 0.0
  %922 = vadd.xlane.f32.xlu0 %v921
  %v923 = vpop.xlane.xlu0 %922
  %v924 = vsel %vm695, %v849, 0.0
  %925 = vadd.xlane.f32.xlu0 %v924
  %v926 = vpop.xlane.xlu0 %925
  %v927 = vsel %vm695, %v851, 0.0
  %928 = vadd.xlane.f32.xlu0 %v927
  %v929 = vpop.xlane.xlu0 %928
  %v930 = vsel %vm695, %v853, 0.0
  %931 = vadd.xlane.f32.xlu0 %v930
  %v932 = vpop.xlane.xlu0 %931
  %v933 = vsel %vm695, %v855, 0.0
  %934 = vadd.xlane.f32.xlu0 %v933
  %v935 = vpop.xlane.xlu0 %934
  %v936 = vsel %vm695, %v857, 0.0
  %937 = vadd.xlane.f32.xlu0 %v936
  %v938 = vpop.xlane.xlu0 %937
  %v939 = vsel %vm695, %v859, 0.0
  %940 = vadd.xlane.f32.xlu0 %v939
  %v941 = vpop.xlane.xlu0 %940
  %v942 = vsel %vm695, %v861, 0.0
  %943 = vadd.xlane.f32.xlu0 %v942
  %v944 = vpop.xlane.xlu0 %943
  %v945 = vsel %vm695, %v863, 0.0
  %946 = vadd.xlane.f32.xlu0 %v945
  %v947 = vpop.xlane.xlu0 %946
  %v948 = vsel %vm695, %v865, 0.0
  %949 = vadd.xlane.f32.xlu0 %v948
  %v950 = vpop.xlane.xlu0 %949
  %v951 = vsel %vm695, %v867, 0.0
  %952 = vadd.xlane.f32.xlu0 %v951
  %v953 = vpop.xlane.xlu0 %952
  %v954 = vsel %vm695, %v869, 0.0
  %955 = vadd.xlane.f32.xlu0 %v954
  %v956 = vpop.xlane.xlu0 %955
  %v957 = vsel %vm695, %v871, 0.0
  %958 = vadd.xlane.f32.xlu0 %v957
  %v959 = vpop.xlane.xlu0 %958
  %v960 = vsel %vm695, %v873, 0.0
  %961 = vadd.xlane.f32.xlu0 %v960
  %v962 = vpop.xlane.xlu0 %961
  %v963 = vsel %vm695, %v875, 0.0
  %964 = vadd.xlane.f32.xlu0 %v963
  %v965 = vpop.xlane.xlu0 %964
  %v966 = vsel %vm695, %v877, 0.0
  %967 = vadd.xlane.f32.xlu0 %v966
  %v968 = vpop.xlane.xlu0 %967
  %v969 = vsel %vm695, %v879, 0.0
  %970 = vadd.xlane.f32.xlu0 %v969
  %v971 = vpop.xlane.xlu0 %970
  %v972 = vsel %vm695, %v881, 0.0
  %973 = vadd.xlane.f32.xlu0 %v972
  %v974 = vpop.xlane.xlu0 %973
  %v975 = vsel %vm695, %v883, 0.0
  %976 = vadd.xlane.f32.xlu0 %v975
  %v977 = vpop.xlane.xlu0 %976
  %v978 = vsel %vm695, %v885, 0.0
  %979 = vadd.xlane.f32.xlu0 %v978
  %v980 = vpop.xlane.xlu0 %979
  %v981 = vsel %vm695, %v887, 0.0
  %982 = vadd.xlane.f32.xlu0 %v981
  %v983 = vpop.xlane.xlu0 %982
  %v984 = vrcp.pop %v890
  %v985 = vrcp.pop %v893
  %v986 = vrcp.pop %v896
  %v987 = vrcp.pop %v899
  %v988 = vrcp.pop %v902
  %v989 = vrcp.pop %v905
  %v990 = vrcp.pop %v908
  %v991 = vrcp.pop %v911
  %v992 = vrcp.pop %v914
  %v993 = vrcp.pop %v917
  %v994 = vrcp.pop %v920
  %v995 = vrcp.pop %v923
  %v996 = vrcp.pop %v926
  %v997 = vrcp.pop %v929
  %v998 = vrcp.pop %v932
  %v999 = vrcp.pop %v935
  %v1000 = vrcp.pop %v938
  %v1001 = vrcp.pop %v941
  %v1002 = vrcp.pop %v944
  %v1003 = vrcp.pop %v947
  %v1004 = vrcp.pop %v950
  %v1005 = vrcp.pop %v953
  %v1006 = vrcp.pop %v956
  %v1007 = vrcp.pop %v959
  %v1008 = vrcp.pop %v962
  %v1009 = vrcp.pop %v965
  %v1010 = vrcp.pop %v968
  %v1011 = vrcp.pop %v971
  %v1012 = vrcp.pop %v974
  %v1013 = vrcp.pop %v977
  %v1014 = vrcp.pop %v980
  %v1015 = vrcp.pop %v983
  %v1016 = vmul.f32 %v825, %v984
  %v1017 = vmul.f32 %v827, %v985
  %v1018 = vmul.f32 %v829, %v986
  %v1019 = vmul.f32 %v831, %v987
  %v1020 = vmul.f32 %v833, %v988
  %v1021 = vmul.f32 %v835, %v989
  %v1022 = vmul.f32 %v837, %v990
  %v1023 = vmul.f32 %v839, %v991
  %v1024 = vmul.f32 %v841, %v992
  %v1025 = vmul.f32 %v843, %v993
  %v1026 = vmul.f32 %v845, %v994
  %v1027 = vmul.f32 %v847, %v995
  %v1028 = vmul.f32 %v849, %v996
  %v1029 = vmul.f32 %v851, %v997
  %v1030 = vmul.f32 %v853, %v998
  %v1031 = vmul.f32 %v855, %v999
  %v1032 = vmul.f32 %v857, %v1000
  %v1033 = vmul.f32 %v859, %v1001
  %v1034 = vmul.f32 %v861, %v1002
  %v1035 = vmul.f32 %v863, %v1003
  %v1036 = vmul.f32 %v865, %v1004
  %v1037 = vmul.f32 %v867, %v1005
  %v1038 = vmul.f32 %v869, %v1006
  %v1039 = vmul.f32 %v871, %v1007
  %v1040 = vmul.f32 %v873, %v1008
  %v1041 = vmul.f32 %v875, %v1009
  %v1042 = vmul.f32 %v877, %v1010
  %v1043 = vmul.f32 %v879, %v1011
  %v1044 = vmul.f32 %v881, %v1012
  %v1045 = vmul.f32 %v883, %v1013
  %v1046 = vmul.f32 %v885, %v1014
  %v1047 = vmul.f32 %v887, %v1015
  %v1048 = vpack.c.bf16 %v1017, %v1016
  %v1049 = vpack.c.bf16 %v1019, %v1018
  %v1050 = vpack.c.bf16 %v1021, %v1020
  %v1051 = vpack.c.bf16 %v1023, %v1022
  %v1052 = vpack.c.bf16 %v1025, %v1024
  %v1053 = vpack.c.bf16 %v1027, %v1026
  %v1054 = vpack.c.bf16 %v1029, %v1028
  %v1055 = vpack.c.bf16 %v1031, %v1030
  %v1056 = vpack.c.bf16 %v1033, %v1032
  %v1057 = vpack.c.bf16 %v1035, %v1034
  %v1058 = vpack.c.bf16 %v1037, %v1036
  %v1059 = vpack.c.bf16 %v1039, %v1038
  %v1060 = vpack.c.bf16 %v1041, %v1040
  %v1061 = vpack.c.bf16 %v1043, %v1042
  %v1062 = vpack.c.bf16 %v1045, %v1044
  %v1063 = vpack.c.bf16 %v1047, %v1046
  %v1072 = vunpack.c.l.b16 %v82
  %v1073 = vunpack.c.l.b16 %v83
  %v1074 = vunpack.c.l.b16 %v84
  %v1075 = vunpack.c.l.b16 %v85
  %v1076 = vunpack.c.l.b16 %v86
  %v1077 = vunpack.c.l.b16 %v87
  %v1078 = vunpack.c.l.b16 %v88
  %v1079 = vunpack.c.l.b16 %v89
  %v1080 = vpack.c.b16 %v1073, %v1072
  %v1081 = vpack.c.b16 %v1075, %v1074
  %v1082 = vpack.c.b16 %v1077, %v1076
  %v1083 = vpack.c.b16 %v1079, %v1078
  %v1089 = vsel %vm695, %v1048, 0
  %v1092 = vsel %vm695, %v1049, 0
  %v1095 = vsel %vm695, %v1050, 0
  %v1098 = vsel %vm695, %v1051, 0
  %1100 = vmatprep.subr.bf16.mxu0 0
  %1101 = vmatpush1.bf16.msra.mxu0 0
  %1102 = vmatprep.subr.bf16.mxu0 0
  %1103 = vmatpush1.bf16.msra.mxu0 0
  %1104 = vmatprep.subr.bf16.mxu0 0
  %1105 = vmatpush1.bf16.msra.mxu0 0
  %1106 = vmatprep.subr.bf16.mxu0 0
  %1107 = vmatpush1.bf16.msra.mxu0 0
  %1108 = vmatprep.subr.bf16.mxu0 0
  %1109 = vmatpush1.bf16.msra.mxu0 %v1083
  %1110 = vmatprep.subr.bf16.mxu0 0
  %1111 = vmatpush1.bf16.msra.mxu0 %v1082
  %1112 = vmatprep.subr.bf16.mxu0 0
  %1113 = vmatpush1.bf16.msra.mxu0 %v1081
  %1114 = vmatprep.subr.bf16.mxu0 0
  %1115 = vmatpush1.bf16.msra.mxu0 %v1080
  %1116 = vmatprep.subr.bf16.mxu0 0
  %1117 = vmatpush2.bf16.msra.mxu0 0
  %1118 = vmatprep.subr.bf16.mxu0 0
  %1119 = vmatpush2.bf16.msra.mxu0 0
  %1120 = vmatprep.subr.bf16.mxu0 0
  %1121 = vmatpush2.bf16.msra.mxu0 0
  %1122 = vmatprep.subr.bf16.mxu0 0
  %1123 = vmatpush2.bf16.msra.mxu0 0
  %1124 = vmatprep.subr.bf16.mxu0 0
  %1125 = vmatpush2.bf16.msra.mxu0 0
  %1126 = vmatprep.subr.bf16.mxu0 0
  %1127 = vmatpush2.bf16.msra.mxu0 0
  %1128 = vmatprep.subr.bf16.mxu0 0
  %1129 = vmatpush2.bf16.msra.mxu0 0
  %1130 = vmatprep.subr.bf16.mxu0 0
  %1131 = vmatpush2.bf16.msra.mxu0 0
  %1132 = vmatprep.mubr.bf16.mxu0 0
  %1133 = vmatmul.mubr.bf16.gmra.mxu0 %v1089
  %v1134 = vpop.f32.mrf.mxu0
  %v1135 = vadd.f32 0.0, %v1134
  %v1136 = vpop.f32.mrf.mxu0
  %v1137 = vpop.f32.mrf.mxu0
  %v1138 = vadd.f32 0.0, %v1137
  %v1139 = vpop.f32.mrf.mxu0
  %1140 = vmatprep.mubr.bf16.mxu0 0
  %1141 = vmatmul.mubr.bf16.gmra.mxu0 %v1092
  %v1142 = vpop.f32.mrf.mxu0
  %v1143 = vadd.f32 0.0, %v1142
  %v1144 = vpop.f32.mrf.mxu0
  %v1145 = vpop.f32.mrf.mxu0
  %v1146 = vadd.f32 0.0, %v1145
  %v1147 = vpop.f32.mrf.mxu0
  %1148 = vmatprep.mubr.bf16.mxu0 0
  %1149 = vmatmul.mubr.bf16.gmra.mxu0 %v1095
  %v1150 = vpop.f32.mrf.mxu0
  %v1151 = vadd.f32 0.0, %v1150
  %v1152 = vpop.f32.mrf.mxu0
  %v1153 = vpop.f32.mrf.mxu0
  %v1154 = vadd.f32 0.0, %v1153
  %v1155 = vpop.f32.mrf.mxu0
  %1156 = vmatprep.mubr.bf16.mxu0 0
  %1157 = vmatmul.mubr.bf16.gmra.mxu0 %v1098
  %v1158 = vpop.f32.mrf.mxu0
  %v1159 = vadd.f32 0.0, %v1158
  %v1160 = vpop.f32.mrf.mxu0
  %v1161 = vpop.f32.mrf.mxu0
  %v1162 = vadd.f32 0.0, %v1161
  %v1163 = vpop.f32.mrf.mxu0
  %1164 = vdwg.mxu0
  %v1173 = vunpack.c.l.b16 %v90
  %v1174 = vunpack.c.l.b16 %v91
  %v1175 = vunpack.c.l.b16 %v92
  %v1176 = vunpack.c.l.b16 %v93
  %v1177 = vunpack.c.l.b16 %v94
  %v1178 = vunpack.c.l.b16 %v95
  %v1179 = vunpack.c.l.b16 %v96
  %v1180 = vunpack.c.l.b16 %v97
  %v1181 = vpack.c.b16 %v1174, %v1173
  %v1182 = vpack.c.b16 %v1176, %v1175
  %v1183 = vpack.c.b16 %v1178, %v1177
  %v1184 = vpack.c.b16 %v1180, %v1179
  %v1190 = vsel %vm695, %v1052, 0
  %v1193 = vsel %vm695, %v1053, 0
  %v1196 = vsel %vm695, %v1054, 0
  %v1199 = vsel %vm695, %v1055, 0
  %1201 = vmatprep.subr.bf16.mxu0 0
  %1202 = vmatpush1.bf16.msra.mxu0 0
  %1203 = vmatprep.subr.bf16.mxu0 0
  %1204 = vmatpush1.bf16.msra.mxu0 0
  %1205 = vmatprep.subr.bf16.mxu0 0
  %1206 = vmatpush1.bf16.msra.mxu0 0
  %1207 = vmatprep.subr.bf16.mxu0 0
  %1208 = vmatpush1.bf16.msra.mxu0 0
  %1209 = vmatprep.subr.bf16.mxu0 0
  %1210 = vmatpush1.bf16.msra.mxu0 %v1184
  %1211 = vmatprep.subr.bf16.mxu0 0
  %1212 = vmatpush1.bf16.msra.mxu0 %v1183
  %1213 = vmatprep.subr.bf16.mxu0 0
  %1214 = vmatpush1.bf16.msra.mxu0 %v1182
  %1215 = vmatprep.subr.bf16.mxu0 0
  %1216 = vmatpush1.bf16.msra.mxu0 %v1181
  %1217 = vmatprep.subr.bf16.mxu0 0
  %1218 = vmatpush2.bf16.msra.mxu0 0
  %1219 = vmatprep.subr.bf16.mxu0 0
  %1220 = vmatpush2.bf16.msra.mxu0 0
  %1221 = vmatprep.subr.bf16.mxu0 0
  %1222 = vmatpush2.bf16.msra.mxu0 0
  %1223 = vmatprep.subr.bf16.mxu0 0
  %1224 = vmatpush2.bf16.msra.mxu0 0
  %1225 = vmatprep.subr.bf16.mxu0 0
  %1226 = vmatpush2.bf16.msra.mxu0 0
  %1227 = vmatprep.subr.bf16.mxu0 0
  %1228 = vmatpush2.bf16.msra.mxu0 0
  %1229 = vmatprep.subr.bf16.mxu0 0
  %1230 = vmatpush2.bf16.msra.mxu0 0
  %1231 = vmatprep.subr.bf16.mxu0 0
  %1232 = vmatpush2.bf16.msra.mxu0 0
  %1233 = vmatprep.mubr.bf16.mxu0 0
  %1234 = vmatmul.mubr.bf16.gmra.mxu0 %v1190
  %v1235 = vpop.f32.mrf.mxu0
  %v1236 = vadd.f32 0.0, %v1235
  %v1237 = vpop.f32.mrf.mxu0
  %v1238 = vpop.f32.mrf.mxu0
  %v1239 = vadd.f32 0.0, %v1238
  %v1240 = vpop.f32.mrf.mxu0
  %1241 = vmatprep.mubr.bf16.mxu0 0
  %1242 = vmatmul.mubr.bf16.gmra.mxu0 %v1193
  %v1243 = vpop.f32.mrf.mxu0
  %v1244 = vadd.f32 0.0, %v1243
  %v1245 = vpop.f32.mrf.mxu0
  %v1246 = vpop.f32.mrf.mxu0
  %v1247 = vadd.f32 0.0, %v1246
  %v1248 = vpop.f32.mrf.mxu0
  %1249 = vmatprep.mubr.bf16.mxu0 0
  %1250 = vmatmul.mubr.bf16.gmra.mxu0 %v1196
  %v1251 = vpop.f32.mrf.mxu0
  %v1252 = vadd.f32 0.0, %v1251
  %v1253 = vpop.f32.mrf.mxu0
  %v1254 = vpop.f32.mrf.mxu0
  %v1255 = vadd.f32 0.0, %v1254
  %v1256 = vpop.f32.mrf.mxu0
  %1257 = vmatprep.mubr.bf16.mxu0 0
  %1258 = vmatmul.mubr.bf16.gmra.mxu0 %v1199
  %v1259 = vpop.f32.mrf.mxu0
  %v1260 = vadd.f32 0.0, %v1259
  %v1261 = vpop.f32.mrf.mxu0
  %v1262 = vpop.f32.mrf.mxu0
  %v1263 = vadd.f32 0.0, %v1262
  %v1264 = vpop.f32.mrf.mxu0
  %1265 = vdwg.mxu0
  %v1274 = vunpack.c.l.b16 %v98
  %v1275 = vunpack.c.l.b16 %v99
  %v1276 = vunpack.c.l.b16 %v100
  %v1277 = vunpack.c.l.b16 %v101
  %v1278 = vunpack.c.l.b16 %v102
  %v1279 = vunpack.c.l.b16 %v103
  %v1280 = vunpack.c.l.b16 %v104
  %v1281 = vunpack.c.l.b16 %v105
  %v1282 = vpack.c.b16 %v1275, %v1274
  %v1283 = vpack.c.b16 %v1277, %v1276
  %v1284 = vpack.c.b16 %v1279, %v1278
  %v1285 = vpack.c.b16 %v1281, %v1280
  %v1291 = vsel %vm695, %v1056, 0
  %v1294 = vsel %vm695, %v1057, 0
  %v1297 = vsel %vm695, %v1058, 0
  %v1300 = vsel %vm695, %v1059, 0
  %1302 = vmatprep.subr.bf16.mxu0 0
  %1303 = vmatpush1.bf16.msra.mxu0 0
  %1304 = vmatprep.subr.bf16.mxu0 0
  %1305 = vmatpush1.bf16.msra.mxu0 0
  %1306 = vmatprep.subr.bf16.mxu0 0
  %1307 = vmatpush1.bf16.msra.mxu0 0
  %1308 = vmatprep.subr.bf16.mxu0 0
  %1309 = vmatpush1.bf16.msra.mxu0 0
  %1310 = vmatprep.subr.bf16.mxu0 0
  %1311 = vmatpush1.bf16.msra.mxu0 %v1285
  %1312 = vmatprep.subr.bf16.mxu0 0
  %1313 = vmatpush1.bf16.msra.mxu0 %v1284
  %1314 = vmatprep.subr.bf16.mxu0 0
  %1315 = vmatpush1.bf16.msra.mxu0 %v1283
  %1316 = vmatprep.subr.bf16.mxu0 0
  %1317 = vmatpush1.bf16.msra.mxu0 %v1282
  %1318 = vmatprep.subr.bf16.mxu0 0
  %1319 = vmatpush2.bf16.msra.mxu0 0
  %1320 = vmatprep.subr.bf16.mxu0 0
  %1321 = vmatpush2.bf16.msra.mxu0 0
  %1322 = vmatprep.subr.bf16.mxu0 0
  %1323 = vmatpush2.bf16.msra.mxu0 0
  %1324 = vmatprep.subr.bf16.mxu0 0
  %1325 = vmatpush2.bf16.msra.mxu0 0
  %1326 = vmatprep.subr.bf16.mxu0 0
  %1327 = vmatpush2.bf16.msra.mxu0 0
  %1328 = vmatprep.subr.bf16.mxu0 0
  %1329 = vmatpush2.bf16.msra.mxu0 0
  %1330 = vmatprep.subr.bf16.mxu0 0
  %1331 = vmatpush2.bf16.msra.mxu0 0
  %1332 = vmatprep.subr.bf16.mxu0 0
  %1333 = vmatpush2.bf16.msra.mxu0 0
  %1334 = vmatprep.mubr.bf16.mxu0 0
  %1335 = vmatmul.mubr.bf16.gmra.mxu0 %v1291
  %v1336 = vpop.f32.mrf.mxu0
  %v1337 = vadd.f32 0.0, %v1336
  %v1338 = vpop.f32.mrf.mxu0
  %v1339 = vpop.f32.mrf.mxu0
  %v1340 = vadd.f32 0.0, %v1339
  %v1341 = vpop.f32.mrf.mxu0
  %1342 = vmatprep.mubr.bf16.mxu0 0
  %1343 = vmatmul.mubr.bf16.gmra.mxu0 %v1294
  %v1344 = vpop.f32.mrf.mxu0
  %v1345 = vadd.f32 0.0, %v1344
  %v1346 = vpop.f32.mrf.mxu0
  %v1347 = vpop.f32.mrf.mxu0
  %v1348 = vadd.f32 0.0, %v1347
  %v1349 = vpop.f32.mrf.mxu0
  %1350 = vmatprep.mubr.bf16.mxu0 0
  %1351 = vmatmul.mubr.bf16.gmra.mxu0 %v1297
  %v1352 = vpop.f32.mrf.mxu0
  %v1353 = vadd.f32 0.0, %v1352
  %v1354 = vpop.f32.mrf.mxu0
  %v1355 = vpop.f32.mrf.mxu0
  %v1356 = vadd.f32 0.0, %v1355
  %v1357 = vpop.f32.mrf.mxu0
  %1358 = vmatprep.mubr.bf16.mxu0 0
  %1359 = vmatmul.mubr.bf16.gmra.mxu0 %v1300
  %v1360 = vpop.f32.mrf.mxu0
  %v1361 = vadd.f32 0.0, %v1360
  %v1362 = vpop.f32.mrf.mxu0
  %v1363 = vpop.f32.mrf.mxu0
  %v1364 = vadd.f32 0.0, %v1363
  %v1365 = vpop.f32.mrf.mxu0
  %1366 = vdwg.mxu0
  %v1375 = vunpack.c.l.b16 %v106
  %v1376 = vunpack.c.l.b16 %v107
  %v1377 = vunpack.c.l.b16 %v108
  %v1378 = vunpack.c.l.b16 %v109
  %v1379 = vunpack.c.l.b16 %v110
  %v1380 = vunpack.c.l.b16 %v111
  %v1381 = vunpack.c.l.b16 %v112
  %v1382 = vunpack.c.l.b16 %v113
  %v1383 = vpack.c.b16 %v1376, %v1375
  %v1384 = vpack.c.b16 %v1378, %v1377
  %v1385 = vpack.c.b16 %v1380, %v1379
  %v1386 = vpack.c.b16 %v1382, %v1381
  %v1392 = vsel %vm695, %v1060, 0
  %v1395 = vsel %vm695, %v1061, 0
  %v1398 = vsel %vm695, %v1062, 0
  %v1401 = vsel %vm695, %v1063, 0
  %1403 = vmatprep.subr.bf16.mxu0 0
  %1404 = vmatpush1.bf16.msra.mxu0 0
  %1405 = vmatprep.subr.bf16.mxu0 0
  %1406 = vmatpush1.bf16.msra.mxu0 0
  %1407 = vmatprep.subr.bf16.mxu0 0
  %1408 = vmatpush1.bf16.msra.mxu0 0
  %1409 = vmatprep.subr.bf16.mxu0 0
  %1410 = vmatpush1.bf16.msra.mxu0 0
  %1411 = vmatprep.subr.bf16.mxu0 0
  %1412 = vmatpush1.bf16.msra.mxu0 %v1386
  %1413 = vmatprep.subr.bf16.mxu0 0
  %1414 = vmatpush1.bf16.msra.mxu0 %v1385
  %1415 = vmatprep.subr.bf16.mxu0 0
  %1416 = vmatpush1.bf16.msra.mxu0 %v1384
  %1417 = vmatprep.subr.bf16.mxu0 0
  %1418 = vmatpush1.bf16.msra.mxu0 %v1383
  %1419 = vmatprep.subr.bf16.mxu0 0
  %1420 = vmatpush2.bf16.msra.mxu0 0
  %1421 = vmatprep.subr.bf16.mxu0 0
  %1422 = vmatpush2.bf16.msra.mxu0 0
  %1423 = vmatprep.subr.bf16.mxu0 0
  %1424 = vmatpush2.bf16.msra.mxu0 0
  %1425 = vmatprep.subr.bf16.mxu0 0
  %1426 = vmatpush2.bf16.msra.mxu0 0
  %1427 = vmatprep.subr.bf16.mxu0 0
  %1428 = vmatpush2.bf16.msra.mxu0 0
  %1429 = vmatprep.subr.bf16.mxu0 0
  %1430 = vmatpush2.bf16.msra.mxu0 0
  %1431 = vmatprep.subr.bf16.mxu0 0
  %1432 = vmatpush2.bf16.msra.mxu0 0
  %1433 = vmatprep.subr.bf16.mxu0 0
  %1434 = vmatpush2.bf16.msra.mxu0 0
  %1435 = vmatprep.mubr.bf16.mxu0 0
  %1436 = vmatmul.mubr.bf16.gmra.mxu0 %v1392
  %v1437 = vpop.f32.mrf.mxu0
  %v1438 = vadd.f32 0.0, %v1437
  %v1439 = vpop.f32.mrf.mxu0
  %v1440 = vpop.f32.mrf.mxu0
  %v1441 = vadd.f32 0.0, %v1440
  %v1442 = vpop.f32.mrf.mxu0
  %1443 = vmatprep.mubr.bf16.mxu0 0
  %1444 = vmatmul.mubr.bf16.gmra.mxu0 %v1395
  %v1445 = vpop.f32.mrf.mxu0
  %v1446 = vadd.f32 0.0, %v1445
  %v1447 = vpop.f32.mrf.mxu0
  %v1448 = vpop.f32.mrf.mxu0
  %v1449 = vadd.f32 0.0, %v1448
  %v1450 = vpop.f32.mrf.mxu0
  %1451 = vmatprep.mubr.bf16.mxu0 0
  %1452 = vmatmul.mubr.bf16.gmra.mxu0 %v1398
  %v1453 = vpop.f32.mrf.mxu0
  %v1454 = vadd.f32 0.0, %v1453
  %v1455 = vpop.f32.mrf.mxu0
  %v1456 = vpop.f32.mrf.mxu0
  %v1457 = vadd.f32 0.0, %v1456
  %v1458 = vpop.f32.mrf.mxu0
  %1459 = vmatprep.mubr.bf16.mxu0 0
  %1460 = vmatmul.mubr.bf16.gmra.mxu0 %v1401
  %v1461 = vpop.f32.mrf.mxu0
  %v1462 = vadd.f32 0.0, %v1461
  %v1463 = vpop.f32.mrf.mxu0
  %v1464 = vpop.f32.mrf.mxu0
  %v1465 = vadd.f32 0.0, %v1464
  %v1466 = vpop.f32.mrf.mxu0
  %1467 = vdwg.mxu0
  %v1468 = vpack.c.bf16 %v1138, %v1135
  %v1469 = vpack.c.bf16 %v1146, %v1143
  %v1470 = vpack.c.bf16 %v1154, %v1151
  %v1471 = vpack.c.bf16 %v1162, %v1159
  %v1472 = vpack.c.bf16 %v1239, %v1236
  %v1473 = vpack.c.bf16 %v1247, %v1244
  %v1474 = vpack.c.bf16 %v1255, %v1252
  %v1475 = vpack.c.bf16 %v1263, %v1260
  %v1476 = vpack.c.bf16 %v1340, %v1337
  %v1477 = vpack.c.bf16 %v1348, %v1345
  %v1478 = vpack.c.bf16 %v1356, %v1353
  %v1479 = vpack.c.bf16 %v1364, %v1361
  %v1480 = vpack.c.bf16 %v1441, %v1438
  %v1481 = vpack.c.bf16 %v1449, %v1446
  %v1482 = vpack.c.bf16 %v1457, %v1454
  %v1483 = vpack.c.bf16 %v1465, %v1462
  %v1500 = vunpack.c.l.b16 %v1468
  %v1501 = vunpack.c.h.b16 %v1468
  %v1502 = vunpack.c.l.b16 %v1469
  %v1503 = vunpack.c.h.b16 %v1469
  %v1504 = vunpack.c.l.b16 %v1470
  %v1505 = vunpack.c.h.b16 %v1470
  %v1506 = vunpack.c.l.b16 %v1471
  %v1507 = vunpack.c.h.b16 %v1471
  %v1508 = vunpack.c.l.b16 %v1472
  %v1509 = vunpack.c.h.b16 %v1472
  %v1510 = vunpack.c.l.b16 %v1473
  %v1511 = vunpack.c.h.b16 %v1473
  %v1512 = vunpack.c.l.b16 %v1474
  %v1513 = vunpack.c.h.b16 %v1474
  %v1514 = vunpack.c.l.b16 %v1475
  %v1515 = vunpack.c.h.b16 %v1475
  %v1516 = vunpack.c.l.b16 %v1476
  %v1517 = vunpack.c.h.b16 %v1476
  %v1518 = vunpack.c.l.b16 %v1477
  %v1519 = vunpack.c.h.b16 %v1477
  %v1520 = vunpack.c.l.b16 %v1478
  %v1521 = vunpack.c.h.b16 %v1478
  %v1522 = vunpack.c.l.b16 %v1479
  %v1523 = vunpack.c.h.b16 %v1479
  %v1524 = vunpack.c.l.b16 %v1480
  %v1525 = vunpack.c.h.b16 %v1480
  %v1526 = vunpack.c.l.b16 %v1481
  %v1527 = vunpack.c.h.b16 %v1481
  %v1528 = vunpack.c.l.b16 %v1482
  %v1529 = vunpack.c.h.b16 %v1482
  %v1530 = vunpack.c.l.b16 %v1483
  %v1531 = vunpack.c.h.b16 %v1483
  %v1532 = vpack.c.b16 %v1500, %v1500
  %v1533 = vpack.c.b16 %v1501, %v1501
  %v1534 = vpack.c.b16 %v1502, %v1502
  %v1535 = vpack.c.b16 %v1503, %v1503
  %v1536 = vpack.c.b16 %v1504, %v1504
  %v1537 = vpack.c.b16 %v1505, %v1505
  %v1538 = vpack.c.b16 %v1506, %v1506
  %v1539 = vpack.c.b16 %v1507, %v1507
  %v1540 = vpack.c.b16 %v1508, %v1508
  %v1541 = vpack.c.b16 %v1509, %v1509
  %v1542 = vpack.c.b16 %v1510, %v1510
  %v1543 = vpack.c.b16 %v1511, %v1511
  %v1544 = vpack.c.b16 %v1512, %v1512
  %v1545 = vpack.c.b16 %v1513, %v1513
  %v1546 = vpack.c.b16 %v1514, %v1514
  %v1547 = vpack.c.b16 %v1515, %v1515
  %v1548 = vpack.c.b16 %v1516, %v1516
  %v1549 = vpack.c.b16 %v1517, %v1517
  %v1550 = vpack.c.b16 %v1518, %v1518
  %v1551 = vpack.c.b16 %v1519, %v1519
  %v1552 = vpack.c.b16 %v1520, %v1520
  %v1553 = vpack.c.b16 %v1521, %v1521
  %v1554 = vpack.c.b16 %v1522, %v1522
  %v1555 = vpack.c.b16 %v1523, %v1523
  %v1556 = vpack.c.b16 %v1524, %v1524
  %v1557 = vpack.c.b16 %v1525, %v1525
  %v1558 = vpack.c.b16 %v1526, %v1526
  %v1559 = vpack.c.b16 %v1527, %v1527
  %v1560 = vpack.c.b16 %v1528, %v1528
  %v1561 = vpack.c.b16 %v1529, %v1529
  %v1562 = vpack.c.b16 %v1530, %v1530
  %v1563 = vpack.c.b16 %v1531, %v1531
  %vm1596 = vcmask 60416
  %1597 = vst.msk [vmem:[%s4] sm:$0xf] %vm1596, %v1532
  %1598 = vst.msk [vmem:[%s4 + $0x4] sm:$0xf] %vm1596, %v1533
  %1599 = vst.msk [vmem:[%s4 + $0x8] sm:$0xf] %vm1596, %v1534
  %1600 = vst.msk [vmem:[%s4 + $0xc] sm:$0xf] %vm1596, %v1535
  %1601 = vst.msk [vmem:[%s4 + $0x10] sm:$0xf] %vm1596, %v1536
  %1602 = vst.msk [vmem:[%s4 + $0x14] sm:$0xf] %vm1596, %v1537
  %1603 = vst.msk [vmem:[%s4 + $0x18] sm:$0xf] %vm1596, %v1538
  %1604 = vst.msk [vmem:[%s4 + $0x1c] sm:$0xf] %vm1596, %v1539
  %1605 = vst.msk [vmem:[%s4 + $0x20] sm:$0xf] %vm1596, %v1540
  %1606 = vst.msk [vmem:[%s4 + $0x24] sm:$0xf] %vm1596, %v1541
  %1607 = vst.msk [vmem:[%s4 + $0x28] sm:$0xf] %vm1596, %v1542
  %1608 = vst.msk [vmem:[%s4 + $0x2c] sm:$0xf] %vm1596, %v1543
  %1609 = vst.msk [vmem:[%s4 + $0x30] sm:$0xf] %vm1596, %v1544
  %1610 = vst.msk [vmem:[%s4 + $0x34] sm:$0xf] %vm1596, %v1545
  %1611 = vst.msk [vmem:[%s4 + $0x38] sm:$0xf] %vm1596, %v1546
  %1612 = vst.msk [vmem:[%s4 + $0x3c] sm:$0xf] %vm1596, %v1547
  %1613 = vst.msk [vmem:[%s4 + $0x40] sm:$0xf] %vm1596, %v1548
  %1614 = vst.msk [vmem:[%s4 + $0x44] sm:$0xf] %vm1596, %v1549
  %1615 = vst.msk [vmem:[%s4 + $0x48] sm:$0xf] %vm1596, %v1550
  %1616 = vst.msk [vmem:[%s4 + $0x4c] sm:$0xf] %vm1596, %v1551
  %1617 = vst.msk [vmem:[%s4 + $0x50] sm:$0xf] %vm1596, %v1552
  %1618 = vst.msk [vmem:[%s4 + $0x54] sm:$0xf] %vm1596, %v1553
  %1619 = vst.msk [vmem:[%s4 + $0x58] sm:$0xf] %vm1596, %v1554
  %1620 = vst.msk [vmem:[%s4 + $0x5c] sm:$0xf] %vm1596, %v1555
  %1621 = vst.msk [vmem:[%s4 + $0x60] sm:$0xf] %vm1596, %v1556
  %1622 = vst.msk [vmem:[%s4 + $0x64] sm:$0xf] %vm1596, %v1557
  %1623 = vst.msk [vmem:[%s4 + $0x68] sm:$0xf] %vm1596, %v1558
  %1624 = vst.msk [vmem:[%s4 + $0x6c] sm:$0xf] %vm1596, %v1559
  %1625 = vst.msk [vmem:[%s4 + $0x70] sm:$0xf] %vm1596, %v1560
  %1626 = vst.msk [vmem:[%s4 + $0x74] sm:$0xf] %vm1596, %v1561
  %1627 = vst.msk [vmem:[%s4 + $0x78] sm:$0xf] %vm1596, %v1562
  %1628 = vst.msk [vmem:[%s4 + $0x7c] sm:$0xf] %vm1596, %v1563
  // Predicated region
  $region18: #{bottle_stack_forward.17} parent=0 // pred_check
    _
  $region19: #{bottle_stack_forward.17} parent=0 // pred_check_branch
    %1630 = sbr.rel (0) target = $region21
  $region20: #{bottle_stack_forward.17} parent=0 // pred_region
    _
  $region21: #{bottle_stack_forward.17} parent=0 // pred_fallthru
    _
  // Predicated region
  $region22: #{bottle_stack_forward.17} parent=0 // pred_check
    _
  $region23: #{bottle_stack_forward.17} parent=0 // pred_check_branch
    %1632 = sbr.rel (0) target = $region25
  $region24: #{bottle_stack_forward.17} parent=0 // pred_region
    _
  $region25: #{bottle_stack_forward.17} parent=0 // pred_fallthru
    _

// kernel: bottle_stack_forward.20
$region0: #{bottle_stack_forward.20}
  #allocation0 [shape = 'u32[]', space=smem, size = 0x4, offset = 0x4, fixed_abs, tag = 'smem constant byte address 0x4 - core index']
  #allocation1 [shape = 'u32[144,128]{1,0:T(1,128)}', space=vmem, size = 0x12000, scoped, tag = 'internal scratch']
  #allocation2 [shape = 'f32[32,128]{1,0:T(8,128)}', space=vmem, size = 0x4000, scoped, tag = 'scratch operand']
  %s0 = inlined_call_operand.vmem [shape: bf16[32,128], index: 0, kind: input, shape index: {}]
  %s1 = inlined_call_operand.vmem [shape: f32[1,128], index: 1, kind: input, shape index: {}]
  %s2 = inlined_call_operand.vmem [shape: f32[1,128], index: 2, kind: input, shape index: {}]
  %s3 = inlined_call_operand.vmem [shape: bf16[128,128], index: 3, kind: input, shape index: {}]
  %s4 = inlined_call_operand.vmem [shape: bf16[32,128], index: 4, kind: output, shape index: {0}]
  %s5 = inlined_call_operand.vmem [shape: f32[1,128], index: 5, kind: output, shape index: {1}]
  %s6 = inlined_call_operand.vmem [shape: f32[1,128], index: 6, kind: output, shape index: {2}]
  %7 = xla_tuple %s4, %s5, %s6
  %s8 = sld [smem:[#allocation0]]
  $region50: #{bottle_stack_forward.20} parent=0
    _
  %s10 = ssub.s32 1, %s8
  %s11 = scalar_select 0, %s10, %s8
  // Predicated region
  $region2: #{bottle_stack_forward.20} parent=0 // pred_check
    _
  $region3: #{bottle_stack_forward.20} parent=0 // pred_check_branch
    %13 = sbr.rel (0) target = $region5
  $region4: #{bottle_stack_forward.20} parent=0 // pred_region
    _
  $region5: #{bottle_stack_forward.20} parent=0 // pred_fallthru
    _
  // Predicated region
  $region6: #{bottle_stack_forward.20} parent=0 // pred_check
    _
  $region7: #{bottle_stack_forward.20} parent=0 // pred_check_branch
    %15 = sbr.rel (0) target = $region9
  $region8: #{bottle_stack_forward.20} parent=0 // pred_region
    _
  $region9: #{bottle_stack_forward.20} parent=0 // pred_fallthru
    _
  // Predicated region
  $region10: #{bottle_stack_forward.20} parent=0 // pred_check
    _
  $region11: #{bottle_stack_forward.20} parent=0 // pred_check_branch
    %17 = sbr.rel (0) target = $region13
  $region12: #{bottle_stack_forward.20} parent=0 // pred_region
    _
  $region13: #{bottle_stack_forward.20} parent=0 // pred_fallthru
    _
  // Predicated region
  $region14: #{bottle_stack_forward.20} parent=0 // pred_check
    _
  $region15: #{bottle_stack_forward.20} parent=0 // pred_check_branch
    %19 = sbr.rel (0) target = $region17
  $region16: #{bottle_stack_forward.20} parent=0 // pred_region
    _
  $region17: #{bottle_stack_forward.20} parent=0 // pred_fallthru
    _
  %p21 = scmp.eq.s32.totalorder 0, 0
  // Predicated region
  $region18: #{bottle_stack_forward.20} parent=0 // pred_check
    %p22 = pneg %p21
  $region19: #{bottle_stack_forward.20} parent=0 // pred_check_branch
    %24 = sbr.rel (%p22) target = $region21
  $region20: #{bottle_stack_forward.20} parent=0 // pred_region
    %25 = vst [vmem:[#allocation2] sm:$0xff] 0.0
    %26 = vst [vmem:[#allocation2 + $0x8] sm:$0xff] 0.0
    %27 = vst [vmem:[#allocation2 + $0x10] sm:$0xff] 0.0
    %28 = vst [vmem:[#allocation2 + $0x18] sm:$0xff] 0.0
  $region21: #{bottle_stack_forward.20} parent=0 // pred_fallthru
    _
  %v29 = vld [vmem:[%s0] sm:$0xf]
  %v30 = vld [vmem:[%s0 + $0x4] sm:$0xf]
  %v31 = vld [vmem:[%s0 + $0x8] sm:$0xf]
  %v32 = vld [vmem:[%s0 + $0xc] sm:$0xf]
  %v33 = vunpack.c.l.bf16 %v29
  %v34 = vunpack.c.l.bf16 %v30
  %v35 = vunpack.c.l.bf16 %v31
  %v36 = vunpack.c.l.bf16 %v32
  %v37 = vld [vmem:[%s1] sm:$0x1]
  %v39 = vlaneseq
  %v40 = vshrl.u32 %v39, 7
  %v41 = vsub.s32 0, %v40
  %v42 = vrot.slane %v37, %v41
  %v44 = vmul.f32 %v33, %v42
  %v45 = vmul.f32 %v34, %v42
  %v46 = vmul.f32 %v35, %v42
  %v47 = vmul.f32 %v36, %v42
  %v48 = vld [vmem:[%s2] sm:$0x1]
  %v50 = vlaneseq
  %v51 = vshrl.u32 %v50, 7
  %v52 = vsub.s32 0, %v51
  %v53 = vrot.slane %v48, %v52
  %v55 = vadd.f32 %v44, %v53
  %v56 = vadd.f32 %v45, %v53
  %v57 = vadd.f32 %v46, %v53
  %v58 = vadd.f32 %v47, %v53
  %v59 = vmax.f32 %v55, 0.0
  %v60 = vmax.f32 %v56, 0.0
  %v61 = vmax.f32 %v57, 0.0
  %v62 = vmax.f32 %v58, 0.0
  %v63 = vpack.c.bf16 %v60, %v59
  %v64 = vpack.c.bf16 %v62, %v61
  %v65 = vld [vmem:[#allocation2] sm:$0xff]
  %v66 = vld [vmem:[#allocation2 + $0x8] sm:$0xff]
  %v67 = vld [vmem:[#allocation2 + $0x10] sm:$0xff]
  %v68 = vld [vmem:[#allocation2 + $0x18] sm:$0xff]
  %v69 = vld [vmem:[%s3] sm:$0xf]
  %v70 = vld [vmem:[%s3 + $0x4] sm:$0xf]
  %v71 = vld [vmem:[%s3 + $0x8] sm:$0xf]
  %v72 = vld [vmem:[%s3 + $0xc] sm:$0xf]
  %v73 = vld [vmem:[%s3 + $0x10] sm:$0xf]
  %v74 = vld [vmem:[%s3 + $0x14] sm:$0xf]
  %v75 = vld [vmem:[%s3 + $0x18] sm:$0xf]
  %v76 = vld [vmem:[%s3 + $0x1c] sm:$0xf]
  %v77 = vld [vmem:[%s3 + $0x20] sm:$0xf]
  %v78 = vld [vmem:[%s3 + $0x24] sm:$0xf]
  %v79 = vld [vmem:[%s3 + $0x28] sm:$0xf]
  %v80 = vld [vmem:[%s3 + $0x2c] sm:$0xf]
  %v81 = vld [vmem:[%s3 + $0x30] sm:$0xf]
  %v82 = vld [vmem:[%s3 + $0x34] sm:$0xf]
  %v83 = vld [vmem:[%s3 + $0x38] sm:$0xf]
  %v84 = vld [vmem:[%s3 + $0x3c] sm:$0xf]
  %v101 = vunpack.c.l.b16 %v69
  %v102 = vunpack.c.l.b16 %v70
  %v103 = vunpack.c.l.b16 %v71
  %v104 = vunpack.c.l.b16 %v72
  %v105 = vunpack.c.l.b16 %v73
  %v106 = vunpack.c.l.b16 %v74
  %v107 = vunpack.c.l.b16 %v75
  %v108 = vunpack.c.l.b16 %v76
  %v109 = vunpack.c.l.b16 %v77
  %v110 = vunpack.c.l.b16 %v78
  %v111 = vunpack.c.l.b16 %v79
  %v112 = vunpack.c.l.b16 %v80
  %v113 = vunpack.c.l.b16 %v81
  %v114 = vunpack.c.l.b16 %v82
  %v115 = vunpack.c.l.b16 %v83
  %v116 = vunpack.c.l.b16 %v84
  %v117 = vpack.c.b16 %v102, %v101
  %v118 = vpack.c.b16 %v104, %v103
  %v119 = vpack.c.b16 %v106, %v105
  %v120 = vpack.c.b16 %v108, %v107
  %v121 = vpack.c.b16 %v110, %v109
  %v122 = vpack.c.b16 %v112, %v111
  %v123 = vpack.c.b16 %v114, %v113
  %v124 = vpack.c.b16 %v116, %v115
  %133 = vmatprep.subr.bf16.mxu0 0
  %134 = vmatpush1.bf16.msra.mxu0 %v124
  %135 = vmatprep.subr.bf16.mxu0 0
  %136 = vmatpush1.bf16.msra.mxu0 %v123
  %137 = vmatprep.subr.bf16.mxu0 0
  %138 = vmatpush1.bf16.msra.mxu0 %v122
  %139 = vmatprep.subr.bf16.mxu0 0
  %140 = vmatpush1.bf16.msra.mxu0 %v121
  %141 = vmatprep.subr.bf16.mxu0 0
  %142 = vmatpush1.bf16.msra.mxu0 %v120
  %143 = vmatprep.subr.bf16.mxu0 0
  %144 = vmatpush1.bf16.msra.mxu0 %v119
  %145 = vmatprep.subr.bf16.mxu0 0
  %146 = vmatpush1.bf16.msra.mxu0 %v118
  %147 = vmatprep.subr.bf16.mxu0 0
  %148 = vmatpush1.bf16.msra.mxu0 %v117
  %149 = vmatprep.subr.bf16.mxu0 0
  %150 = vmatpush2.bf16.msra.mxu0 0
  %151 = vmatprep.subr.bf16.mxu0 0
  %152 = vmatpush2.bf16.msra.mxu0 0
  %153 = vmatprep.subr.bf16.mxu0 0
  %154 = vmatpush2.bf16.msra.mxu0 0
  %155 = vmatprep.subr.bf16.mxu0 0
  %156 = vmatpush2.bf16.msra.mxu0 0
  %157 = vmatprep.subr.bf16.mxu0 0
  %158 = vmatpush2.bf16.msra.mxu0 0
  %159 = vmatprep.subr.bf16.mxu0 0
  %160 = vmatpush2.bf16.msra.mxu0 0
  %161 = vmatprep.subr.bf16.mxu0 0
  %162 = vmatpush2.bf16.msra.mxu0 0
  %163 = vmatprep.subr.bf16.mxu0 0
  %164 = vmatpush2.bf16.msra.mxu0 0
  %165 = vmatprep.mubr.bf16.mxu0 0
  %166 = vmatmul.mubr.bf16.gmra.mxu0 %v63
  %v167 = vpop.f32.mrf.mxu0
  %v168 = vadd.f32 0.0, %v167
  %v169 = vpop.f32.mrf.mxu0
  %v170 = vpop.f32.mrf.mxu0
  %v171 = vadd.f32 0.0, %v170
  %v172 = vpop.f32.mrf.mxu0
  %173 = vmatprep.mubr.bf16.mxu0 0
  %174 = vmatmul.mubr.bf16.gmra.mxu0 %v64
  %v175 = vpop.f32.mrf.mxu0
  %v176 = vadd.f32 0.0, %v175
  %v177 = vpop.f32.mrf.mxu0
  %v178 = vpop.f32.mrf.mxu0
  %v179 = vadd.f32 0.0, %v178
  %v180 = vpop.f32.mrf.mxu0
  %181 = vdwg.mxu0
  %v182 = vadd.f32 %v65, %v168
  %v183 = vadd.f32 %v66, %v171
  %v184 = vadd.f32 %v67, %v176
  %v185 = vadd.f32 %v68, %v179
  %186 = vst [vmem:[#allocation2] sm:$0xff] %v182
  %187 = vst [vmem:[#allocation2 + $0x8] sm:$0xff] %v183
  %188 = vst [vmem:[#allocation2 + $0x10] sm:$0xff] %v184
  %189 = vst [vmem:[#allocation2 + $0x18] sm:$0xff] %v185
  // Predicated region
  $region22: #{bottle_stack_forward.20} parent=0 // pred_check
    %p190 = pneg %p21
  $region23: #{bottle_stack_forward.20} parent=0 // pred_check_branch
    %192 = sbr.rel (%p190) target = $region25
  $region24: #{bottle_stack_forward.20} parent=0 // pred_region
    %v193 = vld [vmem:[#allocation2] sm:$0xff]
    %v194 = vld [vmem:[#allocation2 + $0x8] sm:$0xff]
    %v195 = vld [vmem:[#allocation2 + $0x10] sm:$0xff]
    %v196 = vld [vmem:[#allocation2 + $0x18] sm:$0xff]
    %v197 = vpack.c.bf16 %v194, %v193
    %v198 = vpack.c.bf16 %v196, %v195
    %v201 = vunpack.c.l.b16 %v197
    %v202 = vunpack.c.h.b16 %v197
    %v203 = vunpack.c.l.b16 %v198
    %v204 = vunpack.c.h.b16 %v198
    %v205 = vpack.c.b16 %v201, %v201
    %v206 = vpack.c.b16 %v202, %v202
    %v207 = vpack.c.b16 %v203, %v203
    %v208 = vpack.c.b16 %v204, %v204
    %213 = vst [vmem:[%s4] sm:$0xf] %v205
    %214 = vst [vmem:[%s4 + $0x4] sm:$0xf] %v206
    %215 = vst [vmem:[%s4 + $0x8] sm:$0xf] %v207
    %216 = vst [vmem:[%s4 + $0xc] sm:$0xf] %v208
    %v217 = vadd.f32 %v193, %v194
    %v218 = vadd.f32 %v217, %v195
    %v219 = vadd.f32 %v218, %v196
    %v220 = vrot.slane %v219, 4
    %v221 = vadd.f32 %v219, %v220
    %v222 = vrot.slane %v221, 2
    %v223 = vadd.f32 %v221, %v222
    %v224 = vrot.slane %v223, 1
    %v225 = vadd.f32 %v223, %v224
    %226 = vst [vmem:[%s5] sm:$0x1] %v225
    %v227 = vmul.f32 %v193, %v193
    %v228 = vmul.f32 %v194, %v194
    %v229 = vmul.f32 %v195, %v195
    %v230 = vmul.f32 %v196, %v196
    %v231 = vadd.f32 %v227, %v228
    %v232 = vadd.f32 %v231, %v229
    %v233 = vadd.f32 %v232, %v230
    %v234 = vrot.slane %v233, 4
    %v235 = vadd.f32 %v233, %v234
    %v236 = vrot.slane %v235, 2
    %v237 = vadd.f32 %v235, %v236
    %v238 = vrot.slane %v237, 1
    %v239 = vadd.f32 %v237, %v238
    %240 = vst [vmem:[%s6] sm:$0x1] %v239
  $region25: #{bottle_stack_forward.20} parent=0 // pred_fallthru
    _
  // Predicated region
  $region26: #{bottle_stack_forward.20} parent=0 // pred_check
    _
  $region27: #{bottle_stack_forward.20} parent=0 // pred_check_branch
    %242 = sbr.rel (0) target = $region29
  $region28: #{bottle_stack_forward.20} parent=0 // pred_region
    _
  $region29: #{bottle_stack_forward.20} parent=0 // pred_fallthru
    _
  // Predicated region
  $region30: #{bottle_stack_forward.20} parent=0 // pred_check
    _
  $region31: #{bottle_stack_forward.20} parent=0 // pred_check_branch
    %244 = sbr.rel (0) target = $region33
  $region32: #{bottle_stack_forward.20} parent=0 // pred_region
    _
  $region33: #{bottle_stack_forward.20} parent=0 // pred_fallthru
    _
  // Predicated region
  $region34: #{bottle_stack_forward.20} parent=0 // pred_check
    _
  $region35: #{bottle_stack_forward.20} parent=0 // pred_check_branch
    %246 = sbr.rel (0) target = $region37
  $region36: #{bottle_stack_forward.20} parent=0 // pred_region
    _
  $region37: #{bottle_stack_forward.20} parent=0 // pred_fallthru
    _
  // Predicated region
  $region38: #{bottle_stack_forward.20} parent=0 // pred_check
    _
  $region39: #{bottle_stack_forward.20} parent=0 // pred_check_branch
    %248 = sbr.rel (0) target = $region41
  $region40: #{bottle_stack_forward.20} parent=0 // pred_region
    _
  $region41: #{bottle_stack_forward.20} parent=0 // pred_fallthru
    _
  // Predicated region
  $region42: #{bottle_stack_forward.20} parent=0 // pred_check
    _
  $region43: #{bottle_stack_forward.20} parent=0 // pred_check_branch
    %250 = sbr.rel (0) target = $region45
  $region44: #{bottle_stack_forward.20} parent=0 // pred_region
    _
  $region45: #{bottle_stack_forward.20} parent=0 // pred_fallthru
    _
  // Predicated region
  $region46: #{bottle_stack_forward.20} parent=0 // pred_check
    _
  $region47: #{bottle_stack_forward.20} parent=0 // pred_check_branch
    %252 = sbr.rel (0) target = $region49
  $region48: #{bottle_stack_forward.20} parent=0 // pred_region
    _
  $region49: #{bottle_stack_forward.20} parent=0 // pred_fallthru
    _

// kernel: bottle_stack_forward.14
$region0: #{bottle_stack_forward.14}
  #allocation0 [shape = 'u32[]', space=smem, size = 0x4, offset = 0x4, fixed_abs, tag = 'smem constant byte address 0x4 - core index']
  #allocation1 [shape = 'u32[144,128]{1,0:T(1,128)}', space=vmem, size = 0x12000, scoped, tag = 'internal scratch']
  #allocation2 [shape = 'f32[32,128]{1,0:T(8,128)}', space=vmem, size = 0x4000, scoped, tag = 'scratch operand']
  %s0 = inlined_call_operand.vmem [shape: bf16[32,128], index: 0, kind: input, shape index: {}]
  %s1 = inlined_call_operand.vmem [shape: bf16[128,128], index: 1, kind: input, shape index: {}]
  %s2 = inlined_call_operand.vmem [shape: bf16[32,128], index: 2, kind: output, shape index: {0}]
  %s3 = inlined_call_operand.vmem [shape: f32[1,128], index: 3, kind: output, shape index: {1}]
  %s4 = inlined_call_operand.vmem [shape: f32[1,128], index: 4, kind: output, shape index: {2}]
  %5 = xla_tuple %s2, %s3, %s4
  %s6 = sld [smem:[#allocation0]]
  $region42: #{bottle_stack_forward.14} parent=0
    _
  %s8 = ssub.s32 1, %s6
  %s9 = scalar_select 0, %s8, %s6
  // Predicated region
  $region2: #{bottle_stack_forward.14} parent=0 // pred_check
    _
  $region3: #{bottle_stack_forward.14} parent=0 // pred_check_branch
    %11 = sbr.rel (0) target = $region5
  $region4: #{bottle_stack_forward.14} parent=0 // pred_region
    _
  $region5: #{bottle_stack_forward.14} parent=0 // pred_fallthru
    _
  // Predicated region
  $region6: #{bottle_stack_forward.14} parent=0 // pred_check
    _
  $region7: #{bottle_stack_forward.14} parent=0 // pred_check_branch
    %13 = sbr.rel (0) target = $region9
  $region8: #{bottle_stack_forward.14} parent=0 // pred_region
    _
  $region9: #{bottle_stack_forward.14} parent=0 // pred_fallthru
    _
  %p15 = scmp.eq.s32.totalorder 0, 0
  // Predicated region
  $region10: #{bottle_stack_forward.14} parent=0 // pred_check
    %p16 = pneg %p15
  $region11: #{bottle_stack_forward.14} parent=0 // pred_check_branch
    %18 = sbr.rel (%p16) target = $region13
  $region12: #{bottle_stack_forward.14} parent=0 // pred_region
    %19 = vst [vmem:[#allocation2] sm:$0xff] 0.0
    %20 = vst [vmem:[#allocation2 + $0x8] sm:$0xff] 0.0
    %21 = vst [vmem:[#allocation2 + $0x10] sm:$0xff] 0.0
    %22 = vst [vmem:[#allocation2 + $0x18] sm:$0xff] 0.0
  $region13: #{bottle_stack_forward.14} parent=0 // pred_fallthru
    _
  %v23 = vld [vmem:[%s0] sm:$0xf]
  %v24 = vld [vmem:[%s0 + $0x4] sm:$0xf]
  %v25 = vld [vmem:[%s0 + $0x8] sm:$0xf]
  %v26 = vld [vmem:[%s0 + $0xc] sm:$0xf]
  %v27 = vld [vmem:[#allocation2] sm:$0xff]
  %v28 = vld [vmem:[#allocation2 + $0x8] sm:$0xff]
  %v29 = vld [vmem:[#allocation2 + $0x10] sm:$0xff]
  %v30 = vld [vmem:[#allocation2 + $0x18] sm:$0xff]
  %v31 = vld [vmem:[%s1] sm:$0xf]
  %v32 = vld [vmem:[%s1 + $0x4] sm:$0xf]
  %v33 = vld [vmem:[%s1 + $0x8] sm:$0xf]
  %v34 = vld [vmem:[%s1 + $0xc] sm:$0xf]
  %v35 = vld [vmem:[%s1 + $0x10] sm:$0xf]
  %v36 = vld [vmem:[%s1 + $0x14] sm:$0xf]
  %v37 = vld [vmem:[%s1 + $0x18] sm:$0xf]
  %v38 = vld [vmem:[%s1 + $0x1c] sm:$0xf]
  %v39 = vld [vmem:[%s1 + $0x20] sm:$0xf]
  %v40 = vld [vmem:[%s1 + $0x24] sm:$0xf]
  %v41 = vld [vmem:[%s1 + $0x28] sm:$0xf]
  %v42 = vld [vmem:[%s1 + $0x2c] sm:$0xf]
  %v43 = vld [vmem:[%s1 + $0x30] sm:$0xf]
  %v44 = vld [vmem:[%s1 + $0x34] sm:$0xf]
  %v45 = vld [vmem:[%s1 + $0x38] sm:$0xf]
  %v46 = vld [vmem:[%s1 + $0x3c] sm:$0xf]
  %v51 = vunpack.c.l.b16 %v23
  %v52 = vunpack.c.l.b16 %v24
  %v53 = vunpack.c.l.b16 %v25
  %v54 = vunpack.c.l.b16 %v26
  %v55 = vpack.c.b16 %v52, %v51
  %v56 = vpack.c.b16 %v54, %v53
  %v75 = vunpack.c.l.b16 %v31
  %v76 = vunpack.c.l.b16 %v32
  %v77 = vunpack.c.l.b16 %v33
  %v78 = vunpack.c.l.b16 %v34
  %v79 = vunpack.c.l.b16 %v35
  %v80 = vunpack.c.l.b16 %v36
  %v81 = vunpack.c.l.b16 %v37
  %v82 = vunpack.c.l.b16 %v38
  %v83 = vunpack.c.l.b16 %v39
  %v84 = vunpack.c.l.b16 %v40
  %v85 = vunpack.c.l.b16 %v41
  %v86 = vunpack.c.l.b16 %v42
  %v87 = vunpack.c.l.b16 %v43
  %v88 = vunpack.c.l.b16 %v44
  %v89 = vunpack.c.l.b16 %v45
  %v90 = vunpack.c.l.b16 %v46
  %v91 = vpack.c.b16 %v76, %v75
  %v92 = vpack.c.b16 %v78, %v77
  %v93 = vpack.c.b16 %v80, %v79
  %v94 = vpack.c.b16 %v82, %v81
  %v95 = vpack.c.b16 %v84, %v83
  %v96 = vpack.c.b16 %v86, %v85
  %v97 = vpack.c.b16 %v88, %v87
  %v98 = vpack.c.b16 %v90, %v89
  %107 = vmatprep.subr.bf16.mxu0 0
  %108 = vmatpush1.bf16.msra.mxu0 %v98
  %109 = vmatprep.subr.bf16.mxu0 0
  %110 = vmatpush1.bf16.msra.mxu0 %v97
  %111 = vmatprep.subr.bf16.mxu0 0
  %112 = vmatpush1.bf16.msra.mxu0 %v96
  %113 = vmatprep.subr.bf16.mxu0 0
  %114 = vmatpush1.bf16.msra.mxu0 %v95
  %115 = vmatprep.subr.bf16.mxu0 0
  %116 = vmatpush1.bf16.msra.mxu0 %v94
  %117 = vmatprep.subr.bf16.mxu0 0
  %118 = vmatpush1.bf16.msra.mxu0 %v93
  %119 = vmatprep.subr.bf16.mxu0 0
  %120 = vmatpush1.bf16.msra.mxu0 %v92
  %121 = vmatprep.subr.bf16.mxu0 0
  %122 = vmatpush1.bf16.msra.mxu0 %v91
  %123 = vmatprep.subr.bf16.mxu0 0
  %124 = vmatpush2.bf16.msra.mxu0 0
  %125 = vmatprep.subr.bf16.mxu0 0
  %126 = vmatpush2.bf16.msra.mxu0 0
  %127 = vmatprep.subr.bf16.mxu0 0
  %128 = vmatpush2.bf16.msra.mxu0 0
  %129 = vmatprep.subr.bf16.mxu0 0
  %130 = vmatpush2.bf16.msra.mxu0 0
  %131 = vmatprep.subr.bf16.mxu0 0
  %132 = vmatpush2.bf16.msra.mxu0 0
  %133 = vmatprep.subr.bf16.mxu0 0
  %134 = vmatpush2.bf16.msra.mxu0 0
  %135 = vmatprep.subr.bf16.mxu0 0
  %136 = vmatpush2.bf16.msra.mxu0 0
  %137 = vmatprep.subr.bf16.mxu0 0
  %138 = vmatpush2.bf16.msra.mxu0 0
  %139 = vmatprep.mubr.bf16.mxu0 0
  %140 = vmatmul.mubr.bf16.gmra.mxu0 %v55
  %v141 = vpop.f32.mrf.mxu0
  %v142 = vadd.f32 0.0, %v141
  %v143 = vpop.f32.mrf.mxu0
  %v144 = vpop.f32.mrf.mxu0
  %v145 = vadd.f32 0.0, %v144
  %v146 = vpop.f32.mrf.mxu0
  %147 = vmatprep.mubr.bf16.mxu0 0
  %148 = vmatmul.mubr.bf16.gmra.mxu0 %v56
  %v149 = vpop.f32.mrf.mxu0
  %v150 = vadd.f32 0.0, %v149
  %v151 = vpop.f32.mrf.mxu0
  %v152 = vpop.f32.mrf.mxu0
  %v153 = vadd.f32 0.0, %v152
  %v154 = vpop.f32.mrf.mxu0
  %155 = vdwg.mxu0
  %v156 = vadd.f32 %v27, %v142
  %v157 = vadd.f32 %v28, %v145
  %v158 = vadd.f32 %v29, %v150
  %v159 = vadd.f32 %v30, %v153
  %160 = vst [vmem:[#allocation2] sm:$0xff] %v156
  %161 = vst [vmem:[#allocation2 + $0x8] sm:$0xff] %v157
  %162 = vst [vmem:[#allocation2 + $0x10] sm:$0xff] %v158
  %163 = vst [vmem:[#allocation2 + $0x18] sm:$0xff] %v159
  // Predicated region
  $region14: #{bottle_stack_forward.14} parent=0 // pred_check
    %p164 = pneg %p15
  $region15: #{bottle_stack_forward.14} parent=0 // pred_check_branch
    %166 = sbr.rel (%p164) target = $region17
  $region16: #{bottle_stack_forward.14} parent=0 // pred_region
    %v167 = vld [vmem:[#allocation2] sm:$0xff]
    %v168 = vld [vmem:[#allocation2 + $0x8] sm:$0xff]
    %v169 = vld [vmem:[#allocation2 + $0x10] sm:$0xff]
    %v170 = vld [vmem:[#allocation2 + $0x18] sm:$0xff]
    %v171 = vpack.c.bf16 %v168, %v167
    %v172 = vpack.c.bf16 %v170, %v169
    %v175 = vunpack.c.l.b16 %v171
    %v176 = vunpack.c.h.b16 %v171
    %v177 = vunpack.c.l.b16 %v172
    %v178 = vunpack.c.h.b16 %v172
    %v179 = vpack.c.b16 %v175, %v175
    %v180 = vpack.c.b16 %v176, %v176
    %v181 = vpack.c.b16 %v177, %v177
    %v182 = vpack.c.b16 %v178, %v178
    %187 = vst [vmem:[%s2] sm:$0xf] %v179
    %188 = vst [vmem:[%s2 + $0x4] sm:$0xf] %v180
    %189 = vst [vmem:[%s2 + $0x8] sm:$0xf] %v181
    %190 = vst [vmem:[%s2 + $0xc] sm:$0xf] %v182
    %v191 = vadd.f32 %v167, %v168
    %v192 = vadd.f32 %v191, %v169
    %v193 = vadd.f32 %v192, %v170
    %v194 = vrot.slane %v193, 4
    %v195 = vadd.f32 %v193, %v194
    %v196 = vrot.slane %v195, 2
    %v197 = vadd.f32 %v195, %v196
    %v198 = vrot.slane %v197, 1
    %v199 = vadd.f32 %v197, %v198
    %200 = vst [vmem:[%s3] sm:$0x1] %v199
    %v201 = vmul.f32 %v167, %v167
    %v202 = vmul.f32 %v168, %v168
    %v203 = vmul.f32 %v169, %v169
    %v204 = vmul.f32 %v170, %v170
    %v205 = vadd.f32 %v201, %v202
    %v206 = vadd.f32 %v205, %v203
    %v207 = vadd.f32 %v206, %v204
    %v208 = vrot.slane %v207, 4
    %v209 = vadd.f32 %v207, %v208
    %v210 = vrot.slane %v209, 2
    %v211 = vadd.f32 %v209, %v210
    %v212 = vrot.slane %v211, 1
    %v213 = vadd.f32 %v211, %v212
    %214 = vst [vmem:[%s4] sm:$0x1] %v213
  $region17: #{bottle_stack_forward.14} parent=0 // pred_fallthru
    _
  // Predicated region
  $region18: #{bottle_stack_forward.14} parent=0 // pred_check
    _
  $region19: #{bottle_stack_forward.14} parent=0 // pred_check_branch
    %216 = sbr.rel (0) target = $region21
  $region20: #{bottle_stack_forward.14} parent=0 // pred_region
    _
  $region21: #{bottle_stack_forward.14} parent=0 // pred_fallthru
    _
  // Predicated region
  $region22: #{bottle_stack_forward.14} parent=0 // pred_check
    _
  $region23: #{bottle_stack_forward.14} parent=0 // pred_check_branch
    %218 = sbr.rel (0) target = $region25
  $region24: #{bottle_stack_forward.14} parent=0 // pred_region
    _
  $region25: #{bottle_stack_forward.14} parent=0 // pred_fallthru
    _
  // Predicated region
  $region26: #{bottle_stack_forward.14} parent=0 // pred_check
    _
  $region27: #{bottle_stack_forward.14} parent=0 // pred_check_branch
    %220 = sbr.rel (0) target = $region29
  $region28: #{bottle_stack_forward.14} parent=0 // pred_region
    _
  $region29: #{bottle_stack_forward.14} parent=0 // pred_fallthru
    _
  // Predicated region
  $region30: #{bottle_stack_forward.14} parent=0 // pred_check
    _
  $region31: #{bottle_stack_forward.14} parent=0 // pred_check_branch
    %222 = sbr.rel (0) target = $region33
  $region32: #{bottle_stack_forward.14} parent=0 // pred_region
    _
  $region33: #{bottle_stack_forward.14} parent=0 // pred_fallthru
    _
  // Predicated region
  $region34: #{bottle_stack_forward.14} parent=0 // pred_check
    _
  $region35: #{bottle_stack_forward.14} parent=0 // pred_check_branch
    %224 = sbr.rel (0) target = $region37
  $region36: #{bottle_stack_forward.14} parent=0 // pred_region
    _
  $region37: #{bottle_stack_forward.14} parent=0 // pred_fallthru
    _
  // Predicated region
  $region38: #{bottle_stack_forward.14} parent=0 // pred_check
    _
  $region39: #{bottle_stack_forward.14} parent=0 // pred_check_branch
    %226 = sbr.rel (0) target = $region41
  $region40: #{bottle_stack_forward.14} parent=0 // pred_region
    _
  $region41: #{bottle_stack_forward.14} parent=0 // pred_fallthru
    _

// kernel: bottle_stack_forward.21
$region0: #{bottle_stack_forward.21}
  #allocation0 [shape = 'u32[]', space=smem, size = 0x4, offset = 0x4, fixed_abs, tag = 'smem constant byte address 0x4 - core index']
  #allocation1 [shape = 'u32[144,128]{1,0:T(1,128)}', space=vmem, size = 0x12000, scoped, tag = 'internal scratch']
  %s0 = inlined_call_operand.vmem [shape: bf16[32,16], index: 0, kind: input, shape index: {}]
  %s1 = inlined_call_operand.vmem [shape: f32[1,16], index: 1, kind: input, shape index: {}]
  %s2 = inlined_call_operand.vmem [shape: f32[1,16], index: 2, kind: input, shape index: {}]
  %s3 = inlined_call_operand.vmem [shape: bf16[32,16], index: 3, kind: input, shape index: {}]
  %s4 = inlined_call_operand.vmem [shape: f32[1,16], index: 4, kind: input, shape index: {}]
  %s5 = inlined_call_operand.vmem [shape: f32[1,16], index: 5, kind: input, shape index: {}]
  %s6 = inlined_call_operand.vmem [shape: bf16[32,16], index: 6, kind: output, shape index: {}]
  %s7 = sld [smem:[#allocation0]]
  $region34: #{bottle_stack_forward.21} parent=0
    _
  %s9 = ssub.s32 1, %s7
  %s10 = scalar_select 0, %s9, %s7
  // Predicated region
  $region2: #{bottle_stack_forward.21} parent=0 // pred_check
    _
  $region3: #{bottle_stack_forward.21} parent=0 // pred_check_branch
    %12 = sbr.rel (0) target = $region5
  $region4: #{bottle_stack_forward.21} parent=0 // pred_region
    _
  $region5: #{bottle_stack_forward.21} parent=0 // pred_fallthru
    _
  // Predicated region
  $region6: #{bottle_stack_forward.21} parent=0 // pred_check
    _
  $region7: #{bottle_stack_forward.21} parent=0 // pred_check_branch
    %14 = sbr.rel (0) target = $region9
  $region8: #{bottle_stack_forward.21} parent=0 // pred_region
    _
  $region9: #{bottle_stack_forward.21} parent=0 // pred_fallthru
    _
  // Predicated region
  $region10: #{bottle_stack_forward.21} parent=0 // pred_check
    _
  $region11: #{bottle_stack_forward.21} parent=0 // pred_check_branch
    %16 = sbr.rel (0) target = $region13
  $region12: #{bottle_stack_forward.21} parent=0 // pred_region
    _
  $region13: #{bottle_stack_forward.21} parent=0 // pred_fallthru
    _
  // Predicated region
  $region14: #{bottle_stack_forward.21} parent=0 // pred_check
    _
  $region15: #{bottle_stack_forward.21} parent=0 // pred_check_branch
    %18 = sbr.rel (0) target = $region17
  $region16: #{bottle_stack_forward.21} parent=0 // pred_region
    _
  $region17: #{bottle_stack_forward.21} parent=0 // pred_fallthru
    _
  // Predicated region
  $region18: #{bottle_stack_forward.21} parent=0 // pred_check
    _
  $region19: #{bottle_stack_forward.21} parent=0 // pred_check_branch
    %20 = sbr.rel (0) target = $region21
  $region20: #{bottle_stack_forward.21} parent=0 // pred_region
    _
  $region21: #{bottle_stack_forward.21} parent=0 // pred_fallthru
    _
  // Predicated region
  $region22: #{bottle_stack_forward.21} parent=0 // pred_check
    _
  $region23: #{bottle_stack_forward.21} parent=0 // pred_check_branch
    %22 = sbr.rel (0) target = $region25
  $region24: #{bottle_stack_forward.21} parent=0 // pred_region
    _
  $region25: #{bottle_stack_forward.21} parent=0 // pred_fallthru
    _
  %v23 = vld [vmem:[%s0] sm:$0xf]
  %v24 = vld [vmem:[%s0 + $0x4] sm:$0xf]
  %v25 = vld [vmem:[%s0 + $0x8] sm:$0xf]
  %v26 = vld [vmem:[%s0 + $0xc] sm:$0xf]
  %v27 = vunpack.c.l.bf16 %v23
  %v28 = vunpack.c.l.bf16 %v24
  %v29 = vunpack.c.l.bf16 %v25
  %v30 = vunpack.c.l.bf16 %v26
  %v31 = vld [vmem:[%s1] sm:$0x1]
  %v33 = vlaneseq
  %v34 = vshrl.u32 %v33, 7
  %v35 = vsub.s32 0, %v34
  %v36 = vrot.slane %v31, %v35
  %v38 = vmul.f32 %v27, %v36
  %v39 = vmul.f32 %v28, %v36
  %v40 = vmul.f32 %v29, %v36
  %v41 = vmul.f32 %v30, %v36
  %v42 = vld [vmem:[%s2] sm:$0x1]
  %v44 = vlaneseq
  %v45 = vshrl.u32 %v44, 7
  %v46 = vsub.s32 0, %v45
  %v47 = vrot.slane %v42, %v46
  %v49 = vadd.f32 %v38, %v47
  %v50 = vadd.f32 %v39, %v47
  %v51 = vadd.f32 %v40, %v47
  %v52 = vadd.f32 %v41, %v47
  %v53 = vld [vmem:[%s3] sm:$0xf]
  %v54 = vld [vmem:[%s3 + $0x4] sm:$0xf]
  %v55 = vld [vmem:[%s3 + $0x8] sm:$0xf]
  %v56 = vld [vmem:[%s3 + $0xc] sm:$0xf]
  %v57 = vunpack.c.l.bf16 %v53
  %v58 = vunpack.c.l.bf16 %v54
  %v59 = vunpack.c.l.bf16 %v55
  %v60 = vunpack.c.l.bf16 %v56
  %v61 = vld [vmem:[%s4] sm:$0x1]
  %v63 = vlaneseq
  %v64 = vshrl.u32 %v63, 7
  %v65 = vsub.s32 0, %v64
  %v66 = vrot.slane %v61, %v65
  %v68 = vmul.f32 %v57, %v66
  %v69 = vmul.f32 %v58, %v66
  %v70 = vmul.f32 %v59, %v66
  %v71 = vmul.f32 %v60, %v66
  %v72 = vld [vmem:[%s5] sm:$0x1]
  %v74 = vlaneseq
  %v75 = vshrl.u32 %v74, 7
  %v76 = vsub.s32 0, %v75
  %v77 = vrot.slane %v72, %v76
  %v79 = vadd.f32 %v68, %v77
  %v80 = vadd.f32 %v69, %v77
  %v81 = vadd.f32 %v70, %v77
  %v82 = vadd.f32 %v71, %v77
  %v83 = vmax.f32 %v79, 0.0
  %v84 = vmax.f32 %v80, 0.0
  %v85 = vmax.f32 %v81, 0.0
  %v86 = vmax.f32 %v82, 0.0
  %v87 = vadd.f32 %v49, %v83
  %v88 = vadd.f32 %v50, %v84
  %v89 = vadd.f32 %v51, %v85
  %v90 = vadd.f32 %v52, %v86
  %v91 = vmax.f32 %v87, 0.0
  %v92 = vmax.f32 %v88, 0.0
  %v93 = vmax.f32 %v89, 0.0
  %v94 = vmax.f32 %v90, 0.0
  %v95 = vpack.c.bf16 %v92, %v91
  %v96 = vpack.c.bf16 %v94, %v93
  %v99 = vunpack.c.l.b16 %v95
  %v100 = vunpack.c.h.b16 %v95
  %v101 = vunpack.c.l.b16 %v96
  %v102 = vunpack.c.h.b16 %v96
  %v103 = vpack.c.b16 %v99, %v99
  %v104 = vpack.c.b16 %v100, %v100
  %v105 = vpack.c.b16 %v101, %v101
  %v106 = vpack.c.b16 %v102, %v102
  %vm111 = vcmask 125952
  %112 = vst.msk [vmem:[%s6] sm:$0xf] %vm111, %v103
  %113 = vst.msk [vmem:[%s6 + $0x4] sm:$0xf] %vm111, %v104
  %114 = vst.msk [vmem:[%s6 + $0x8] sm:$0xf] %vm111, %v105
  %115 = vst.msk [vmem:[%s6 + $0xc] sm:$0xf] %vm111, %v106
  // Predicated region
  $region26: #{bottle_stack_forward.21} parent=0 // pred_check
    _
  $region27: #{bottle_stack_forward.21} parent=0 // pred_check_branch
    %117 = sbr.rel (0) target = $region29
  $region28: #{bottle_stack_forward.21} parent=0 // pred_region
    _
  $region29: #{bottle_stack_forward.21} parent=0 // pred_fallthru
    _
  // Predicated region
  $region30: #{bottle_stack_forward.21} parent=0 // pred_check
    _
  $region31: #{bottle_stack_forward.21} parent=0 // pred_check_branch
    %119 = sbr.rel (0) target = $region33
  $region32: #{bottle_stack_forward.21} parent=0 // pred_region
    _
  $region33: #{bottle_stack_forward.21} parent=0 // pred_fallthru
    _

// kernel: bottle_stack_forward.23
$region0: #{bottle_stack_forward.23}
  #allocation0 [shape = 'u32[]', space=smem, size = 0x4, offset = 0x4, fixed_abs, tag = 'smem constant byte address 0x4 - core index']
  #allocation1 [shape = 'u32[144,128]{1,0:T(1,128)}', space=vmem, size = 0x12000, scoped, tag = 'internal scratch']
  #allocation2 [shape = 'f32[32,128]{1,0:T(8,128)}', space=vmem, size = 0x4000, scoped, tag = 'scratch operand']
  %s0 = inlined_call_operand.vmem [shape: bf16[32,128], index: 0, kind: input, shape index: {}]
  %s1 = inlined_call_operand.vmem [shape: f32[1,128], index: 1, kind: input, shape index: {}]
  %s2 = inlined_call_operand.vmem [shape: f32[1,128], index: 2, kind: input, shape index: {}]
  %s3 = inlined_call_operand.vmem [shape: bf16[128,128], index: 3, kind: input, shape index: {}]
  %s4 = inlined_call_operand.vmem [shape: bf16[32,128], index: 4, kind: output, shape index: {}]
  %s5 = sld [smem:[#allocation0]]
  $region34: #{bottle_stack_forward.23} parent=0
    _
  %s7 = ssub.s32 1, %s5
  %s8 = scalar_select 0, %s7, %s5
  // Predicated region
  $region2: #{bottle_stack_forward.23} parent=0 // pred_check
    _
  $region3: #{bottle_stack_forward.23} parent=0 // pred_check_branch
    %10 = sbr.rel (0) target = $region5
  $region4: #{bottle_stack_forward.23} parent=0 // pred_region
    _
  $region5: #{bottle_stack_forward.23} parent=0 // pred_fallthru
    _
  // Predicated region
  $region6: #{bottle_stack_forward.23} parent=0 // pred_check
    _
  $region7: #{bottle_stack_forward.23} parent=0 // pred_check_branch
    %12 = sbr.rel (0) target = $region9
  $region8: #{bottle_stack_forward.23} parent=0 // pred_region
    _
  $region9: #{bottle_stack_forward.23} parent=0 // pred_fallthru
    _
  // Predicated region
  $region10: #{bottle_stack_forward.23} parent=0 // pred_check
    _
  $region11: #{bottle_stack_forward.23} parent=0 // pred_check_branch
    %14 = sbr.rel (0) target = $region13
  $region12: #{bottle_stack_forward.23} parent=0 // pred_region
    _
  $region13: #{bottle_stack_forward.23} parent=0 // pred_fallthru
    _
  // Predicated region
  $region14: #{bottle_stack_forward.23} parent=0 // pred_check
    _
  $region15: #{bottle_stack_forward.23} parent=0 // pred_check_branch
    %16 = sbr.rel (0) target = $region17
  $region16: #{bottle_stack_forward.23} parent=0 // pred_region
    _
  $region17: #{bottle_stack_forward.23} parent=0 // pred_fallthru
    _
  %p18 = scmp.eq.s32.totalorder 0, 0
  // Predicated region
  $region18: #{bottle_stack_forward.23} parent=0 // pred_check
    %p19 = pneg %p18
  $region19: #{bottle_stack_forward.23} parent=0 // pred_check_branch
    %21 = sbr.rel (%p19) target = $region21
  $region20: #{bottle_stack_forward.23} parent=0 // pred_region
    %22 = vst [vmem:[#allocation2] sm:$0xff] 0.0
    %23 = vst [vmem:[#allocation2 + $0x8] sm:$0xff] 0.0
    %24 = vst [vmem:[#allocation2 + $0x10] sm:$0xff] 0.0
    %25 = vst [vmem:[#allocation2 + $0x18] sm:$0xff] 0.0
  $region21: #{bottle_stack_forward.23} parent=0 // pred_fallthru
    _
  %v26 = vld [vmem:[%s0] sm:$0xf]
  %v27 = vld [vmem:[%s0 + $0x4] sm:$0xf]
  %v28 = vld [vmem:[%s0 + $0x8] sm:$0xf]
  %v29 = vld [vmem:[%s0 + $0xc] sm:$0xf]
  %v30 = vunpack.c.l.bf16 %v26
  %v31 = vunpack.c.l.bf16 %v27
  %v32 = vunpack.c.l.bf16 %v28
  %v33 = vunpack.c.l.bf16 %v29
  %v34 = vld [vmem:[%s1] sm:$0x1]
  %v36 = vlaneseq
  %v37 = vshrl.u32 %v36, 7
  %v38 = vsub.s32 0, %v37
  %v39 = vrot.slane %v34, %v38
  %v41 = vmul.f32 %v30, %v39
  %v42 = vmul.f32 %v31, %v39
  %v43 = vmul.f32 %v32, %v39
  %v44 = vmul.f32 %v33, %v39
  %v45 = vld [vmem:[%s2] sm:$0x1]
  %v47 = vlaneseq
  %v48 = vshrl.u32 %v47, 7
  %v49 = vsub.s32 0, %v48
  %v50 = vrot.slane %v45, %v49
  %v52 = vadd.f32 %v41, %v50
  %v53 = vadd.f32 %v42, %v50
  %v54 = vadd.f32 %v43, %v50
  %v55 = vadd.f32 %v44, %v50
  %v56 = vmax.f32 %v52, 0.0
  %v57 = vmax.f32 %v53, 0.0
  %v58 = vmax.f32 %v54, 0.0
  %v59 = vmax.f32 %v55, 0.0
  %v60 = vpack.c.bf16 %v57, %v56
  %v61 = vpack.c.bf16 %v59, %v58
  %v62 = vld [vmem:[#allocation2] sm:$0xff]
  %v63 = vld [vmem:[#allocation2 + $0x8] sm:$0xff]
  %v64 = vld [vmem:[#allocation2 + $0x10] sm:$0xff]
  %v65 = vld [vmem:[#allocation2 + $0x18] sm:$0xff]
  %v66 = vld [vmem:[%s3] sm:$0xf]
  %v67 = vld [vmem:[%s3 + $0x4] sm:$0xf]
  %v68 = vld [vmem:[%s3 + $0x8] sm:$0xf]
  %v69 = vld [vmem:[%s3 + $0xc] sm:$0xf]
  %v70 = vld [vmem:[%s3 + $0x10] sm:$0xf]
  %v71 = vld [vmem:[%s3 + $0x14] sm:$0xf]
  %v72 = vld [vmem:[%s3 + $0x18] sm:$0xf]
  %v73 = vld [vmem:[%s3 + $0x1c] sm:$0xf]
  %v74 = vld [vmem:[%s3 + $0x20] sm:$0xf]
  %v75 = vld [vmem:[%s3 + $0x24] sm:$0xf]
  %v76 = vld [vmem:[%s3 + $0x28] sm:$0xf]
  %v77 = vld [vmem:[%s3 + $0x2c] sm:$0xf]
  %v78 = vld [vmem:[%s3 + $0x30] sm:$0xf]
  %v79 = vld [vmem:[%s3 + $0x34] sm:$0xf]
  %v80 = vld [vmem:[%s3 + $0x38] sm:$0xf]
  %v81 = vld [vmem:[%s3 + $0x3c] sm:$0xf]
  %v98 = vunpack.c.l.b16 %v66
  %v99 = vunpack.c.l.b16 %v67
  %v100 = vunpack.c.l.b16 %v68
  %v101 = vunpack.c.l.b16 %v69
  %v102 = vunpack.c.l.b16 %v70
  %v103 = vunpack.c.l.b16 %v71
  %v104 = vunpack.c.l.b16 %v72
  %v105 = vunpack.c.l.b16 %v73
  %v106 = vunpack.c.l.b16 %v74
  %v107 = vunpack.c.l.b16 %v75
  %v108 = vunpack.c.l.b16 %v76
  %v109 = vunpack.c.l.b16 %v77
  %v110 = vunpack.c.l.b16 %v78
  %v111 = vunpack.c.l.b16 %v79
  %v112 = vunpack.c.l.b16 %v80
  %v113 = vunpack.c.l.b16 %v81
  %v114 = vpack.c.b16 %v99, %v98
  %v115 = vpack.c.b16 %v101, %v100
  %v116 = vpack.c.b16 %v103, %v102
  %v117 = vpack.c.b16 %v105, %v104
  %v118 = vpack.c.b16 %v107, %v106
  %v119 = vpack.c.b16 %v109, %v108
  %v120 = vpack.c.b16 %v111, %v110
  %v121 = vpack.c.b16 %v113, %v112
  %130 = vmatprep.subr.bf16.mxu0 0
  %131 = vmatpush1.bf16.msra.mxu0 %v121
  %132 = vmatprep.subr.bf16.mxu0 0
  %133 = vmatpush1.bf16.msra.mxu0 %v120
  %134 = vmatprep.subr.bf16.mxu0 0
  %135 = vmatpush1.bf16.msra.mxu0 %v119
  %136 = vmatprep.subr.bf16.mxu0 0
  %137 = vmatpush1.bf16.msra.mxu0 %v118
  %138 = vmatprep.subr.bf16.mxu0 0
  %139 = vmatpush1.bf16.msra.mxu0 %v117
  %140 = vmatprep.subr.bf16.mxu0 0
  %141 = vmatpush1.bf16.msra.mxu0 %v116
  %142 = vmatprep.subr.bf16.mxu0 0
  %143 = vmatpush1.bf16.msra.mxu0 %v115
  %144 = vmatprep.subr.bf16.mxu0 0
  %145 = vmatpush1.bf16.msra.mxu0 %v114
  %146 = vmatprep.subr.bf16.mxu0 0
  %147 = vmatpush2.bf16.msra.mxu0 0
  %148 = vmatprep.subr.bf16.mxu0 0
  %149 = vmatpush2.bf16.msra.mxu0 0
  %150 = vmatprep.subr.bf16.mxu0 0
  %151 = vmatpush2.bf16.msra.mxu0 0
  %152 = vmatprep.subr.bf16.mxu0 0
  %153 = vmatpush2.bf16.msra.mxu0 0
  %154 = vmatprep.subr.bf16.mxu0 0
  %155 = vmatpush2.bf16.msra.mxu0 0
  %156 = vmatprep.subr.bf16.mxu0 0
  %157 = vmatpush2.bf16.msra.mxu0 0
  %158 = vmatprep.subr.bf16.mxu0 0
  %159 = vmatpush2.bf16.msra.mxu0 0
  %160 = vmatprep.subr.bf16.mxu0 0
  %161 = vmatpush2.bf16.msra.mxu0 0
  %162 = vmatprep.mubr.bf16.mxu0 0
  %163 = vmatmul.mubr.bf16.gmra.mxu0 %v60
  %v164 = vpop.f32.mrf.mxu0
  %v165 = vadd.f32 0.0, %v164
  %v166 = vpop.f32.mrf.mxu0
  %v167 = vpop.f32.mrf.mxu0
  %v168 = vadd.f32 0.0, %v167
  %v169 = vpop.f32.mrf.mxu0
  %170 = vmatprep.mubr.bf16.mxu0 0
  %171 = vmatmul.mubr.bf16.gmra.mxu0 %v61
  %v172 = vpop.f32.mrf.mxu0
  %v173 = vadd.f32 0.0, %v172
  %v174 = vpop.f32.mrf.mxu0
  %v175 = vpop.f32.mrf.mxu0
  %v176 = vadd.f32 0.0, %v175
  %v177 = vpop.f32.mrf.mxu0
  %178 = vdwg.mxu0
  %v179 = vadd.f32 %v62, %v165
  %v180 = vadd.f32 %v63, %v168
  %v181 = vadd.f32 %v64, %v173
  %v182 = vadd.f32 %v65, %v176
  %183 = vst [vmem:[#allocation2] sm:$0xff] %v179
  %184 = vst [vmem:[#allocation2 + $0x8] sm:$0xff] %v180
  %185 = vst [vmem:[#allocation2 + $0x10] sm:$0xff] %v181
  %186 = vst [vmem:[#allocation2 + $0x18] sm:$0xff] %v182
  // Predicated region
  $region22: #{bottle_stack_forward.23} parent=0 // pred_check
    %p187 = pneg %p18
  $region23: #{bottle_stack_forward.23} parent=0 // pred_check_branch
    %189 = sbr.rel (%p187) target = $region25
  $region24: #{bottle_stack_forward.23} parent=0 // pred_region
    %v190 = vld [vmem:[#allocation2] sm:$0xff]
    %v191 = vld [vmem:[#allocation2 + $0x8] sm:$0xff]
    %v192 = vld [vmem:[#allocation2 + $0x10] sm:$0xff]
    %v193 = vld [vmem:[#allocation2 + $0x18] sm:$0xff]
    %v194 = vpack.c.bf16 %v191, %v190
    %v195 = vpack.c.bf16 %v193, %v192
    %v198 = vunpack.c.l.b16 %v194
    %v199 = vunpack.c.h.b16 %v194
    %v200 = vunpack.c.l.b16 %v195
    %v201 = vunpack.c.h.b16 %v195
    %v202 = vpack.c.b16 %v198, %v198
    %v203 = vpack.c.b16 %v199, %v199
    %v204 = vpack.c.b16 %v200, %v200
    %v205 = vpack.c.b16 %v201, %v201
    %210 = vst [vmem:[%s4] sm:$0xf] %v202
    %211 = vst [vmem:[%s4 + $0x4] sm:$0xf] %v203
    %212 = vst [vmem:[%s4 + $0x8] sm:$0xf] %v204
    %213 = vst [vmem:[%s4 + $0xc] sm:$0xf] %v205
  $region25: #{bottle_stack_forward.23} parent=0 // pred_fallthru
    _
  // Predicated region
  $region26: #{bottle_stack_forward.23} parent=0 // pred_check
    _
  $region27: #{bottle_stack_forward.23} parent=0 // pred_check_branch
    %215 = sbr.rel (0) target = $region29
  $region28: #{bottle_stack_forward.23} parent=0 // pred_region
    _
  $region29: #{bottle_stack_forward.23} parent=0 // pred_fallthru
    _
  // Predicated region
  $region30: #{bottle_stack_forward.23} parent=0 // pred_check
    _
  $region31: #{bottle_stack_forward.23} parent=0 // pred_check_branch
    %217 = sbr.rel (0) target = $region33
  $region32: #{bottle_stack_forward.23} parent=0 // pred_region
    _
  $region33: #{bottle_stack_forward.23} parent=0 // pred_fallthru
    _

// kernel: bottle_stack_forward.27
$region0: #{bottle_stack_forward.27}
  #allocation0 [shape = 'u32[]', space=smem, size = 0x4, offset = 0x4, fixed_abs, tag = 'smem constant byte address 0x4 - core index']
  #allocation1 [shape = 'u32[144,128]{1,0:T(1,128)}', space=vmem, size = 0x12000, scoped, tag = 'internal scratch']
  %s0 = inlined_call_operand.vmem [shape: bf16[32,16], index: 0, kind: input, shape index: {}]
  %s1 = inlined_call_operand.vmem [shape: f32[1,16], index: 1, kind: input, shape index: {}]
  %s2 = inlined_call_operand.vmem [shape: f32[1,16], index: 2, kind: input, shape index: {}]
  %s3 = inlined_call_operand.vmem [shape: bf16[32,16], index: 3, kind: input, shape index: {}]
  %s4 = inlined_call_operand.vmem [shape: bf16[32,16], index: 4, kind: output, shape index: {}]
  %s5 = sld [smem:[#allocation0]]
  $region26: #{bottle_stack_forward.27} parent=0
    _
  %s7 = ssub.s32 1, %s5
  %s8 = scalar_select 0, %s7, %s5
  // Predicated region
  $region2: #{bottle_stack_forward.27} parent=0 // pred_check
    _
  $region3: #{bottle_stack_forward.27} parent=0 // pred_check_branch
    %10 = sbr.rel (0) target = $region5
  $region4: #{bottle_stack_forward.27} parent=0 // pred_region
    _
  $region5: #{bottle_stack_forward.27} parent=0 // pred_fallthru
    _
  // Predicated region
  $region6: #{bottle_stack_forward.27} parent=0 // pred_check
    _
  $region7: #{bottle_stack_forward.27} parent=0 // pred_check_branch
    %12 = sbr.rel (0) target = $region9
  $region8: #{bottle_stack_forward.27} parent=0 // pred_region
    _
  $region9: #{bottle_stack_forward.27} parent=0 // pred_fallthru
    _
  // Predicated region
  $region10: #{bottle_stack_forward.27} parent=0 // pred_check
    _
  $region11: #{bottle_stack_forward.27} parent=0 // pred_check_branch
    %14 = sbr.rel (0) target = $region13
  $region12: #{bottle_stack_forward.27} parent=0 // pred_region
    _
  $region13: #{bottle_stack_forward.27} parent=0 // pred_fallthru
    _
  // Predicated region
  $region14: #{bottle_stack_forward.27} parent=0 // pred_check
    _
  $region15: #{bottle_stack_forward.27} parent=0 // pred_check_branch
    %16 = sbr.rel (0) target = $region17
  $region16: #{bottle_stack_forward.27} parent=0 // pred_region
    _
  $region17: #{bottle_stack_forward.27} parent=0 // pred_fallthru
    _
  %v17 = vld [vmem:[%s0] sm:$0xf]
  %v18 = vld [vmem:[%s0 + $0x4] sm:$0xf]
  %v19 = vld [vmem:[%s0 + $0x8] sm:$0xf]
  %v20 = vld [vmem:[%s0 + $0xc] sm:$0xf]
  %v21 = vunpack.c.l.bf16 %v17
  %v22 = vunpack.c.l.bf16 %v18
  %v23 = vunpack.c.l.bf16 %v19
  %v24 = vunpack.c.l.bf16 %v20
  %v25 = vld [vmem:[%s1] sm:$0x1]
  %v27 = vlaneseq
  %v28 = vshrl.u32 %v27, 7
  %v29 = vsub.s32 0, %v28
  %v30 = vrot.slane %v25, %v29
  %v32 = vmul.f32 %v21, %v30
  %v33 = vmul.f32 %v22, %v30
  %v34 = vmul.f32 %v23, %v30
  %v35 = vmul.f32 %v24, %v30
  %v36 = vld [vmem:[%s2] sm:$0x1]
  %v38 = vlaneseq
  %v39 = vshrl.u32 %v38, 7
  %v40 = vsub.s32 0, %v39
  %v41 = vrot.slane %v36, %v40
  %v43 = vadd.f32 %v32, %v41
  %v44 = vadd.f32 %v33, %v41
  %v45 = vadd.f32 %v34, %v41
  %v46 = vadd.f32 %v35, %v41
  %v47 = vld [vmem:[%s3] sm:$0xf]
  %v48 = vld [vmem:[%s3 + $0x4] sm:$0xf]
  %v49 = vld [vmem:[%s3 + $0x8] sm:$0xf]
  %v50 = vld [vmem:[%s3 + $0xc] sm:$0xf]
  %v51 = vunpack.c.l.bf16 %v47
  %v52 = vunpack.c.l.bf16 %v48
  %v53 = vunpack.c.l.bf16 %v49
  %v54 = vunpack.c.l.bf16 %v50
  %v55 = vadd.f32 %v43, %v51
  %v56 = vadd.f32 %v44, %v52
  %v57 = vadd.f32 %v45, %v53
  %v58 = vadd.f32 %v46, %v54
  %v59 = vmax.f32 %v55, 0.0
  %v60 = vmax.f32 %v56, 0.0
  %v61 = vmax.f32 %v57, 0.0
  %v62 = vmax.f32 %v58, 0.0
  %v63 = vpack.c.bf16 %v60, %v59
  %v64 = vpack.c.bf16 %v62, %v61
  %v67 = vunpack.c.l.b16 %v63
  %v68 = vunpack.c.h.b16 %v63
  %v69 = vunpack.c.l.b16 %v64
  %v70 = vunpack.c.h.b16 %v64
  %v71 = vpack.c.b16 %v67, %v67
  %v72 = vpack.c.b16 %v68, %v68
  %v73 = vpack.c.b16 %v69, %v69
  %v74 = vpack.c.b16 %v70, %v70
  %vm79 = vcmask 125952
  %80 = vst.msk [vmem:[%s4] sm:$0xf] %vm79, %v71
  %81 = vst.msk [vmem:[%s4 + $0x4] sm:$0xf] %vm79, %v72
  %82 = vst.msk [vmem:[%s4 + $0x8] sm:$0xf] %vm79, %v73
  %83 = vst.msk [vmem:[%s4 + $0xc] sm:$0xf] %vm79, %v74
  // Predicated region
  $region18: #{bottle_stack_forward.27} parent=0 // pred_check
    _
  $region19: #{bottle_stack_forward.27} parent=0 // pred_check_branch
    %85 = sbr.rel (0) target = $region21
  $region20: #{bottle_stack_forward.27} parent=0 // pred_region
    _
  $region21: #{bottle_stack_forward.27} parent=0 // pred_fallthru
    _
  // Predicated region
  $region22: #{bottle_stack_forward.27} parent=0 // pred_check
    _
  $region23: #{bottle_stack_forward.27} parent=0 // pred_check_branch
    %87 = sbr.rel (0) target = $region25
  $region24: #{bottle_stack_forward.27} parent=0 // pred_region
    _
  $region25: #{bottle_stack_forward.27} parent=0 // pred_fallthru
    _

// kernel: bottle_stack_forward.24
$region0: #{bottle_stack_forward.24}
  #allocation0 [shape = 'u32[]', space=smem, size = 0x4, offset = 0x4, fixed_abs, tag = 'smem constant byte address 0x4 - core index']
  #allocation1 [shape = 'u32[144,128]{1,0:T(1,128)}', space=vmem, size = 0x12000, scoped, tag = 'internal scratch']
  %s0 = inlined_call_operand.vmem [shape: bf16[4,16,8], index: 0, kind: input, shape index: {}]
  %s1 = inlined_call_operand.vmem [shape: bf16[4,16,8], index: 1, kind: input, shape index: {}]
  %s2 = inlined_call_operand.vmem [shape: bf16[4,16,8], index: 2, kind: input, shape index: {}]
  %s3 = inlined_call_operand.vmem [shape: bf16[4,16,16], index: 3, kind: input, shape index: {}]
  %s4 = inlined_call_operand.vmem [shape: bf16[4,16,8], index: 4, kind: output, shape index: {}]
  %s5 = sld [smem:[#allocation0]]
  $region26: #{bottle_stack_forward.24} parent=0
    _
  %s7 = ssub.s32 1, %s5
  %s8 = scalar_select 0, %s7, %s5
  // Predicated region
  $region2: #{bottle_stack_forward.24} parent=0 // pred_check
    _
  $region3: #{bottle_stack_forward.24} parent=0 // pred_check_branch
    %10 = sbr.rel (0) target = $region5
  $region4: #{bottle_stack_forward.24} parent=0 // pred_region
    _
  $region5: #{bottle_stack_forward.24} parent=0 // pred_fallthru
    _
  // Predicated region
  $region6: #{bottle_stack_forward.24} parent=0 // pred_check
    _
  $region7: #{bottle_stack_forward.24} parent=0 // pred_check_branch
    %12 = sbr.rel (0) target = $region9
  $region8: #{bottle_stack_forward.24} parent=0 // pred_region
    _
  $region9: #{bottle_stack_forward.24} parent=0 // pred_fallthru
    _
  // Predicated region
  $region10: #{bottle_stack_forward.24} parent=0 // pred_check
    _
  $region11: #{bottle_stack_forward.24} parent=0 // pred_check_branch
    %14 = sbr.rel (0) target = $region13
  $region12: #{bottle_stack_forward.24} parent=0 // pred_region
    _
  $region13: #{bottle_stack_forward.24} parent=0 // pred_fallthru
    _
  // Predicated region
  $region14: #{bottle_stack_forward.24} parent=0 // pred_check
    _
  $region15: #{bottle_stack_forward.24} parent=0 // pred_check_branch
    %16 = sbr.rel (0) target = $region17
  $region16: #{bottle_stack_forward.24} parent=0 // pred_region
    _
  $region17: #{bottle_stack_forward.24} parent=0 // pred_fallthru
    _
  %v18 = vld [vmem:[%s0] sm:$0xf]
  %v19 = vld [vmem:[%s0 + $0x4] sm:$0xf]
  %v20 = vld [vmem:[%s0 + $0x8] sm:$0xf]
  %v21 = vld [vmem:[%s0 + $0xc] sm:$0xf]
  %v22 = vld [vmem:[%s0 + $0x10] sm:$0xf]
  %v23 = vld [vmem:[%s0 + $0x14] sm:$0xf]
  %v24 = vld [vmem:[%s0 + $0x18] sm:$0xf]
  %v25 = vld [vmem:[%s0 + $0x1c] sm:$0xf]
  %v26 = vld [vmem:[%s1] sm:$0xf]
  %v27 = vld [vmem:[%s1 + $0x4] sm:$0xf]
  %v28 = vld [vmem:[%s1 + $0x8] sm:$0xf]
  %v29 = vld [vmem:[%s1 + $0xc] sm:$0xf]
  %v30 = vld [vmem:[%s1 + $0x10] sm:$0xf]
  %v31 = vld [vmem:[%s1 + $0x14] sm:$0xf]
  %v32 = vld [vmem:[%s1 + $0x18] sm:$0xf]
  %v33 = vld [vmem:[%s1 + $0x1c] sm:$0xf]
  %v34 = vld [vmem:[%s2] sm:$0xf]
  %v35 = vld [vmem:[%s2 + $0x4] sm:$0xf]
  %v36 = vld [vmem:[%s2 + $0x8] sm:$0xf]
  %v37 = vld [vmem:[%s2 + $0xc] sm:$0xf]
  %v38 = vld [vmem:[%s2 + $0x10] sm:$0xf]
  %v39 = vld [vmem:[%s2 + $0x14] sm:$0xf]
  %v40 = vld [vmem:[%s2 + $0x18] sm:$0xf]
  %v41 = vld [vmem:[%s2 + $0x1c] sm:$0xf]
  %v42 = vld [vmem:[%s3] sm:$0xf]
  %v43 = vld [vmem:[%s3 + $0x4] sm:$0xf]
  %v44 = vld [vmem:[%s3 + $0x8] sm:$0xf]
  %v45 = vld [vmem:[%s3 + $0xc] sm:$0xf]
  %v46 = vld [vmem:[%s3 + $0x10] sm:$0xf]
  %v47 = vld [vmem:[%s3 + $0x14] sm:$0xf]
  %v48 = vld [vmem:[%s3 + $0x18] sm:$0xf]
  %v49 = vld [vmem:[%s3 + $0x1c] sm:$0xf]
  %v50 = vunpack.c.l.bf16 %v42
  %v51 = vunpack.c.l.bf16 %v43
  %v52 = vunpack.c.l.bf16 %v44
  %v53 = vunpack.c.l.bf16 %v45
  %v54 = vunpack.c.l.bf16 %v46
  %v55 = vunpack.c.l.bf16 %v47
  %v56 = vunpack.c.l.bf16 %v48
  %v57 = vunpack.c.l.bf16 %v49
  %v60 = vunpack.c.l.b16 %v18
  %v61 = vunpack.c.l.b16 %v19
  %v62 = vpack.c.b16 %v61, %v60
  %v65 = vunpack.c.l.b16 %v26
  %v66 = vunpack.c.l.b16 %v27
  %v67 = vpack.c.b16 %v66, %v65
  %vm68 = vcmask 64512
  %v70 = vsel %vm68, %v62, 0
  %v73 = vsel %vm68, %v67, 0
  %75 = vmatprep.subr.bf16.mxu0 0
  %76 = vmatpush1.bf16.xpose.msra.mxu0 0
  %77 = vmatprep.subr.bf16.mxu0 0
  %78 = vmatpush1.bf16.xpose.msra.mxu0 0
  %79 = vmatprep.subr.bf16.mxu0 0
  %80 = vmatpush1.bf16.xpose.msra.mxu0 0
  %81 = vmatprep.subr.bf16.mxu0 0
  %82 = vmatpush1.bf16.xpose.msra.mxu0 0
  %83 = vmatprep.subr.bf16.mxu0 0
  %84 = vmatpush1.bf16.xpose.msra.mxu0 0
  %85 = vmatprep.subr.bf16.mxu0 0
  %86 = vmatpush1.bf16.xpose.msra.mxu0 0
  %87 = vmatprep.subr.bf16.mxu0 0
  %88 = vmatpush1.bf16.xpose.msra.mxu0 0
  %89 = vmatprep.subr.bf16.mxu0 0
  %90 = vmatpush1.bf16.xpose.msra.mxu0 %v73
  %91 = vmatprep.subr.bf16.mxu0 0
  %92 = vmatpush2.bf16.xpose.msra.mxu0 0
  %93 = vmatprep.subr.bf16.mxu0 0
  %94 = vmatpush2.bf16.xpose.msra.mxu0 0
  %95 = vmatprep.subr.bf16.mxu0 0
  %96 = vmatpush2.bf16.xpose.msra.mxu0 0
  %97 = vmatprep.subr.bf16.mxu0 0
  %98 = vmatpush2.bf16.xpose.msra.mxu0 0
  %99 = vmatprep.subr.bf16.mxu0 0
  %100 = vmatpush2.bf16.xpose.msra.mxu0 0
  %101 = vmatprep.subr.bf16.mxu0 0
  %102 = vmatpush2.bf16.xpose.msra.mxu0 0
  %103 = vmatprep.subr.bf16.mxu0 0
  %104 = vmatpush2.bf16.xpose.msra.mxu0 0
  %105 = vmatprep.subr.bf16.mxu0 0
  %106 = vmatpush2.bf16.xpose.msra.mxu0 0
  %107 = vmatprep.mubr.bf16.mxu0 0
  %108 = vmatmul.mubr.bf16.gmra.mxu0 %v70
  %v109 = vpop.f32.mrf.mxu0
  %v110 = vadd.f32 %v50, %v109
  %v111 = vpop.f32.mrf.mxu0
  %v112 = vpop.f32.mrf.mxu0
  %v113 = vadd.f32 %v51, %v112
  %v114 = vpop.f32.mrf.mxu0
  %115 = vdwg.mxu0
  %v118 = vunpack.c.l.b16 %v20
  %v119 = vunpack.c.l.b16 %v21
  %v120 = vpack.c.b16 %v119, %v118
  %v123 = vunpack.c.l.b16 %v28
  %v124 = vunpack.c.l.b16 %v29
  %v125 = vpack.c.b16 %v124, %v123
  %v127 = vsel %vm68, %v120, 0
  %v130 = vsel %vm68, %v125, 0
  %132 = vmatprep.subr.bf16.mxu0 0
  %133 = vmatpush1.bf16.xpose.msra.mxu0 0
  %134 = vmatprep.subr.bf16.mxu0 0
  %135 = vmatpush1.bf16.xpose.msra.mxu0 0
  %136 = vmatprep.subr.bf16.mxu0 0
  %137 = vmatpush1.bf16.xpose.msra.mxu0 0
  %138 = vmatprep.subr.bf16.mxu0 0
  %139 = vmatpush1.bf16.xpose.msra.mxu0 0
  %140 = vmatprep.subr.bf16.mxu0 0
  %141 = vmatpush1.bf16.xpose.msra.mxu0 0
  %142 = vmatprep.subr.bf16.mxu0 0
  %143 = vmatpush1.bf16.xpose.msra.mxu0 0
  %144 = vmatprep.subr.bf16.mxu0 0
  %145 = vmatpush1.bf16.xpose.msra.mxu0 0
  %146 = vmatprep.subr.bf16.mxu0 0
  %147 = vmatpush1.bf16.xpose.msra.mxu0 %v130
  %148 = vmatprep.subr.bf16.mxu0 0
  %149 = vmatpush2.bf16.xpose.msra.mxu0 0
  %150 = vmatprep.subr.bf16.mxu0 0
  %151 = vmatpush2.bf16.xpose.msra.mxu0 0
  %152 = vmatprep.subr.bf16.mxu0 0
  %153 = vmatpush2.bf16.xpose.msra.mxu0 0
  %154 = vmatprep.subr.bf16.mxu0 0
  %155 = vmatpush2.bf16.xpose.msra.mxu0 0
  %156 = vmatprep.subr.bf16.mxu0 0
  %157 = vmatpush2.bf16.xpose.msra.mxu0 0
  %158 = vmatprep.subr.bf16.mxu0 0
  %159 = vmatpush2.bf16.xpose.msra.mxu0 0
  %160 = vmatprep.subr.bf16.mxu0 0
  %161 = vmatpush2.bf16.xpose.msra.mxu0 0
  %162 = vmatprep.subr.bf16.mxu0 0
  %163 = vmatpush2.bf16.xpose.msra.mxu0 0
  %164 = vmatprep.mubr.bf16.mxu0 0
  %165 = vmatmul.mubr.bf16.gmra.mxu0 %v127
  %v166 = vpop.f32.mrf.mxu0
  %v167 = vadd.f32 %v52, %v166
  %v168 = vpop.f32.mrf.mxu0
  %v169 = vpop.f32.mrf.mxu0
  %v170 = vadd.f32 %v53, %v169
  %v171 = vpop.f32.mrf.mxu0
  %172 = vdwg.mxu0
  %v175 = vunpack.c.l.b16 %v22
  %v176 = vunpack.c.l.b16 %v23
  %v177 = vpack.c.b16 %v176, %v175
  %v180 = vunpack.c.l.b16 %v30
  %v181 = vunpack.c.l.b16 %v31
  %v182 = vpack.c.b16 %v181, %v180
  %v184 = vsel %vm68, %v177, 0
  %v187 = vsel %vm68, %v182, 0
  %189 = vmatprep.subr.bf16.mxu0 0
  %190 = vmatpush1.bf16.xpose.msra.mxu0 0
  %191 = vmatprep.subr.bf16.mxu0 0
  %192 = vmatpush1.bf16.xpose.msra.mxu0 0
  %193 = vmatprep.subr.bf16.mxu0 0
  %194 = vmatpush1.bf16.xpose.msra.mxu0 0
  %195 = vmatprep.subr.bf16.mxu0 0
  %196 = vmatpush1.bf16.xpose.msra.mxu0 0
  %197 = vmatprep.subr.bf16.mxu0 0
  %198 = vmatpush1.bf16.xpose.msra.mxu0 0
  %199 = vmatprep.subr.bf16.mxu0 0
  %200 = vmatpush1.bf16.xpose.msra.mxu0 0
  %201 = vmatprep.subr.bf16.mxu0 0
  %202 = vmatpush1.bf16.xpose.msra.mxu0 0
  %203 = vmatprep.subr.bf16.mxu0 0
  %204 = vmatpush1.bf16.xpose.msra.mxu0 %v187
  %205 = vmatprep.subr.bf16.mxu0 0
  %206 = vmatpush2.bf16.xpose.msra.mxu0 0
  %207 = vmatprep.subr.bf16.mxu0 0
  %208 = vmatpush2.bf16.xpose.msra.mxu0 0
  %209 = vmatprep.subr.bf16.mxu0 0
  %210 = vmatpush2.bf16.xpose.msra.mxu0 0
  %211 = vmatprep.subr.bf16.mxu0 0
  %212 = vmatpush2.bf16.xpose.msra.mxu0 0
  %213 = vmatprep.subr.bf16.mxu0 0
  %214 = vmatpush2.bf16.xpose.msra.mxu0 0
  %215 = vmatprep.subr.bf16.mxu0 0
  %216 = vmatpush2.bf16.xpose.msra.mxu0 0
  %217 = vmatprep.subr.bf16.mxu0 0
  %218 = vmatpush2.bf16.xpose.msra.mxu0 0
  %219 = vmatprep.subr.bf16.mxu0 0
  %220 = vmatpush2.bf16.xpose.msra.mxu0 0
  %221 = vmatprep.mubr.bf16.mxu0 0
  %222 = vmatmul.mubr.bf16.gmra.mxu0 %v184
  %v223 = vpop.f32.mrf.mxu0
  %v224 = vadd.f32 %v54, %v223
  %v225 = vpop.f32.mrf.mxu0
  %v226 = vpop.f32.mrf.mxu0
  %v227 = vadd.f32 %v55, %v226
  %v228 = vpop.f32.mrf.mxu0
  %229 = vdwg.mxu0
  %v232 = vunpack.c.l.b16 %v24
  %v233 = vunpack.c.l.b16 %v25
  %v234 = vpack.c.b16 %v233, %v232
  %v237 = vunpack.c.l.b16 %v32
  %v238 = vunpack.c.l.b16 %v33
  %v239 = vpack.c.b16 %v238, %v237
  %v241 = vsel %vm68, %v234, 0
  %v244 = vsel %vm68, %v239, 0
  %246 = vmatprep.subr.bf16.mxu0 0
  %247 = vmatpush1.bf16.xpose.msra.mxu0 0
  %248 = vmatprep.subr.bf16.mxu0 0
  %249 = vmatpush1.bf16.xpose.msra.mxu0 0
  %250 = vmatprep.subr.bf16.mxu0 0
  %251 = vmatpush1.bf16.xpose.msra.mxu0 0
  %252 = vmatprep.subr.bf16.mxu0 0
  %253 = vmatpush1.bf16.xpose.msra.mxu0 0
  %254 = vmatprep.subr.bf16.mxu0 0
  %255 = vmatpush1.bf16.xpose.msra.mxu0 0
  %256 = vmatprep.subr.bf16.mxu0 0
  %257 = vmatpush1.bf16.xpose.msra.mxu0 0
  %258 = vmatprep.subr.bf16.mxu0 0
  %259 = vmatpush1.bf16.xpose.msra.mxu0 0
  %260 = vmatprep.subr.bf16.mxu0 0
  %261 = vmatpush1.bf16.xpose.msra.mxu0 %v244
  %262 = vmatprep.subr.bf16.mxu0 0
  %263 = vmatpush2.bf16.xpose.msra.mxu0 0
  %264 = vmatprep.subr.bf16.mxu0 0
  %265 = vmatpush2.bf16.xpose.msra.mxu0 0
  %266 = vmatprep.subr.bf16.mxu0 0
  %267 = vmatpush2.bf16.xpose.msra.mxu0 0
  %268 = vmatprep.subr.bf16.mxu0 0
  %269 = vmatpush2.bf16.xpose.msra.mxu0 0
  %270 = vmatprep.subr.bf16.mxu0 0
  %271 = vmatpush2.bf16.xpose.msra.mxu0 0
  %272 = vmatprep.subr.bf16.mxu0 0
  %273 = vmatpush2.bf16.xpose.msra.mxu0 0
  %274 = vmatprep.subr.bf16.mxu0 0
  %275 = vmatpush2.bf16.xpose.msra.mxu0 0
  %276 = vmatprep.subr.bf16.mxu0 0
  %277 = vmatpush2.bf16.xpose.msra.mxu0 0
  %278 = vmatprep.mubr.bf16.mxu0 0
  %279 = vmatmul.mubr.bf16.gmra.mxu0 %v241
  %v280 = vpop.f32.mrf.mxu0
  %v281 = vadd.f32 %v56, %v280
  %v282 = vpop.f32.mrf.mxu0
  %v283 = vpop.f32.mrf.mxu0
  %v284 = vadd.f32 %v57, %v283
  %v285 = vpop.f32.mrf.mxu0
  %286 = vdwg.mxu0
  %vm287 = vcmask 130048
  %v288 = vsel %vm287, %v110, -inf
  %289 = vmax.xlane.f32.xlu0 %v288
  %v290 = vpop.xlane.xlu0 %289
  %v291 = vsel %vm287, %v113, -inf
  %292 = vmax.xlane.f32.xlu0 %v291
  %v293 = vpop.xlane.xlu0 %292
  %v294 = vsel %vm287, %v167, -inf
  %295 = vmax.xlane.f32.xlu0 %v294
  %v296 = vpop.xlane.xlu0 %295
  %v297 = vsel %vm287, %v170, -inf
  %298 = vmax.xlane.f32.xlu0 %v297
  %v299 = vpop.xlane.xlu0 %298
  %v300 = vsel %vm287, %v224, -inf
  %301 = vmax.xlane.f32.xlu0 %v300
  %v302 = vpop.xlane.xlu0 %301
  %v303 = vsel %vm287, %v227, -inf
  %304 = vmax.xlane.f32.xlu0 %v303
  %v305 = vpop.xlane.xlu0 %304
  %v306 = vsel %vm287, %v281, -inf
  %307 = vmax.xlane.f32.xlu0 %v306
  %v308 = vpop.xlane.xlu0 %307
  %v309 = vsel %vm287, %v284, -inf
  %310 = vmax.xlane.f32.xlu0 %v309
  %v311 = vpop.xlane.xlu0 %310
  %v312 = vsub.f32 %v110, %v290
  %v313 = vsub.f32 %v113, %v293
  %v314 = vsub.f32 %v167, %v296
  %v315 = vsub.f32 %v170, %v299
  %v316 = vsub.f32 %v224, %v302
  %v317 = vsub.f32 %v227, %v305
  %v318 = vsub.f32 %v281, %v308
  %v319 = vsub.f32 %v284, %v311
  %v320 = vmul.f32 %v312, 1.442695
  %v321 = vpow.pop %v320
  %v322 = vmul.f32 %v313, 1.442695
  %v323 = vpow.pop %v322
  %v324 = vmul.f32 %v314, 1.442695
  %v325 = vpow.pop %v324
  %v326 = vmul.f32 %v315, 1.442695
  %v327 = vpow.pop %v326
  %v328 = vmul.f32 %v316, 1.442695
  %v329 = vpow.pop %v328
  %v330 = vmul.f32 %v317, 1.442695
  %v331 = vpow.pop %v330
  %v332 = vmul.f32 %v318, 1.442695
  %v333 = vpow.pop %v332
  %v334 = vmul.f32 %v319, 1.442695
  %v335 = vpow.pop %v334
  %v336 = vsel %vm287, %v321, 0.0
  %337 = vadd.xlane.f32.xlu0 %v336
  %v338 = vpop.xlane.xlu0 %337
  %v339 = vsel %vm287, %v323, 0.0
  %340 = vadd.xlane.f32.xlu0 %v339
  %v341 = vpop.xlane.xlu0 %340
  %v342 = vsel %vm287, %v325, 0.0
  %343 = vadd.xlane.f32.xlu0 %v342
  %v344 = vpop.xlane.xlu0 %343
  %v345 = vsel %vm287, %v327, 0.0
  %346 = vadd.xlane.f32.xlu0 %v345
  %v347 = vpop.xlane.xlu0 %346
  %v348 = vsel %vm287, %v329, 0.0
  %349 = vadd.xlane.f32.xlu0 %v348
  %v350 = vpop.xlane.xlu0 %349
  %v351 = vsel %vm287, %v331, 0.0
  %352 = vadd.xlane.f32.xlu0 %v351
  %v353 = vpop.xlane.xlu0 %352
  %v354 = vsel %vm287, %v333, 0.0
  %355 = vadd.xlane.f32.xlu0 %v354
  %v356 = vpop.xlane.xlu0 %355
  %v357 = vsel %vm287, %v335, 0.0
  %358 = vadd.xlane.f32.xlu0 %v357
  %v359 = vpop.xlane.xlu0 %358
  %v360 = vrcp.pop %v338
  %v361 = vrcp.pop %v341
  %v362 = vrcp.pop %v344
  %v363 = vrcp.pop %v347
  %v364 = vrcp.pop %v350
  %v365 = vrcp.pop %v353
  %v366 = vrcp.pop %v356
  %v367 = vrcp.pop %v359
  %v368 = vmul.f32 %v321, %v360
  %v369 = vmul.f32 %v323, %v361
  %v370 = vmul.f32 %v325, %v362
  %v371 = vmul.f32 %v327, %v363
  %v372 = vmul.f32 %v329, %v364
  %v373 = vmul.f32 %v331, %v365
  %v374 = vmul.f32 %v333, %v366
  %v375 = vmul.f32 %v335, %v367
  %v376 = vpack.c.bf16 %v369, %v368
  %v377 = vpack.c.bf16 %v371, %v370
  %v378 = vpack.c.bf16 %v373, %v372
  %v379 = vpack.c.bf16 %v375, %v374
  %v382 = vunpack.c.l.b16 %v34
  %v383 = vunpack.c.l.b16 %v35
  %v384 = vpack.c.b16 %v383, %v382
  %v387 = vsel %vm287, %v376, 0
  %389 = vmatprep.subr.bf16.mxu0 0
  %390 = vmatpush1.bf16.msra.mxu0 0
  %391 = vmatprep.subr.bf16.mxu0 0
  %392 = vmatpush1.bf16.msra.mxu0 0
  %393 = vmatprep.subr.bf16.mxu0 0
  %394 = vmatpush1.bf16.msra.mxu0 0
  %395 = vmatprep.subr.bf16.mxu0 0
  %396 = vmatpush1.bf16.msra.mxu0 0
  %397 = vmatprep.subr.bf16.mxu0 0
  %398 = vmatpush1.bf16.msra.mxu0 0
  %399 = vmatprep.subr.bf16.mxu0 0
  %400 = vmatpush1.bf16.msra.mxu0 0
  %401 = vmatprep.subr.bf16.mxu0 0
  %402 = vmatpush1.bf16.msra.mxu0 0
  %403 = vmatprep.subr.bf16.mxu0 0
  %404 = vmatpush1.bf16.msra.mxu0 %v384
  %405 = vmatprep.subr.bf16.mxu0 0
  %406 = vmatpush2.bf16.msra.mxu0 0
  %407 = vmatprep.subr.bf16.mxu0 0
  %408 = vmatpush2.bf16.msra.mxu0 0
  %409 = vmatprep.subr.bf16.mxu0 0
  %410 = vmatpush2.bf16.msra.mxu0 0
  %411 = vmatprep.subr.bf16.mxu0 0
  %412 = vmatpush2.bf16.msra.mxu0 0
  %413 = vmatprep.subr.bf16.mxu0 0
  %414 = vmatpush2.bf16.msra.mxu0 0
  %415 = vmatprep.subr.bf16.mxu0 0
  %416 = vmatpush2.bf16.msra.mxu0 0
  %417 = vmatprep.subr.bf16.mxu0 0
  %418 = vmatpush2.bf16.msra.mxu0 0
  %419 = vmatprep.subr.bf16.mxu0 0
  %420 = vmatpush2.bf16.msra.mxu0 0
  %421 = vmatprep.mubr.bf16.mxu0 0
  %422 = vmatmul.mubr.bf16.gmra.mxu0 %v387
  %v423 = vpop.f32.mrf.mxu0
  %v424 = vadd.f32 0.0, %v423
  %v425 = vpop.f32.mrf.mxu0
  %v426 = vpop.f32.mrf.mxu0
  %v427 = vadd.f32 0.0, %v426
  %v428 = vpop.f32.mrf.mxu0
  %429 = vdwg.mxu0
  %v432 = vunpack.c.l.b16 %v36
  %v433 = vunpack.c.l.b16 %v37
  %v434 = vpack.c.b16 %v433, %v432
  %v437 = vsel %vm287, %v377, 0
  %439 = vmatprep.subr.bf16.mxu0 0
  %440 = vmatpush1.bf16.msra.mxu0 0
  %441 = vmatprep.subr.bf16.mxu0 0
  %442 = vmatpush1.bf16.msra.mxu0 0
  %443 = vmatprep.subr.bf16.mxu0 0
  %444 = vmatpush1.bf16.msra.mxu0 0
  %445 = vmatprep.subr.bf16.mxu0 0
  %446 = vmatpush1.bf16.msra.mxu0 0
  %447 = vmatprep.subr.bf16.mxu0 0
  %448 = vmatpush1.bf16.msra.mxu0 0
  %449 = vmatprep.subr.bf16.mxu0 0
  %450 = vmatpush1.bf16.msra.mxu0 0
  %451 = vmatprep.subr.bf16.mxu0 0
  %452 = vmatpush1.bf16.msra.mxu0 0
  %453 = vmatprep.subr.bf16.mxu0 0
  %454 = vmatpush1.bf16.msra.mxu0 %v434
  %455 = vmatprep.subr.bf16.mxu0 0
  %456 = vmatpush2.bf16.msra.mxu0 0
  %457 = vmatprep.subr.bf16.mxu0 0
  %458 = vmatpush2.bf16.msra.mxu0 0
  %459 = vmatprep.subr.bf16.mxu0 0
  %460 = vmatpush2.bf16.msra.mxu0 0
  %461 = vmatprep.subr.bf16.mxu0 0
  %462 = vmatpush2.bf16.msra.mxu0 0
  %463 = vmatprep.subr.bf16.mxu0 0
  %464 = vmatpush2.bf16.msra.mxu0 0
  %465 = vmatprep.subr.bf16.mxu0 0
  %466 = vmatpush2.bf16.msra.mxu0 0
  %467 = vmatprep.subr.bf16.mxu0 0
  %468 = vmatpush2.bf16.msra.mxu0 0
  %469 = vmatprep.subr.bf16.mxu0 0
  %470 = vmatpush2.bf16.msra.mxu0 0
  %471 = vmatprep.mubr.bf16.mxu0 0
  %472 = vmatmul.mubr.bf16.gmra.mxu0 %v437
  %v473 = vpop.f32.mrf.mxu0
  %v474 = vadd.f32 0.0, %v473
  %v475 = vpop.f32.mrf.mxu0
  %v476 = vpop.f32.mrf.mxu0
  %v477 = vadd.f32 0.0, %v476
  %v478 = vpop.f32.mrf.mxu0
  %479 = vdwg.mxu0
  %v482 = vunpack.c.l.b16 %v38
  %v483 = vunpack.c.l.b16 %v39
  %v484 = vpack.c.b16 %v483, %v482
  %v487 = vsel %vm287, %v378, 0
  %489 = vmatprep.subr.bf16.mxu0 0
  %490 = vmatpush1.bf16.msra.mxu0 0
  %491 = vmatprep.subr.bf16.mxu0 0
  %492 = vmatpush1.bf16.msra.mxu0 0
  %493 = vmatprep.subr.bf16.mxu0 0
  %494 = vmatpush1.bf16.msra.mxu0 0
  %495 = vmatprep.subr.bf16.mxu0 0
  %496 = vmatpush1.bf16.msra.mxu0 0
  %497 = vmatprep.subr.bf16.mxu0 0
  %498 = vmatpush1.bf16.msra.mxu0 0
  %499 = vmatprep.subr.bf16.mxu0 0
  %500 = vmatpush1.bf16.msra.mxu0 0
  %501 = vmatprep.subr.bf16.mxu0 0
  %502 = vmatpush1.bf16.msra.mxu0 0
  %503 = vmatprep.subr.bf16.mxu0 0
  %504 = vmatpush1.bf16.msra.mxu0 %v484
  %505 = vmatprep.subr.bf16.mxu0 0
  %506 = vmatpush2.bf16.msra.mxu0 0
  %507 = vmatprep.subr.bf16.mxu0 0
  %508 = vmatpush2.bf16.msra.mxu0 0
  %509 = vmatprep.subr.bf16.mxu0 0
  %510 = vmatpush2.bf16.msra.mxu0 0
  %511 = vmatprep.subr.bf16.mxu0 0
  %512 = vmatpush2.bf16.msra.mxu0 0
  %513 = vmatprep.subr.bf16.mxu0 0
  %514 = vmatpush2.bf16.msra.mxu0 0
  %515 = vmatprep.subr.bf16.mxu0 0
  %516 = vmatpush2.bf16.msra.mxu0 0
  %517 = vmatprep.subr.bf16.mxu0 0
  %518 = vmatpush2.bf16.msra.mxu0 0
  %519 = vmatprep.subr.bf16.mxu0 0
  %520 = vmatpush2.bf16.msra.mxu0 0
  %521 = vmatprep.mubr.bf16.mxu0 0
  %522 = vmatmul.mubr.bf16.gmra.mxu0 %v487
  %v523 = vpop.f32.mrf.mxu0
  %v524 = vadd.f32 0.0, %v523
  %v525 = vpop.f32.mrf.mxu0
  %v526 = vpop.f32.mrf.mxu0
  %v527 = vadd.f32 0.0, %v526
  %v528 = vpop.f32.mrf.mxu0
  %529 = vdwg.mxu0
  %v532 = vunpack.c.l.b16 %v40
  %v533 = vunpack.c.l.b16 %v41
  %v534 = vpack.c.b16 %v533, %v532
  %v537 = vsel %vm287, %v379, 0
  %539 = vmatprep.subr.bf16.mxu0 0
  %540 = vmatpush1.bf16.msra.mxu0 0
  %541 = vmatprep.subr.bf16.mxu0 0
  %542 = vmatpush1.bf16.msra.mxu0 0
  %543 = vmatprep.subr.bf16.mxu0 0
  %544 = vmatpush1.bf16.msra.mxu0 0
  %545 = vmatprep.subr.bf16.mxu0 0
  %546 = vmatpush1.bf16.msra.mxu0 0
  %547 = vmatprep.subr.bf16.mxu0 0
  %548 = vmatpush1.bf16.msra.mxu0 0
  %549 = vmatprep.subr.bf16.mxu0 0
  %550 = vmatpush1.bf16.msra.mxu0 0
  %551 = vmatprep.subr.bf16.mxu0 0
  %552 = vmatpush1.bf16.msra.mxu0 0
  %553 = vmatprep.subr.bf16.mxu0 0
  %554 = vmatpush1.bf16.msra.mxu0 %v534
  %555 = vmatprep.subr.bf16.mxu0 0
  %556 = vmatpush2.bf16.msra.mxu0 0
  %557 = vmatprep.subr.bf16.mxu0 0
  %558 = vmatpush2.bf16.msra.mxu0 0
  %559 = vmatprep.subr.bf16.mxu0 0
  %560 = vmatpush2.bf16.msra.mxu0 0
  %561 = vmatprep.subr.bf16.mxu0 0
  %562 = vmatpush2.bf16.msra.mxu0 0
  %563 = vmatprep.subr.bf16.mxu0 0
  %564 = vmatpush2.bf16.msra.mxu0 0
  %565 = vmatprep.subr.bf16.mxu0 0
  %566 = vmatpush2.bf16.msra.mxu0 0
  %567 = vmatprep.subr.bf16.mxu0 0
  %568 = vmatpush2.bf16.msra.mxu0 0
  %569 = vmatprep.subr.bf16.mxu0 0
  %570 = vmatpush2.bf16.msra.mxu0 0
  %571 = vmatprep.mubr.bf16.mxu0 0
  %572 = vmatmul.mubr.bf16.gmra.mxu0 %v537
  %v573 = vpop.f32.mrf.mxu0
  %v574 = vadd.f32 0.0, %v573
  %v575 = vpop.f32.mrf.mxu0
  %v576 = vpop.f32.mrf.mxu0
  %v577 = vadd.f32 0.0, %v576
  %v578 = vpop.f32.mrf.mxu0
  %579 = vdwg.mxu0
  %v580 = vpack.c.bf16 %v427, %v424
  %v581 = vpack.c.bf16 %v477, %v474
  %v582 = vpack.c.bf16 %v527, %v524
  %v583 = vpack.c.bf16 %v577, %v574
  %v588 = vunpack.c.l.b16 %v580
  %v589 = vunpack.c.h.b16 %v580
  %v590 = vunpack.c.l.b16 %v581
  %v591 = vunpack.c.h.b16 %v581
  %v592 = vunpack.c.l.b16 %v582
  %v593 = vunpack.c.h.b16 %v582
  %v594 = vunpack.c.l.b16 %v583
  %v595 = vunpack.c.h.b16 %v583
  %v596 = vpack.c.b16 %v588, %v588
  %v597 = vpack.c.b16 %v589, %v589
  %v598 = vpack.c.b16 %v590, %v590
  %v599 = vpack.c.b16 %v591, %v591
  %v600 = vpack.c.b16 %v592, %v592
  %v601 = vpack.c.b16 %v593, %v593
  %v602 = vpack.c.b16 %v594, %v594
  %v603 = vpack.c.b16 %v595, %v595
  %vm612 = vcmask 60416
  %613 = vst.msk [vmem:[%s4] sm:$0xf] %vm612, %v596
  %614 = vst.msk [vmem:[%s4 + $0x4] sm:$0xf] %vm612, %v597
  %615 = vst.msk [vmem:[%s4 + $0x8] sm:$0xf] %vm612, %v598
  %616 = vst.msk [vmem:[%s4 + $0xc] sm:$0xf] %vm612, %v599
  %617 = vst.msk [vmem:[%s4 + $0x10] sm:$0xf] %vm612, %v600
  %618 = vst.msk [vmem:[%s4 + $0x14] sm:$0xf] %vm612, %v601
  %619 = vst.msk [vmem:[%s4 + $0x18] sm:$0xf] %vm612, %v602
  %620 = vst.msk [vmem:[%s4 + $0x1c] sm:$0xf] %vm612, %v603
  // Predicated region
  $region18: #{bottle_stack_forward.24} parent=0 // pred_check
    _
  $region19: #{bottle_stack_forward.24} parent=0 // pred_check_branch
    %622 = sbr.rel (0) target = $region21
  $region20: #{bottle_stack_forward.24} parent=0 // pred_region
    _
  $region21: #{bottle_stack_forward.24} parent=0 // pred_fallthru
    _
  // Predicated region
  $region22: #{bottle_stack_forward.24} parent=0 // pred_check
    _
  $region23: #{bottle_stack_forward.24} parent=0 // pred_check_branch
    %624 = sbr.rel (0) target = $region25
  $region24: #{bottle_stack_forward.24} parent=0 // pred_region
    _
  $region25: #{bottle_stack_forward.24} parent=0 // pred_fallthru
    _

</llo_original>
